<compile_context>
chip_gen: v5e
topology: v5e:2x2
jax: 0.10.0
libtpu: 0.0.40
codegen_flags: <defaults>
</compile_context>

<pallas_src>
import jax
import jax.numpy as jnp
from jax.experimental import pallas as pl
from jax.experimental.pallas import tpu as pltpu

IN_DIM = 1 * 28 * 28          # 784
IN_PAD = 896                  # next multiple of 128
H1, H2, H3, OUT = 512, 256, 128, 1
NEG_SLOPE = 0.2


def _leaky_relu(x):
    return jnp.where(x > 0, x, NEG_SLOPE * x)


def discriminator_kernel(x_ref,
                         w1_ref, b1_ref,
                         w2_ref, b2_ref,
                         w3_ref, b3_ref,
                         w4_ref, b4_ref,
                         o_ref):
    # x_ref: (block_b, IN_PAD) bf16; w1/w2/w3: bf16; biases + w4: f32.
    x = x_ref[...]

    h = jnp.dot(x, w1_ref[...], preferred_element_type=jnp.float32) + b1_ref[...]
    h = _leaky_relu(h)

    h = jnp.dot(h.astype(jnp.bfloat16), w2_ref[...],
                preferred_element_type=jnp.float32) + b2_ref[...]
    h = _leaky_relu(h)

    h = jnp.dot(h.astype(jnp.bfloat16), w3_ref[...],
                preferred_element_type=jnp.float32) + b3_ref[...]
    h = _leaky_relu(h)                                   # (block_b, 128) f32

    # Final 128 -> 1 layer, computed directly as a lane-dense (1, block_b) row:
    # contract feature axis of h with the (1, 128) weight row (A @ B^T on the MXU).
    logit = jax.lax.dot_general(
        w4_ref[...], h, (((1,), (1,)), ((), ())),
        preferred_element_type=jnp.float32)              # (1, block_b)
    logit = logit + b4_ref[...]                          # b4 is (1, 1), broadcasts
    o_ref[...] = jax.nn.sigmoid(logit)                   # lane-dense store


def discriminator_forward(x, params, *, block_b=256):
    """x: (B, 784) float32. params: weights stored as (in, out). Returns (B, 1) f32."""
    B, D = x.shape
    assert D == IN_DIM

    n_tiles = pl.cdiv(B, block_b)
    b_pad = n_tiles * block_b

    # Pad batch to a tile multiple and features to a lane multiple; zero pad is exact
    # (padded x columns hit zero-padded w1 rows; padded batch rows are sliced off).
    x_p = jnp.pad(x, ((0, b_pad - B), (0, IN_PAD - IN_DIM))).astype(jnp.bfloat16)

    w1 = jnp.pad(params["w1"], ((0, IN_PAD - IN_DIM), (0, 0))).astype(jnp.bfloat16)
    w2 = params["w2"].astype(jnp.bfloat16)
    w3 = params["w3"].astype(jnp.bfloat16)
    w4 = params["w4"].reshape(1, H3).astype(jnp.float32)     # (1, 128) row
    b1 = params["b1"].astype(jnp.float32)
    b2 = params["b2"].astype(jnp.float32)
    b3 = params["b3"].astype(jnp.float32)
    b4 = params["b4"].reshape(1, 1).astype(jnp.float32)

    full = lambda a: pl.BlockSpec(a.shape, lambda i: (0, 0))  # weights resident in VMEM

    out_row = pl.pallas_call(
        discriminator_kernel,
        out_shape=jax.ShapeDtypeStruct((1, b_pad), jnp.float32),
        grid_spec=pltpu.PrefetchScalarGridSpec(
            num_scalar_prefetch=0,
            grid=(n_tiles,),
            in_specs=[
                pl.BlockSpec((block_b, IN_PAD), lambda i: (i, 0)),   # x tile
                full(w1), full(b1),
                full(w2), full(b2),
                full(w3), full(b3),
                full(w4), full(b4),
            ],
            out_specs=pl.BlockSpec((1, block_b), lambda i: (0, i)),  # lane-dense row
        ),
        compiler_params=pltpu.CompilerParams(
            dimension_semantics=("parallel",)),                      # v7x: 2 TCs
    )(x_p, w1, b1, w2, b2, w3, b3, w4, b4)

    return out_row[0, :B].reshape(B, 1)


def init_params(key):
    """PyTorch-Linear-style init: uniform(-1/sqrt(fan_in), +1/sqrt(fan_in)).
    Weights stored transposed vs. PyTorch, i.e. (in_features, out_features)."""
    def linear(k, fan_in, fan_out):
        kw, kb = jax.random.split(k)
        bound = 1.0 / jnp.sqrt(fan_in)
        w = jax.random.uniform(kw, (fan_in, fan_out), jnp.float32, -bound, bound)
        b = jax.random.uniform(kb, (1, fan_out), jnp.float32, -bound, bound)
        return w, b

    k1, k2, k3, k4 = jax.random.split(key, 4)
    w1, b1 = linear(k1, IN_DIM, H1)
    w2, b2 = linear(k2, H1, H2)
    w3, b3 = linear(k3, H2, H3)
    w4, b4 = linear(k4, H3, OUT)
    return {"w1": w1, "b1": b1, "w2": w2, "b2": b2,
            "w3": w3, "b3": b3, "w4": w4, "b4": b4}


def reference_forward(x, p):
    h = _leaky_relu(x @ p["w1"] + p["b1"])
    h = _leaky_relu(h @ p["w2"] + p["b2"])
    h = _leaky_relu(h @ p["w3"] + p["b3"])
    return jax.nn.sigmoid(h @ p["w4"] + p["b4"])


if __name__ == "__main__":
    key = jax.random.PRNGKey(0)
    kp, kx = jax.random.split(key)

    params = init_params(kp)
    B = 200  # not a multiple of the tile -> exercises cdiv padding and 2 grid steps
    x = jax.random.normal(kx, (B, IN_DIM), jnp.float32)

    out = jax.block_until_ready(discriminator_forward(x, params, block_b=128))
    ref = reference_forward(x, params)

    assert out.shape == (B, 1)
    # bf16 matmuls with f32 accumulation vs. an all-f32 reference -> relaxed tolerance.
    err = float(jnp.max(jnp.abs(out - ref)))
    assert jnp.allclose(out, ref, atol=2.5e-2, rtol=2.5e-2), f"mismatch, max abs err {err}"

    print("KERNEL_OK")
</pallas_src>

<mosaic_0001>
module attributes {stable_mosaic.version = 11 : i64} {
  func.func @discriminator_kernel(%arg0: i32, %arg1: memref<128x896xbf16, #tpu.memory_space<vmem>>, %arg2: memref<896x512xbf16, #tpu.memory_space<vmem>>, %arg3: memref<1x512xf32, #tpu.memory_space<vmem>>, %arg4: memref<512x256xbf16, #tpu.memory_space<vmem>>, %arg5: memref<1x256xf32, #tpu.memory_space<vmem>>, %arg6: memref<256x128xbf16, #tpu.memory_space<vmem>>, %arg7: memref<1x128xf32, #tpu.memory_space<vmem>>, %arg8: memref<1x128xf32, #tpu.memory_space<vmem>>, %arg9: memref<1x1xf32, #tpu.memory_space<vmem>>, %arg10: memref<1x128xf32, #tpu.memory_space<vmem>>) attributes {dimension_semantics = [#tpu.dimension_semantics<parallel>], iteration_bounds = array<i64: 2>, scalar_prefetch = 0 : i64, scratch_operands = 0 : i64, tpu.core_type = #tpu.core_type<tc>, window_params = [{transform_indices = @transform_0, window_bounds = array<i64: 128, 896>}, {pipeline_mode = #tpu.pipeline_mode<synchronous>, transform_indices = @transform_1, window_bounds = array<i64: 896, 512>}, {pipeline_mode = #tpu.pipeline_mode<synchronous>, transform_indices = @transform_2, window_bounds = array<i64: 1, 512>}, {pipeline_mode = #tpu.pipeline_mode<synchronous>, transform_indices = @transform_3, window_bounds = array<i64: 512, 256>}, {pipeline_mode = #tpu.pipeline_mode<synchronous>, transform_indices = @transform_4, window_bounds = array<i64: 1, 256>}, {pipeline_mode = #tpu.pipeline_mode<synchronous>, transform_indices = @transform_5, window_bounds = array<i64: 256, 128>}, {pipeline_mode = #tpu.pipeline_mode<synchronous>, transform_indices = @transform_6, window_bounds = array<i64: 1, 128>}, {pipeline_mode = #tpu.pipeline_mode<synchronous>, transform_indices = @transform_7, window_bounds = array<i64: 1, 128>}, {pipeline_mode = #tpu.pipeline_mode<synchronous>, transform_indices = @transform_8, window_bounds = array<i64: 1, 1>}, {transform_indices = @transform_9, window_bounds = array<i64: 1, 128>}]} {
    %c0 = arith.constant 0 : index
    %c0_0 = arith.constant 0 : index
    %0 = vector.load %arg1[%c0, %c0_0] : memref<128x896xbf16, #tpu.memory_space<vmem>>, vector<128x896xbf16>
    %c0_1 = arith.constant 0 : index
    %c0_2 = arith.constant 0 : index
    %1 = vector.load %arg2[%c0_1, %c0_2] : memref<896x512xbf16, #tpu.memory_space<vmem>>, vector<896x512xbf16>
    %cst = arith.constant dense<0.000000e+00> : vector<128x512xf32>
    %2 = tpu.matmul %0, %1, %cst {dimension_numbers = #tpu.dot_dimension_numbers<[1], [0], [0], [1], [0, 0, 1, 1], [], []>} : vector<128x896xbf16>, vector<896x512xbf16>, vector<128x512xf32> -> vector<128x512xf32>
    %c0_3 = arith.constant 0 : index
    %c0_4 = arith.constant 0 : index
    %3 = vector.load %arg3[%c0_3, %c0_4] : memref<1x512xf32, #tpu.memory_space<vmem>>, vector<1x512xf32>
    %4 = vector.broadcast %3 : vector<1x512xf32> to vector<128x512xf32>
    %5 = arith.addf %2, %4 : vector<128x512xf32>
    %cst_5 = arith.constant 0.000000e+00 : f32
    %6 = vector.broadcast %cst_5 : f32 to vector<128x512xf32>
    %7 = arith.cmpf ogt, %5, %6 : vector<128x512xf32>
    %cst_6 = arith.constant 2.000000e-01 : f32
    %8 = vector.broadcast %cst_6 : f32 to vector<128x512xf32>
    %9 = arith.mulf %8, %5 : vector<128x512xf32>
    %10 = arith.select %7, %5, %9 : vector<128x512xi1>, vector<128x512xf32>
    %11 = arith.truncf %10 : vector<128x512xf32> to vector<128x512xbf16>
    %c0_7 = arith.constant 0 : index
    %c0_8 = arith.constant 0 : index
    %12 = vector.load %arg4[%c0_7, %c0_8] : memref<512x256xbf16, #tpu.memory_space<vmem>>, vector<512x256xbf16>
    %cst_9 = arith.constant dense<0.000000e+00> : vector<128x256xf32>
    %13 = tpu.matmul %11, %12, %cst_9 {dimension_numbers = #tpu.dot_dimension_numbers<[1], [0], [0], [1], [0, 0, 1, 1], [], []>} : vector<128x512xbf16>, vector<512x256xbf16>, vector<128x256xf32> -> vector<128x256xf32>
    %c0_10 = arith.constant 0 : index
    %c0_11 = arith.constant 0 : index
    %14 = vector.load %arg5[%c0_10, %c0_11] : memref<1x256xf32, #tpu.memory_space<vmem>>, vector<1x256xf32>
    %15 = vector.broadcast %14 : vector<1x256xf32> to vector<128x256xf32>
    %16 = arith.addf %13, %15 : vector<128x256xf32>
    %cst_12 = arith.constant 0.000000e+00 : f32
    %17 = vector.broadcast %cst_12 : f32 to vector<128x256xf32>
    %18 = arith.cmpf ogt, %16, %17 : vector<128x256xf32>
    %cst_13 = arith.constant 2.000000e-01 : f32
    %19 = vector.broadcast %cst_13 : f32 to vector<128x256xf32>
    %20 = arith.mulf %19, %16 : vector<128x256xf32>
    %21 = arith.select %18, %16, %20 : vector<128x256xi1>, vector<128x256xf32>
    %22 = arith.truncf %21 : vector<128x256xf32> to vector<128x256xbf16>
    %c0_14 = arith.constant 0 : index
    %c0_15 = arith.constant 0 : index
    %23 = vector.load %arg6[%c0_14, %c0_15] : memref<256x128xbf16, #tpu.memory_space<vmem>>, vector<256x128xbf16>
    %cst_16 = arith.constant dense<0.000000e+00> : vector<128x128xf32>
    %24 = tpu.matmul %22, %23, %cst_16 {dimension_numbers = #tpu.dot_dimension_numbers<[1], [0], [0], [1], [0, 0, 1, 1], [], []>} : vector<128x256xbf16>, vector<256x128xbf16>, vector<128x128xf32> -> vector<128x128xf32>
    %c0_17 = arith.constant 0 : index
    %c0_18 = arith.constant 0 : index
    %25 = vector.load %arg7[%c0_17, %c0_18] : memref<1x128xf32, #tpu.memory_space<vmem>>, vector<1x128xf32>
    %26 = vector.broadcast %25 : vector<1x128xf32> to vector<128x128xf32>
    %27 = arith.addf %24, %26 : vector<128x128xf32>
    %cst_19 = arith.constant 0.000000e+00 : f32
    %28 = vector.broadcast %cst_19 : f32 to vector<128x128xf32>
    %29 = arith.cmpf ogt, %27, %28 : vector<128x128xf32>
    %cst_20 = arith.constant 2.000000e-01 : f32
    %30 = vector.broadcast %cst_20 : f32 to vector<128x128xf32>
    %31 = arith.mulf %30, %27 : vector<128x128xf32>
    %32 = arith.select %29, %27, %31 : vector<128x128xi1>, vector<128x128xf32>
    %c0_21 = arith.constant 0 : index
    %c0_22 = arith.constant 0 : index
    %33 = vector.load %arg8[%c0_21, %c0_22] : memref<1x128xf32, #tpu.memory_space<vmem>>, vector<1x128xf32>
    %cst_23 = arith.constant dense<0.000000e+00> : vector<1x128xf32>
    %34 = tpu.matmul %33, %32, %cst_23 {dimension_numbers = #tpu.dot_dimension_numbers<[1], [1], [0], [0], [0, 0, 1, 0], [], []>} : vector<1x128xf32>, vector<128x128xf32>, vector<1x128xf32> -> vector<1x128xf32>
    %c0_24 = arith.constant 0 : index
    %c0_25 = arith.constant 0 : index
    %35 = vector.load %arg9[%c0_24, %c0_25] : memref<1x1xf32, #tpu.memory_space<vmem>>, vector<1x1xf32>
    %36 = vector.broadcast %35 : vector<1x1xf32> to vector<1x128xf32>
    %37 = arith.addf %34, %36 : vector<1x128xf32>
    %38 = arith.negf %37 : vector<1x128xf32>
    %39 = math.exp %38 : vector<1x128xf32>
    %cst_26 = arith.constant 1.000000e+00 : f32
    %40 = vector.broadcast %cst_26 : f32 to vector<1x128xf32>
    %41 = arith.addf %40, %39 : vector<1x128xf32>
    %42 = arith.divf %40, %41 : vector<1x128xf32>
    %c0_27 = arith.constant 0 : index
    %c0_28 = arith.constant 0 : index
    %43 = vector.load %arg10[%c0_27, %c0_28] : memref<1x128xf32, #tpu.memory_space<vmem>>, vector<1x128xf32>
    tpu.vector_store %arg10[%c0_27, %c0_28], %42 {strides = array<i32>} : memref<1x128xf32, #tpu.memory_space<vmem>>, vector<1x128xf32>,
    return
  }
  func.func @transform_0(%arg0: i32) -> (i32, i32) {
    %c0_i32 = arith.constant 0 : i32
    %c0_i32_0 = arith.constant 0 : i32
    return %arg0, %c0_i32 : i32, i32
  }
  func.func @transform_1(%arg0: i32) -> (i32, i32) {
    %c0_i32 = arith.constant 0 : i32
    %c0_i32_0 = arith.constant 0 : i32
    %c0_i32_1 = arith.constant 0 : i32
    return %c0_i32, %c0_i32_0 : i32, i32
  }
  func.func @transform_2(%arg0: i32) -> (i32, i32) {
    %c0_i32 = arith.constant 0 : i32
    %c0_i32_0 = arith.constant 0 : i32
    %c0_i32_1 = arith.constant 0 : i32
    return %c0_i32, %c0_i32_0 : i32, i32
  }
  func.func @transform_3(%arg0: i32) -> (i32, i32) {
    %c0_i32 = arith.constant 0 : i32
    %c0_i32_0 = arith.constant 0 : i32
    %c0_i32_1 = arith.constant 0 : i32
    return %c0_i32, %c0_i32_0 : i32, i32
  }
  func.func @transform_4(%arg0: i32) -> (i32, i32) {
    %c0_i32 = arith.constant 0 : i32
    %c0_i32_0 = arith.constant 0 : i32
    %c0_i32_1 = arith.constant 0 : i32
    return %c0_i32, %c0_i32_0 : i32, i32
  }
  func.func @transform_5(%arg0: i32) -> (i32, i32) {
    %c0_i32 = arith.constant 0 : i32
    %c0_i32_0 = arith.constant 0 : i32
    %c0_i32_1 = arith.constant 0 : i32
    return %c0_i32, %c0_i32_0 : i32, i32
  }
  func.func @transform_6(%arg0: i32) -> (i32, i32) {
    %c0_i32 = arith.constant 0 : i32
    %c0_i32_0 = arith.constant 0 : i32
    %c0_i32_1 = arith.constant 0 : i32
    return %c0_i32, %c0_i32_0 : i32, i32
  }
  func.func @transform_7(%arg0: i32) -> (i32, i32) {
    %c0_i32 = arith.constant 0 : i32
    %c0_i32_0 = arith.constant 0 : i32
    %c0_i32_1 = arith.constant 0 : i32
    return %c0_i32, %c0_i32_0 : i32, i32
  }
  func.func @transform_8(%arg0: i32) -> (i32, i32) {
    %c0_i32 = arith.constant 0 : i32
    %c0_i32_0 = arith.constant 0 : i32
    %c0_i32_1 = arith.constant 0 : i32
    return %c0_i32, %c0_i32_0 : i32, i32
  }
  func.func @transform_9(%arg0: i32) -> (i32, i32) {
    %c0_i32 = arith.constant 0 : i32
    %c0_i32_0 = arith.constant 0 : i32
    return %c0_i32, %arg0 : i32, i32
  }
}

</mosaic_0001>

<llo_original>
// kernel: tpu_custom_call.1
$region0: #{tpu_custom_call.1}
  #allocation0 [shape = 'u32[]', space=smem, size = 0x4, offset = 0x4, fixed_abs, tag = 'smem constant byte address 0x4 - core index']
  #allocation1 [shape = 'u32[72,128]{1,0:T(1,128)}', space=vmem, size = 0x9000, scoped, tag = 'internal scratch']
  #allocation2 [shape = 'f32[1,1]{1,0:T(1,128)S(1)}', space=vmem, size = 0x200, scoped, tag = 'scoped memory for tpu_custom_call.1']
  %s0 = inlined_call_operand.hbm [shape: bf16[256,896], index: 0, kind: input, shape index: {}]
  %s1 = inlined_call_operand.hbm [shape: bf16[896,512], index: 1, kind: input, shape index: {}]
  %s2 = inlined_call_operand.hbm [shape: f32[1,512], index: 2, kind: input, shape index: {}]
  %s3 = inlined_call_operand.hbm [shape: bf16[512,256], index: 3, kind: input, shape index: {}]
  %s4 = inlined_call_operand.vmem [shape: f32[1,256], index: 4, kind: input, shape index: {}]
  %s5 = inlined_call_operand.hbm [shape: bf16[256,128], index: 5, kind: input, shape index: {}]
  %s6 = inlined_call_operand.vmem [shape: f32[1,128], index: 6, kind: input, shape index: {}]
  %s7 = inlined_call_operand.vmem [shape: f32[1,128], index: 7, kind: input, shape index: {}]
  %s8 = inlined_call_operand.<no memory space> [shape: f32[1,1], index: 8, kind: input, shape index: {}]
  %s9 = inlined_call_operand.hbm [shape: f32[1,256], index: 9, kind: output, shape index: {}]
  %s10 = sld [smem:[#allocation0]]
  $region89: #{tpu_custom_call.1} parent=0
    _
  %s12 = ssub.s32 1, %s10
  %s13 = scalar_select 0, %s12, %s10
  %v14 = vstv %s8
  %15 = vst [vmem:[#allocation2] sm:$0x1] %v14
  $region1: #{tpu_custom_call.1} parent=0
    #allocation3 [shape = 'u8[458752]{0}', space=vmem, size = 0x70000, scoped, tag = 'input window, operand 0']
    #allocation4 [shape = 's32[2]{0}', space=sflag, size = 0x8, scoped, tag = 'scoped memory for tpu_custom_call.1']
    #allocation5 [shape = 's32[2]{0}', space=sflag, size = 0x8, scoped, tag = 'scoped memory for tpu_custom_call.1']
    #allocation6 [shape = 'u8[917504]{0}', space=vmem, size = 0xe0000, scoped, tag = 'input window, operand 1, single buffered']
    #allocation7 [shape = 's32[1]{0}', space=sflag, size = 0x4, scoped, tag = 'scoped memory for tpu_custom_call.1']
    #allocation8 [shape = 'u8[2048]{0}', space=vmem, size = 0x800, scoped, tag = 'input window, operand 2, single buffered']
    #allocation9 [shape = 'u8[262144]{0}', space=vmem, size = 0x40000, scoped, tag = 'input window, operand 3, single buffered']
    #allocation10 [shape = 's32[1]{0}', space=sflag, size = 0x4, scoped, tag = 'scoped memory for tpu_custom_call.1']
    #allocation11 [shape = 'u8[65536]{0}', space=vmem, size = 0x10000, scoped, tag = 'input window, operand 5, single buffered']
    #allocation12 [shape = 'u8[1024]{0}', space=vmem, size = 0x400, scoped, tag = 'output window, operand 0']
    %16 = vsyncpa [#allocation4], 0
    %s17 = scalar_lea.sflag [#allocation4], 1
    %18 = vsyncpa %s17, 0
    %19 = vsyncpa [#allocation7], 0
    %20 = vsyncpa [#allocation10], 0
    %21 = vsyncpa [#allocation5], 0
    %s22 = scalar_lea.sflag [#allocation5], 1
    %23 = vsyncpa %s22, 0
    loop: start=0, step=1, limit=4
    $region2: #{tpu_custom_call.1} parent=1 // loop_pre_header
      _
    $region3: #{tpu_custom_call.1} parent=1 // loop_header
      %s25 = sphi 0, %s29
      %p26 = scmp.ge.s32.totalorder %s25, 4
      %s35 = sphi 0, %s37
      %s38 = sphi 0, %s35
      %s39 = sphi 0, %s38
      %s55 = sphi 0, %s39
      %s59 = sphi 0, %s59
      %s61 = sphi 0, %s59
      %s62 = sphi 0, %s61
      %s76 = sphi 0, %s62
      %s80 = sphi 0, %s80
      %s82 = sphi 0, %s80
      %s83 = sphi 0, %s82
      %s97 = sphi 0, %s83
      %s101 = sphi 0, %s101
      %s103 = sphi 0, %s101
      %s104 = sphi 0, %s103
      %s118 = sphi 0, %s104
      %s122 = sphi 0, %s122
      %s124 = sphi 0, %s122
      %s125 = sphi 0, %s124
      %s139 = sphi 0, %s125
      %s143 = sphi 0, %s143
      %s145 = sphi 0, %s143
      %s146 = sphi 0, %s145
      %s160 = sphi 0, %s146
      %s164 = sphi 0, %s164
      %s166 = sphi 0, %s164
      %s167 = sphi 0, %s166
      %s181 = sphi 0, %s167
      %s185 = sphi 0, %s185
      %s187 = sphi 0, %s185
      %s188 = sphi 0, %s187
      %s202 = sphi 0, %s188
      %s206 = sphi 0, %s206
      %s208 = sphi 0, %s206
      %s209 = sphi 0, %s208
      %s223 = sphi 0, %s209
      %s229 = sphi 0, %s231
      %s232 = sphi 0, %s229
      %s233 = sphi 0, %s232
      %s249 = sphi 0, %s233
    $region4: #{tpu_custom_call.1} parent=1 // loop_header_branch
      %28 = sbr.rel (%p26) target = $region8
    $region5: #{tpu_custom_call.1} parent=1 // loop_body
      %s30 = ssub.s32 %s25, 1
      %s31 = ssub.s32 %s25, 2
      %s32 = sadd.s32 %s25, 1
      %s33 = ssub.s32 %s25, %s32
      %p34 = scmp.eq.s32.totalorder %s33, 0
      %s36 = sadd.s32 %s35, 1
      %s37 = scalar_select %p34, %s35, %s36
      %p40 = pneg %p34
      %p41 = scmp.eq.s32.totalorder %s25, 1
      %p42 = por %p40, %p41
      %p43 = scmp.ne.s32.totalorder %s35, %s38
      %p44 = scmp.eq.s32.totalorder %s25, 0
      %p45 = por %p43, %p44
      %p46 = scmp.ne.s32.totalorder %s35, %s38
      %p47 = scmp.eq.s32.totalorder %s30, 1
      %p48 = por %p46, %p47
      %p49 = scmp.ne.s32.totalorder %s38, %s39
      %p50 = scmp.eq.s32.totalorder %s30, 0
      %p51 = por %p49, %p50
      %p52 = scmp.ne.s32.totalorder %s38, %s39
      %p53 = scmp.eq.s32.totalorder %s31, 1
      %p54 = por %p52, %p53
      %p56 = scmp.ne.s32.totalorder %s39, %s55
      %p57 = scmp.eq.s32.totalorder %s31, 0
      %p58 = por %p56, %p57
      %s60 = sadd.s32 %s59, 1
      %p63 = scmp.eq.s32.totalorder %s25, 1
      %p64 = scmp.ne.s32.totalorder %s59, %s61
      %p65 = scmp.eq.s32.totalorder %s25, 0
      %p66 = por %p64, %p65
      %p67 = scmp.ne.s32.totalorder %s59, %s61
      %p68 = scmp.eq.s32.totalorder %s30, 1
      %p69 = por %p67, %p68
      %p70 = scmp.ne.s32.totalorder %s61, %s62
      %p71 = scmp.eq.s32.totalorder %s30, 0
      %p72 = por %p70, %p71
      %p73 = scmp.ne.s32.totalorder %s61, %s62
      %p74 = scmp.eq.s32.totalorder %s31, 1
      %p75 = por %p73, %p74
      %p77 = scmp.ne.s32.totalorder %s62, %s76
      %p78 = scmp.eq.s32.totalorder %s31, 0
      %p79 = por %p77, %p78
      %s81 = sadd.s32 %s80, 1
      %p84 = scmp.eq.s32.totalorder %s25, 1
      %p85 = scmp.ne.s32.totalorder %s80, %s82
      %p86 = scmp.eq.s32.totalorder %s25, 0
      %p87 = por %p85, %p86
      %p88 = scmp.ne.s32.totalorder %s80, %s82
      %p89 = scmp.eq.s32.totalorder %s30, 1
      %p90 = por %p88, %p89
      %p91 = scmp.ne.s32.totalorder %s82, %s83
      %p92 = scmp.eq.s32.totalorder %s30, 0
      %p93 = por %p91, %p92
      %p94 = scmp.ne.s32.totalorder %s82, %s83
      %p95 = scmp.eq.s32.totalorder %s31, 1
      %p96 = por %p94, %p95
      %p98 = scmp.ne.s32.totalorder %s83, %s97
      %p99 = scmp.eq.s32.totalorder %s31, 0
      %p100 = por %p98, %p99
      %s102 = sadd.s32 %s101, 1
      %p105 = scmp.eq.s32.totalorder %s25, 1
      %p106 = scmp.ne.s32.totalorder %s101, %s103
      %p107 = scmp.eq.s32.totalorder %s25, 0
      %p108 = por %p106, %p107
      %p109 = scmp.ne.s32.totalorder %s101, %s103
      %p110 = scmp.eq.s32.totalorder %s30, 1
      %p111 = por %p109, %p110
      %p112 = scmp.ne.s32.totalorder %s103, %s104
      %p113 = scmp.eq.s32.totalorder %s30, 0
      %p114 = por %p112, %p113
      %p115 = scmp.ne.s32.totalorder %s103, %s104
      %p116 = scmp.eq.s32.totalorder %s31, 1
      %p117 = por %p115, %p116
      %p119 = scmp.ne.s32.totalorder %s104, %s118
      %p120 = scmp.eq.s32.totalorder %s31, 0
      %p121 = por %p119, %p120
      %s123 = sadd.s32 %s122, 1
      %p126 = scmp.eq.s32.totalorder %s25, 1
      %p127 = scmp.ne.s32.totalorder %s122, %s124
      %p128 = scmp.eq.s32.totalorder %s25, 0
      %p129 = por %p127, %p128
      %p130 = scmp.ne.s32.totalorder %s122, %s124
      %p131 = scmp.eq.s32.totalorder %s30, 1
      %p132 = por %p130, %p131
      %p133 = scmp.ne.s32.totalorder %s124, %s125
      %p134 = scmp.eq.s32.totalorder %s30, 0
      %p135 = por %p133, %p134
      %p136 = scmp.ne.s32.totalorder %s124, %s125
      %p137 = scmp.eq.s32.totalorder %s31, 1
      %p138 = por %p136, %p137
      %p140 = scmp.ne.s32.totalorder %s125, %s139
      %p141 = scmp.eq.s32.totalorder %s31, 0
      %p142 = por %p140, %p141
      %s144 = sadd.s32 %s143, 1
      %p147 = scmp.eq.s32.totalorder %s25, 1
      %p148 = scmp.ne.s32.totalorder %s143, %s145
      %p149 = scmp.eq.s32.totalorder %s25, 0
      %p150 = por %p148, %p149
      %p151 = scmp.ne.s32.totalorder %s143, %s145
      %p152 = scmp.eq.s32.totalorder %s30, 1
      %p153 = por %p151, %p152
      %p154 = scmp.ne.s32.totalorder %s145, %s146
      %p155 = scmp.eq.s32.totalorder %s30, 0
      %p156 = por %p154, %p155
      %p157 = scmp.ne.s32.totalorder %s145, %s146
      %p158 = scmp.eq.s32.totalorder %s31, 1
      %p159 = por %p157, %p158
      %p161 = scmp.ne.s32.totalorder %s146, %s160
      %p162 = scmp.eq.s32.totalorder %s31, 0
      %p163 = por %p161, %p162
      %s165 = sadd.s32 %s164, 1
      %p168 = scmp.eq.s32.totalorder %s25, 1
      %p169 = scmp.ne.s32.totalorder %s164, %s166
      %p170 = scmp.eq.s32.totalorder %s25, 0
      %p171 = por %p169, %p170
      %p172 = scmp.ne.s32.totalorder %s164, %s166
      %p173 = scmp.eq.s32.totalorder %s30, 1
      %p174 = por %p172, %p173
      %p175 = scmp.ne.s32.totalorder %s166, %s167
      %p176 = scmp.eq.s32.totalorder %s30, 0
      %p177 = por %p175, %p176
      %p178 = scmp.ne.s32.totalorder %s166, %s167
      %p179 = scmp.eq.s32.totalorder %s31, 1
      %p180 = por %p178, %p179
      %p182 = scmp.ne.s32.totalorder %s167, %s181
      %p183 = scmp.eq.s32.totalorder %s31, 0
      %p184 = por %p182, %p183
      %s186 = sadd.s32 %s185, 1
      %p189 = scmp.eq.s32.totalorder %s25, 1
      %p190 = scmp.ne.s32.totalorder %s185, %s187
      %p191 = scmp.eq.s32.totalorder %s25, 0
      %p192 = por %p190, %p191
      %p193 = scmp.ne.s32.totalorder %s185, %s187
      %p194 = scmp.eq.s32.totalorder %s30, 1
      %p195 = por %p193, %p194
      %p196 = scmp.ne.s32.totalorder %s187, %s188
      %p197 = scmp.eq.s32.totalorder %s30, 0
      %p198 = por %p196, %p197
      %p199 = scmp.ne.s32.totalorder %s187, %s188
      %p200 = scmp.eq.s32.totalorder %s31, 1
      %p201 = por %p199, %p200
      %p203 = scmp.ne.s32.totalorder %s188, %s202
      %p204 = scmp.eq.s32.totalorder %s31, 0
      %p205 = por %p203, %p204
      %s207 = sadd.s32 %s206, 1
      %p210 = scmp.eq.s32.totalorder %s25, 1
      %p211 = scmp.ne.s32.totalorder %s206, %s208
      %p212 = scmp.eq.s32.totalorder %s25, 0
      %p213 = por %p211, %p212
      %p214 = scmp.ne.s32.totalorder %s206, %s208
      %p215 = scmp.eq.s32.totalorder %s30, 1
      %p216 = por %p214, %p215
      %p217 = scmp.ne.s32.totalorder %s208, %s209
      %p218 = scmp.eq.s32.totalorder %s30, 0
      %p219 = por %p217, %p218
      %p220 = scmp.ne.s32.totalorder %s208, %s209
      %p221 = scmp.eq.s32.totalorder %s31, 1
      %p222 = por %p220, %p221
      %p224 = scmp.ne.s32.totalorder %s209, %s223
      %p225 = scmp.eq.s32.totalorder %s31, 0
      %p226 = por %p224, %p225
      %s227 = ssub.s32 %s25, %s32
      %p228 = scmp.eq.s32.totalorder %s227, 0
      %s230 = sadd.s32 %s229, 1
      %s231 = scalar_select %p228, %s229, %s230
      %p234 = pneg %p228
      %p235 = scmp.eq.s32.totalorder %s25, 1
      %p236 = por %p234, %p235
      %p237 = scmp.ne.s32.totalorder %s229, %s232
      %p238 = scmp.eq.s32.totalorder %s25, 0
      %p239 = por %p237, %p238
      %p240 = scmp.ne.s32.totalorder %s229, %s232
      %p241 = scmp.eq.s32.totalorder %s30, 1
      %p242 = por %p240, %p241
      %p243 = scmp.ne.s32.totalorder %s232, %s233
      %p244 = scmp.eq.s32.totalorder %s30, 0
      %p245 = por %p243, %p244
      %p246 = scmp.ne.s32.totalorder %s232, %s233
      %p247 = scmp.eq.s32.totalorder %s31, 1
      %p248 = por %p246, %p247
      %p250 = scmp.ne.s32.totalorder %s233, %s249
      %p251 = scmp.eq.s32.totalorder %s31, 0
      %p252 = por %p250, %p251
      %p253 = scmp.le.s32.totalorder 1, %s25
      %p254 = scmp.lt.s32.totalorder %s25, 3
      %p255 = pnand %p253, %p254
      %p256 = pneg %p255
      // Predicated region
      $region9: #{tpu_custom_call.1} parent=5 // pred_check
        _
      $region10: #{tpu_custom_call.1} parent=5 // pred_check_branch
        %258 = sbr.rel (%p255) target = $region12
      $region11: #{tpu_custom_call.1} parent=5 // pred_region
        %s259 = ssub.s32 %s25, 1
        // Predicated region
        $region13: #{tpu_custom_call.1} parent=11 // pred_check
          %p260 = pneg %p72
        $region14: #{tpu_custom_call.1} parent=11 // pred_check_branch
          %262 = sbr.rel (%p260) target = $region16
        $region15: #{tpu_custom_call.1} parent=11 // pred_region
          %264 = vsyncadd [#allocation7], 0
          %s265 = sshll.u32 %s1, 4
          %s266 = int_to_ptr.hbm [resolvable:$true] %s265
          %s267 = sshll.u32 [#allocation6], 4
          %s268 = int_to_ptr.vmem [resolvable:$true] %s267
          %273 = dma.hbm_to_vmem [thread:$0]  %s266, 28672, %s268, [#allocation7], 256, 256, 16
        $region16: #{tpu_custom_call.1} parent=11 // pred_fallthru
          _
        // Predicated region
        $region17: #{tpu_custom_call.1} parent=11 // pred_check
          %p274 = pneg %p93
        $region18: #{tpu_custom_call.1} parent=11 // pred_check_branch
          %276 = sbr.rel (%p274) target = $region20
        $region19: #{tpu_custom_call.1} parent=11 // pred_region
          %278 = vsyncadd [#allocation7], 0
          %s280 = sshll.u32 %s2, 4
          %s281 = int_to_ptr.hbm [resolvable:$true] %s280
          %s282 = sshll.u32 [#allocation8], 4
          %s283 = int_to_ptr.vmem [resolvable:$true] %s282
          %285 = dma.hbm_to_vmem [thread:$0]  %s281, 64, %s283, [#allocation7]
        $region20: #{tpu_custom_call.1} parent=11 // pred_fallthru
          _
        // Predicated region
        $region21: #{tpu_custom_call.1} parent=11 // pred_check
          %p286 = pneg %p114
        $region22: #{tpu_custom_call.1} parent=11 // pred_check_branch
          %288 = sbr.rel (%p286) target = $region24
        $region23: #{tpu_custom_call.1} parent=11 // pred_region
          %290 = vsyncadd [#allocation10], 0
          %s291 = sshll.u32 %s3, 4
          %s292 = int_to_ptr.hbm [resolvable:$true] %s291
          %s293 = sshll.u32 [#allocation9], 4
          %s294 = int_to_ptr.vmem [resolvable:$true] %s293
          %299 = dma.hbm_to_vmem [thread:$0]  %s292, 8192, %s294, [#allocation10], 128, 128, 8
        $region24: #{tpu_custom_call.1} parent=11 // pred_fallthru
          _
        // Predicated region
        $region25: #{tpu_custom_call.1} parent=11 // pred_check
          %p300 = pneg %p135
        $region26: #{tpu_custom_call.1} parent=11 // pred_check_branch
          %302 = sbr.rel (%p300) target = $region28
        $region27: #{tpu_custom_call.1} parent=11 // pred_region
          _
        $region28: #{tpu_custom_call.1} parent=11 // pred_fallthru
          _
        // Predicated region
        $region29: #{tpu_custom_call.1} parent=11 // pred_check
          %p303 = pneg %p156
        $region30: #{tpu_custom_call.1} parent=11 // pred_check_branch
          %305 = sbr.rel (%p303) target = $region32
        $region31: #{tpu_custom_call.1} parent=11 // pred_region
          %307 = vsyncadd [#allocation10], 0
          %s308 = sshll.u32 %s5, 4
          %s309 = int_to_ptr.hbm [resolvable:$true] %s308
          %s310 = sshll.u32 [#allocation11], 4
          %s311 = int_to_ptr.vmem [resolvable:$true] %s310
          %316 = dma.hbm_to_vmem [thread:$0]  %s309, 2048, %s311, [#allocation10], 64, 64, 4
        $region32: #{tpu_custom_call.1} parent=11 // pred_fallthru
          _
        // Predicated region
        $region33: #{tpu_custom_call.1} parent=11 // pred_check
          %p317 = pneg %p177
        $region34: #{tpu_custom_call.1} parent=11 // pred_check_branch
          %319 = sbr.rel (%p317) target = $region36
        $region35: #{tpu_custom_call.1} parent=11 // pred_region
          _
        $region36: #{tpu_custom_call.1} parent=11 // pred_fallthru
          _
        // Predicated region
        $region37: #{tpu_custom_call.1} parent=11 // pred_check
          %p320 = pneg %p198
        $region38: #{tpu_custom_call.1} parent=11 // pred_check_branch
          %322 = sbr.rel (%p320) target = $region40
        $region39: #{tpu_custom_call.1} parent=11 // pred_region
          _
        $region40: #{tpu_custom_call.1} parent=11 // pred_fallthru
          _
        // Predicated region
        $region41: #{tpu_custom_call.1} parent=11 // pred_check
          %p323 = pneg %p219
        $region42: #{tpu_custom_call.1} parent=11 // pred_check_branch
          %325 = sbr.rel (%p323) target = $region44
        $region43: #{tpu_custom_call.1} parent=11 // pred_region
          _
        $region44: #{tpu_custom_call.1} parent=11 // pred_fallthru
          _
      $region12: #{tpu_custom_call.1} parent=5 // pred_fallthru
        _
      %p326 = scmp.lt.s32.totalorder %s25, 2
      // Predicated region
      $region45: #{tpu_custom_call.1} parent=5 // pred_check
        %p327 = pneg %p326
      $region46: #{tpu_custom_call.1} parent=5 // pred_check_branch
        %329 = sbr.rel (%p327) target = $region48
      $region47: #{tpu_custom_call.1} parent=5 // pred_region
        // Predicated region
        $region49: #{tpu_custom_call.1} parent=47 // pred_check
          %p330 = pneg %p45
        $region50: #{tpu_custom_call.1} parent=47 // pred_check_branch
          %332 = sbr.rel (%p330) target = $region52
        $region51: #{tpu_custom_call.1} parent=47 // pred_region
          %s333 = sand.u32 %s35, 1
          %s334 = scalar_lea.sflag [#allocation4], %s333
          %s335 = sand.u32 %s35, 1
          %s336 = smul.addr %s335, 448
          %s337 = scalar_lea.vmem [#allocation3], %s336
          %s338 = smul.u32 16, %s25
          %340 = vsyncadd %s334, 0
          %s341 = smul.addr %s338, 7
          %s342 = smul.addr %s341, 4
          %s343 = scalar_lea.hbm %s0, %s342
          %s344 = sshll.u32 %s343, 4
          %s345 = int_to_ptr.hbm [resolvable:$true] %s344
          %s346 = sshll.u32 %s337, 4
          %s347 = int_to_ptr.vmem [resolvable:$true] %s346
          %352 = dma.hbm_to_vmem [thread:$0]  %s345, 7168, %s347, %s334, 448, 448, 28
        $region52: #{tpu_custom_call.1} parent=47 // pred_fallthru
          _
      $region48: #{tpu_custom_call.1} parent=5 // pred_fallthru
        _
      %p353 = scmp.le.s32.totalorder 1, %s25
      %p354 = scmp.lt.s32.totalorder %s25, 3
      %p355 = pnand %p353, %p354
      %p356 = pneg %p355
      // Predicated region
      $region53: #{tpu_custom_call.1} parent=5 // pred_check
        _
      $region54: #{tpu_custom_call.1} parent=5 // pred_check_branch
        %358 = sbr.rel (%p355) target = $region56
      $region55: #{tpu_custom_call.1} parent=5 // pred_region
        %s359 = ssub.s32 %s25, 1
        %s360 = sand.u32 %s38, 1
        %s361 = scalar_lea.sflag [#allocation4], %s360
        %s362 = sand.u32 %s38, 1
        %s363 = smul.addr %s362, 448
        %s364 = scalar_lea.vmem [#allocation3], %s363
        // Predicated region
        $region57: #{tpu_custom_call.1} parent=55 // pred_check
          %p365 = pneg %p51
        $region58: #{tpu_custom_call.1} parent=55 // pred_check_branch
          %367 = sbr.rel (%p365) target = $region60
        $region59: #{tpu_custom_call.1} parent=55 // pred_region
          %369 = dma.done %s361, 7168
        $region60: #{tpu_custom_call.1} parent=55 // pred_fallthru
          _
        // Predicated region
        $region61: #{tpu_custom_call.1} parent=55 // pred_check
          %p370 = pneg %p72
        $region62: #{tpu_custom_call.1} parent=55 // pred_check_branch
          %372 = sbr.rel (%p370) target = $region64
        $region63: #{tpu_custom_call.1} parent=55 // pred_region
          %374 = dma.done [#allocation7], 28672
        $region64: #{tpu_custom_call.1} parent=55 // pred_fallthru
          _
        // Predicated region
        $region65: #{tpu_custom_call.1} parent=55 // pred_check
          %p375 = pneg %p93
        $region66: #{tpu_custom_call.1} parent=55 // pred_check_branch
          %377 = sbr.rel (%p375) target = $region68
        $region67: #{tpu_custom_call.1} parent=55 // pred_region
          %379 = dma.done [#allocation7], 64
        $region68: #{tpu_custom_call.1} parent=55 // pred_fallthru
          _
        // Predicated region
        $region69: #{tpu_custom_call.1} parent=55 // pred_check
          %p380 = pneg %p114
        $region70: #{tpu_custom_call.1} parent=55 // pred_check_branch
          %382 = sbr.rel (%p380) target = $region72
        $region71: #{tpu_custom_call.1} parent=55 // pred_region
          %384 = dma.done [#allocation10], 8192
        $region72: #{tpu_custom_call.1} parent=55 // pred_fallthru
          _
        // Predicated region
        $region73: #{tpu_custom_call.1} parent=55 // pred_check
          %p385 = pneg %p156
        $region74: #{tpu_custom_call.1} parent=55 // pred_check_branch
          %387 = sbr.rel (%p385) target = $region76
        $region75: #{tpu_custom_call.1} parent=55 // pred_region
          %389 = dma.done [#allocation10], 2048
        $region76: #{tpu_custom_call.1} parent=55 // pred_fallthru
          _
        %s390 = sand.u32 %s38, 1
        %s391 = scalar_lea.sflag [#allocation4], %s390
        %s392 = sand.u32 %s38, 1
        %s393 = smul.addr %s392, 448
        %s394 = scalar_lea.vmem [#allocation3], %s393
        %p395 = pneg %p51
        %p396 = pneg %p48
        %p397 = pneg %p72
        %p398 = pneg %p69
        %p399 = pneg %p93
        %p400 = pneg %p90
        %p401 = pneg %p114
        %p402 = pneg %p111
        %p403 = pneg %p135
        %p404 = pneg %p132
        %p405 = pneg %p156
        %p406 = pneg %p153
        %p407 = pneg %p177
        %p408 = pneg %p174
        %p409 = pneg %p198
        %p410 = pneg %p195
        %p411 = pneg %p219
        %p412 = pneg %p216
        %p413 = pneg %p245
        %p414 = pneg %p242
        %s415 = sand.u32 %s232, 1
        %s416 = scalar_lea.sflag [#allocation5], %s415
        %s417 = sand.u32 %s232, 1
        %s418 = scalar_lea.vmem [#allocation12], %s417
        %s419 = smul.u32 16, %s30
        %v420 = vld [vmem:[%s364] sm:$0xff]
        %v421 = vld [vmem:[%s364 + $0x8] sm:$0xff]
        %v422 = vld [vmem:[%s364 + $0x10] sm:$0xff]
        %v423 = vld [vmem:[%s364 + $0x18] sm:$0xf]
        %v424 = vld [vmem:[%s364 + $0x1c] sm:$0xff]
        %v425 = vld [vmem:[%s364 + $0x24] sm:$0xff]
        %v426 = vld [vmem:[%s364 + $0x2c] sm:$0xff]
        %v427 = vld [vmem:[%s364 + $0x34] sm:$0xf]
        %v428 = vld [vmem:[%s364 + $0x38] sm:$0xff]
        %v429 = vld [vmem:[%s364 + $0x40] sm:$0xff]
        %v430 = vld [vmem:[%s364 + $0x48] sm:$0xff]
        %v431 = vld [vmem:[%s364 + $0x50] sm:$0xf]
        %v432 = vld [vmem:[%s364 + $0x54] sm:$0xff]
        %v433 = vld [vmem:[%s364 + $0x5c] sm:$0xff]
        %v434 = vld [vmem:[%s364 + $0x64] sm:$0xff]
        %v435 = vld [vmem:[%s364 + $0x6c] sm:$0xf]
        %v436 = vld [vmem:[%s364 + $0x70] sm:$0xff]
        %v437 = vld [vmem:[%s364 + $0x78] sm:$0xff]
        %v438 = vld [vmem:[%s364 + $0x80] sm:$0xff]
        %v439 = vld [vmem:[%s364 + $0x88] sm:$0xf]
        %v440 = vld [vmem:[%s364 + $0x8c] sm:$0xff]
        %v441 = vld [vmem:[%s364 + $0x94] sm:$0xff]
        %v442 = vld [vmem:[%s364 + $0x9c] sm:$0xff]
        %v443 = vld [vmem:[%s364 + $0xa4] sm:$0xf]
        %v444 = vld [vmem:[%s364 + $0xa8] sm:$0xff]
        %v445 = vld [vmem:[%s364 + $0xb0] sm:$0xff]
        %v446 = vld [vmem:[%s364 + $0xb8] sm:$0xff]
        %v447 = vld [vmem:[%s364 + $0xc0] sm:$0xf]
        %v448 = vld [vmem:[%s364 + $0xc4] sm:$0xff]
        %v449 = vld [vmem:[%s364 + $0xcc] sm:$0xff]
        %v450 = vld [vmem:[%s364 + $0xd4] sm:$0xff]
        %v451 = vld [vmem:[%s364 + $0xdc] sm:$0xf]
        %v452 = vld [vmem:[%s364 + $0xe0] sm:$0xff]
        %v453 = vld [vmem:[%s364 + $0xe8] sm:$0xff]
        %v454 = vld [vmem:[%s364 + $0xf0] sm:$0xff]
        %v455 = vld [vmem:[%s364 + $0xf8] sm:$0xf]
        %v456 = vld [vmem:[%s364 + $0xfc] sm:$0xff]
        %v457 = vld [vmem:[%s364 + $0x104] sm:$0xff]
        %v458 = vld [vmem:[%s364 + $0x10c] sm:$0xff]
        %v459 = vld [vmem:[%s364 + $0x114] sm:$0xf]
        %v460 = vld [vmem:[%s364 + $0x118] sm:$0xff]
        %v461 = vld [vmem:[%s364 + $0x120] sm:$0xff]
        %v462 = vld [vmem:[%s364 + $0x128] sm:$0xff]
        %v463 = vld [vmem:[%s364 + $0x130] sm:$0xf]
        %v464 = vld [vmem:[%s364 + $0x134] sm:$0xff]
        %v465 = vld [vmem:[%s364 + $0x13c] sm:$0xff]
        %v466 = vld [vmem:[%s364 + $0x144] sm:$0xff]
        %v467 = vld [vmem:[%s364 + $0x14c] sm:$0xf]
        %v468 = vld [vmem:[%s364 + $0x150] sm:$0xff]
        %v469 = vld [vmem:[%s364 + $0x158] sm:$0xff]
        %v470 = vld [vmem:[%s364 + $0x160] sm:$0xff]
        %v471 = vld [vmem:[%s364 + $0x168] sm:$0xf]
        %v472 = vld [vmem:[%s364 + $0x16c] sm:$0xff]
        %v473 = vld [vmem:[%s364 + $0x174] sm:$0xff]
        %v474 = vld [vmem:[%s364 + $0x17c] sm:$0xff]
        %v475 = vld [vmem:[%s364 + $0x184] sm:$0xf]
        %v476 = vld [vmem:[%s364 + $0x188] sm:$0xff]
        %v477 = vld [vmem:[%s364 + $0x190] sm:$0xff]
        %v478 = vld [vmem:[%s364 + $0x198] sm:$0xff]
        %v479 = vld [vmem:[%s364 + $0x1a0] sm:$0xf]
        %v480 = vld [vmem:[%s364 + $0x1a4] sm:$0xff]
        %v481 = vld [vmem:[%s364 + $0x1ac] sm:$0xff]
        %v482 = vld [vmem:[%s364 + $0x1b4] sm:$0xff]
        %v483 = vld [vmem:[%s364 + $0x1bc] sm:$0xf]
        %v484 = vld [vmem:[#allocation6] sm:$0xff]
        %v485 = vld [vmem:[#allocation6 + $0x8] sm:$0xff]
        %v486 = vld [vmem:[#allocation6 + $0x10] sm:$0xff]
        %v487 = vld [vmem:[#allocation6 + $0x18] sm:$0xff]
        %v488 = vld [vmem:[#allocation6 + $0x20] sm:$0xff]
        %v489 = vld [vmem:[#allocation6 + $0x28] sm:$0xff]
        %v490 = vld [vmem:[#allocation6 + $0x30] sm:$0xff]
        %v491 = vld [vmem:[#allocation6 + $0x38] sm:$0xff]
        %v492 = vld [vmem:[#allocation6 + $0x40] sm:$0xff]
        %v493 = vld [vmem:[#allocation6 + $0x48] sm:$0xff]
        %v494 = vld [vmem:[#allocation6 + $0x50] sm:$0xff]
        %v495 = vld [vmem:[#allocation6 + $0x58] sm:$0xff]
        %v496 = vld [vmem:[#allocation6 + $0x60] sm:$0xff]
        %v497 = vld [vmem:[#allocation6 + $0x68] sm:$0xff]
        %v498 = vld [vmem:[#allocation6 + $0x70] sm:$0xff]
        %v499 = vld [vmem:[#allocation6 + $0x78] sm:$0xff]
        %v500 = vld [vmem:[#allocation6 + $0x80] sm:$0xff]
        %v501 = vld [vmem:[#allocation6 + $0x88] sm:$0xff]
        %v502 = vld [vmem:[#allocation6 + $0x90] sm:$0xff]
        %v503 = vld [vmem:[#allocation6 + $0x98] sm:$0xff]
        %v504 = vld [vmem:[#allocation6 + $0xa0] sm:$0xff]
        %v505 = vld [vmem:[#allocation6 + $0xa8] sm:$0xff]
        %v506 = vld [vmem:[#allocation6 + $0xb0] sm:$0xff]
        %v507 = vld [vmem:[#allocation6 + $0xb8] sm:$0xff]
        %v508 = vld [vmem:[#allocation6 + $0xc0] sm:$0xff]
        %v509 = vld [vmem:[#allocation6 + $0xc8] sm:$0xff]
        %v510 = vld [vmem:[#allocation6 + $0xd0] sm:$0xff]
        %v511 = vld [vmem:[#allocation6 + $0xd8] sm:$0xff]
        %v512 = vld [vmem:[#allocation6 + $0xe0] sm:$0xff]
        %v513 = vld [vmem:[#allocation6 + $0xe8] sm:$0xff]
        %v514 = vld [vmem:[#allocation6 + $0xf0] sm:$0xff]
        %v515 = vld [vmem:[#allocation6 + $0xf8] sm:$0xff]
        %v516 = vld [vmem:[#allocation6 + $0x100] sm:$0xff]
        %v517 = vld [vmem:[#allocation6 + $0x108] sm:$0xff]
        %v518 = vld [vmem:[#allocation6 + $0x110] sm:$0xff]
        %v519 = vld [vmem:[#allocation6 + $0x118] sm:$0xff]
        %v520 = vld [vmem:[#allocation6 + $0x120] sm:$0xff]
        %v521 = vld [vmem:[#allocation6 + $0x128] sm:$0xff]
        %v522 = vld [vmem:[#allocation6 + $0x130] sm:$0xff]
        %v523 = vld [vmem:[#allocation6 + $0x138] sm:$0xff]
        %v524 = vld [vmem:[#allocation6 + $0x140] sm:$0xff]
        %v525 = vld [vmem:[#allocation6 + $0x148] sm:$0xff]
        %v526 = vld [vmem:[#allocation6 + $0x150] sm:$0xff]
        %v527 = vld [vmem:[#allocation6 + $0x158] sm:$0xff]
        %v528 = vld [vmem:[#allocation6 + $0x160] sm:$0xff]
        %v529 = vld [vmem:[#allocation6 + $0x168] sm:$0xff]
        %v530 = vld [vmem:[#allocation6 + $0x170] sm:$0xff]
        %v531 = vld [vmem:[#allocation6 + $0x178] sm:$0xff]
        %v532 = vld [vmem:[#allocation6 + $0x180] sm:$0xff]
        %v533 = vld [vmem:[#allocation6 + $0x188] sm:$0xff]
        %v534 = vld [vmem:[#allocation6 + $0x190] sm:$0xff]
        %v535 = vld [vmem:[#allocation6 + $0x198] sm:$0xff]
        %v536 = vld [vmem:[#allocation6 + $0x1a0] sm:$0xff]
        %v537 = vld [vmem:[#allocation6 + $0x1a8] sm:$0xff]
        %v538 = vld [vmem:[#allocation6 + $0x1b0] sm:$0xff]
        %v539 = vld [vmem:[#allocation6 + $0x1b8] sm:$0xff]
        %v540 = vld [vmem:[#allocation6 + $0x1c0] sm:$0xff]
        %v541 = vld [vmem:[#allocation6 + $0x1c8] sm:$0xff]
        %v542 = vld [vmem:[#allocation6 + $0x1d0] sm:$0xff]
        %v543 = vld [vmem:[#allocation6 + $0x1d8] sm:$0xff]
        %v544 = vld [vmem:[#allocation6 + $0x1e0] sm:$0xff]
        %v545 = vld [vmem:[#allocation6 + $0x1e8] sm:$0xff]
        %v546 = vld [vmem:[#allocation6 + $0x1f0] sm:$0xff]
        %v547 = vld [vmem:[#allocation6 + $0x1f8] sm:$0xff]
        %v548 = vld [vmem:[#allocation6 + $0x200] sm:$0xff]
        %v549 = vld [vmem:[#allocation6 + $0x208] sm:$0xff]
        %v550 = vld [vmem:[#allocation6 + $0x210] sm:$0xff]
        %v551 = vld [vmem:[#allocation6 + $0x218] sm:$0xff]
        %v552 = vld [vmem:[#allocation6 + $0x220] sm:$0xff]
        %v553 = vld [vmem:[#allocation6 + $0x228] sm:$0xff]
        %v554 = vld [vmem:[#allocation6 + $0x230] sm:$0xff]
        %v555 = vld [vmem:[#allocation6 + $0x238] sm:$0xff]
        %v556 = vld [vmem:[#allocation6 + $0x240] sm:$0xff]
        %v557 = vld [vmem:[#allocation6 + $0x248] sm:$0xff]
        %v558 = vld [vmem:[#allocation6 + $0x250] sm:$0xff]
        %v559 = vld [vmem:[#allocation6 + $0x258] sm:$0xff]
        %v560 = vld [vmem:[#allocation6 + $0x260] sm:$0xff]
        %v561 = vld [vmem:[#allocation6 + $0x268] sm:$0xff]
        %v562 = vld [vmem:[#allocation6 + $0x270] sm:$0xff]
        %v563 = vld [vmem:[#allocation6 + $0x278] sm:$0xff]
        %v564 = vld [vmem:[#allocation6 + $0x280] sm:$0xff]
        %v565 = vld [vmem:[#allocation6 + $0x288] sm:$0xff]
        %v566 = vld [vmem:[#allocation6 + $0x290] sm:$0xff]
        %v567 = vld [vmem:[#allocation6 + $0x298] sm:$0xff]
        %v568 = vld [vmem:[#allocation6 + $0x2a0] sm:$0xff]
        %v569 = vld [vmem:[#allocation6 + $0x2a8] sm:$0xff]
        %v570 = vld [vmem:[#allocation6 + $0x2b0] sm:$0xff]
        %v571 = vld [vmem:[#allocation6 + $0x2b8] sm:$0xff]
        %v572 = vld [vmem:[#allocation6 + $0x2c0] sm:$0xff]
        %v573 = vld [vmem:[#allocation6 + $0x2c8] sm:$0xff]
        %v574 = vld [vmem:[#allocation6 + $0x2d0] sm:$0xff]
        %v575 = vld [vmem:[#allocation6 + $0x2d8] sm:$0xff]
        %v576 = vld [vmem:[#allocation6 + $0x2e0] sm:$0xff]
        %v577 = vld [vmem:[#allocation6 + $0x2e8] sm:$0xff]
        %v578 = vld [vmem:[#allocation6 + $0x2f0] sm:$0xff]
        %v579 = vld [vmem:[#allocation6 + $0x2f8] sm:$0xff]
        %v580 = vld [vmem:[#allocation6 + $0x300] sm:$0xff]
        %v581 = vld [vmem:[#allocation6 + $0x308] sm:$0xff]
        %v582 = vld [vmem:[#allocation6 + $0x310] sm:$0xff]
        %v583 = vld [vmem:[#allocation6 + $0x318] sm:$0xff]
        %v584 = vld [vmem:[#allocation6 + $0x320] sm:$0xff]
        %v585 = vld [vmem:[#allocation6 + $0x328] sm:$0xff]
        %v586 = vld [vmem:[#allocation6 + $0x330] sm:$0xff]
        %v587 = vld [vmem:[#allocation6 + $0x338] sm:$0xff]
        %v588 = vld [vmem:[#allocation6 + $0x340] sm:$0xff]
        %v589 = vld [vmem:[#allocation6 + $0x348] sm:$0xff]
        %v590 = vld [vmem:[#allocation6 + $0x350] sm:$0xff]
        %v591 = vld [vmem:[#allocation6 + $0x358] sm:$0xff]
        %v592 = vld [vmem:[#allocation6 + $0x360] sm:$0xff]
        %v593 = vld [vmem:[#allocation6 + $0x368] sm:$0xff]
        %v594 = vld [vmem:[#allocation6 + $0x370] sm:$0xff]
        %v595 = vld [vmem:[#allocation6 + $0x378] sm:$0xff]
        %v596 = vld [vmem:[#allocation6 + $0x380] sm:$0xff]
        %v597 = vld [vmem:[#allocation6 + $0x388] sm:$0xff]
        %v598 = vld [vmem:[#allocation6 + $0x390] sm:$0xff]
        %v599 = vld [vmem:[#allocation6 + $0x398] sm:$0xff]
        %v600 = vld [vmem:[#allocation6 + $0x3a0] sm:$0xff]
        %v601 = vld [vmem:[#allocation6 + $0x3a8] sm:$0xff]
        %v602 = vld [vmem:[#allocation6 + $0x3b0] sm:$0xff]
        %v603 = vld [vmem:[#allocation6 + $0x3b8] sm:$0xff]
        %v604 = vld [vmem:[#allocation6 + $0x3c0] sm:$0xff]
        %v605 = vld [vmem:[#allocation6 + $0x3c8] sm:$0xff]
        %v606 = vld [vmem:[#allocation6 + $0x3d0] sm:$0xff]
        %v607 = vld [vmem:[#allocation6 + $0x3d8] sm:$0xff]
        %v608 = vld [vmem:[#allocation6 + $0x3e0] sm:$0xff]
        %v609 = vld [vmem:[#allocation6 + $0x3e8] sm:$0xff]
        %v610 = vld [vmem:[#allocation6 + $0x3f0] sm:$0xff]
        %v611 = vld [vmem:[#allocation6 + $0x3f8] sm:$0xff]
        %v612 = vld [vmem:[#allocation6 + $0x400] sm:$0xff]
        %v613 = vld [vmem:[#allocation6 + $0x408] sm:$0xff]
        %v614 = vld [vmem:[#allocation6 + $0x410] sm:$0xff]
        %v615 = vld [vmem:[#allocation6 + $0x418] sm:$0xff]
        %v616 = vld [vmem:[#allocation6 + $0x420] sm:$0xff]
        %v617 = vld [vmem:[#allocation6 + $0x428] sm:$0xff]
        %v618 = vld [vmem:[#allocation6 + $0x430] sm:$0xff]
        %v619 = vld [vmem:[#allocation6 + $0x438] sm:$0xff]
        %v620 = vld [vmem:[#allocation6 + $0x440] sm:$0xff]
        %v621 = vld [vmem:[#allocation6 + $0x448] sm:$0xff]
        %v622 = vld [vmem:[#allocation6 + $0x450] sm:$0xff]
        %v623 = vld [vmem:[#allocation6 + $0x458] sm:$0xff]
        %v624 = vld [vmem:[#allocation6 + $0x460] sm:$0xff]
        %v625 = vld [vmem:[#allocation6 + $0x468] sm:$0xff]
        %v626 = vld [vmem:[#allocation6 + $0x470] sm:$0xff]
        %v627 = vld [vmem:[#allocation6 + $0x478] sm:$0xff]
        %v628 = vld [vmem:[#allocation6 + $0x480] sm:$0xff]
        %v629 = vld [vmem:[#allocation6 + $0x488] sm:$0xff]
        %v630 = vld [vmem:[#allocation6 + $0x490] sm:$0xff]
        %v631 = vld [vmem:[#allocation6 + $0x498] sm:$0xff]
        %v632 = vld [vmem:[#allocation6 + $0x4a0] sm:$0xff]
        %v633 = vld [vmem:[#allocation6 + $0x4a8] sm:$0xff]
        %v634 = vld [vmem:[#allocation6 + $0x4b0] sm:$0xff]
        %v635 = vld [vmem:[#allocation6 + $0x4b8] sm:$0xff]
        %v636 = vld [vmem:[#allocation6 + $0x4c0] sm:$0xff]
        %v637 = vld [vmem:[#allocation6 + $0x4c8] sm:$0xff]
        %v638 = vld [vmem:[#allocation6 + $0x4d0] sm:$0xff]
        %v639 = vld [vmem:[#allocation6 + $0x4d8] sm:$0xff]
        %v640 = vld [vmem:[#allocation6 + $0x4e0] sm:$0xff]
        %v641 = vld [vmem:[#allocation6 + $0x4e8] sm:$0xff]
        %v642 = vld [vmem:[#allocation6 + $0x4f0] sm:$0xff]
        %v643 = vld [vmem:[#allocation6 + $0x4f8] sm:$0xff]
        %v644 = vld [vmem:[#allocation6 + $0x500] sm:$0xff]
        %v645 = vld [vmem:[#allocation6 + $0x508] sm:$0xff]
        %v646 = vld [vmem:[#allocation6 + $0x510] sm:$0xff]
        %v647 = vld [vmem:[#allocation6 + $0x518] sm:$0xff]
        %v648 = vld [vmem:[#allocation6 + $0x520] sm:$0xff]
        %v649 = vld [vmem:[#allocation6 + $0x528] sm:$0xff]
        %v650 = vld [vmem:[#allocation6 + $0x530] sm:$0xff]
        %v651 = vld [vmem:[#allocation6 + $0x538] sm:$0xff]
        %v652 = vld [vmem:[#allocation6 + $0x540] sm:$0xff]
        %v653 = vld [vmem:[#allocation6 + $0x548] sm:$0xff]
        %v654 = vld [vmem:[#allocation6 + $0x550] sm:$0xff]
        %v655 = vld [vmem:[#allocation6 + $0x558] sm:$0xff]
        %v656 = vld [vmem:[#allocation6 + $0x560] sm:$0xff]
        %v657 = vld [vmem:[#allocation6 + $0x568] sm:$0xff]
        %v658 = vld [vmem:[#allocation6 + $0x570] sm:$0xff]
        %v659 = vld [vmem:[#allocation6 + $0x578] sm:$0xff]
        %v660 = vld [vmem:[#allocation6 + $0x580] sm:$0xff]
        %v661 = vld [vmem:[#allocation6 + $0x588] sm:$0xff]
        %v662 = vld [vmem:[#allocation6 + $0x590] sm:$0xff]
        %v663 = vld [vmem:[#allocation6 + $0x598] sm:$0xff]
        %v664 = vld [vmem:[#allocation6 + $0x5a0] sm:$0xff]
        %v665 = vld [vmem:[#allocation6 + $0x5a8] sm:$0xff]
        %v666 = vld [vmem:[#allocation6 + $0x5b0] sm:$0xff]
        %v667 = vld [vmem:[#allocation6 + $0x5b8] sm:$0xff]
        %v668 = vld [vmem:[#allocation6 + $0x5c0] sm:$0xff]
        %v669 = vld [vmem:[#allocation6 + $0x5c8] sm:$0xff]
        %v670 = vld [vmem:[#allocation6 + $0x5d0] sm:$0xff]
        %v671 = vld [vmem:[#allocation6 + $0x5d8] sm:$0xff]
        %v672 = vld [vmem:[#allocation6 + $0x5e0] sm:$0xff]
        %v673 = vld [vmem:[#allocation6 + $0x5e8] sm:$0xff]
        %v674 = vld [vmem:[#allocation6 + $0x5f0] sm:$0xff]
        %v675 = vld [vmem:[#allocation6 + $0x5f8] sm:$0xff]
        %v676 = vld [vmem:[#allocation6 + $0x600] sm:$0xff]
        %v677 = vld [vmem:[#allocation6 + $0x608] sm:$0xff]
        %v678 = vld [vmem:[#allocation6 + $0x610] sm:$0xff]
        %v679 = vld [vmem:[#allocation6 + $0x618] sm:$0xff]
        %v680 = vld [vmem:[#allocation6 + $0x620] sm:$0xff]
        %v681 = vld [vmem:[#allocation6 + $0x628] sm:$0xff]
        %v682 = vld [vmem:[#allocation6 + $0x630] sm:$0xff]
        %v683 = vld [vmem:[#allocation6 + $0x638] sm:$0xff]
        %v684 = vld [vmem:[#allocation6 + $0x640] sm:$0xff]
        %v685 = vld [vmem:[#allocation6 + $0x648] sm:$0xff]
        %v686 = vld [vmem:[#allocation6 + $0x650] sm:$0xff]
        %v687 = vld [vmem:[#allocation6 + $0x658] sm:$0xff]
        %v688 = vld [vmem:[#allocation6 + $0x660] sm:$0xff]
        %v689 = vld [vmem:[#allocation6 + $0x668] sm:$0xff]
        %v690 = vld [vmem:[#allocation6 + $0x670] sm:$0xff]
        %v691 = vld [vmem:[#allocation6 + $0x678] sm:$0xff]
        %v692 = vld [vmem:[#allocation6 + $0x680] sm:$0xff]
        %v693 = vld [vmem:[#allocation6 + $0x688] sm:$0xff]
        %v694 = vld [vmem:[#allocation6 + $0x690] sm:$0xff]
        %v695 = vld [vmem:[#allocation6 + $0x698] sm:$0xff]
        %v696 = vld [vmem:[#allocation6 + $0x6a0] sm:$0xff]
        %v697 = vld [vmem:[#allocation6 + $0x6a8] sm:$0xff]
        %v698 = vld [vmem:[#allocation6 + $0x6b0] sm:$0xff]
        %v699 = vld [vmem:[#allocation6 + $0x6b8] sm:$0xff]
        %v700 = vld [vmem:[#allocation6 + $0x6c0] sm:$0xff]
        %v701 = vld [vmem:[#allocation6 + $0x6c8] sm:$0xff]
        %v702 = vld [vmem:[#allocation6 + $0x6d0] sm:$0xff]
        %v703 = vld [vmem:[#allocation6 + $0x6d8] sm:$0xff]
        %v704 = vld [vmem:[#allocation6 + $0x6e0] sm:$0xff]
        %v705 = vld [vmem:[#allocation6 + $0x6e8] sm:$0xff]
        %v706 = vld [vmem:[#allocation6 + $0x6f0] sm:$0xff]
        %v707 = vld [vmem:[#allocation6 + $0x6f8] sm:$0xff]
        %v708 = vld [vmem:[#allocation8] sm:$0xf]
        %v710 = vperm.slane %v708, 0
        %v711 = vperm.slane %v708, 1
        %v712 = vperm.slane %v708, 2
        %v713 = vperm.slane %v708, 3
        %v782 = vunpack.c.l.b16 %v420
        %v783 = vunpack.c.h.b16 %v420
        %v784 = vunpack.c.l.b16 %v421
        %v785 = vunpack.c.h.b16 %v421
        %v786 = vunpack.c.l.b16 %v422
        %v787 = vunpack.c.h.b16 %v422
        %v788 = vunpack.c.l.b16 %v423
        %v789 = vunpack.c.l.b16 %v424
        %v790 = vunpack.c.h.b16 %v424
        %v791 = vunpack.c.l.b16 %v425
        %v792 = vunpack.c.h.b16 %v425
        %v793 = vunpack.c.l.b16 %v426
        %v794 = vunpack.c.h.b16 %v426
        %v795 = vunpack.c.l.b16 %v427
        %v796 = vunpack.c.l.b16 %v428
        %v797 = vunpack.c.h.b16 %v428
        %v798 = vunpack.c.l.b16 %v429
        %v799 = vunpack.c.h.b16 %v429
        %v800 = vunpack.c.l.b16 %v430
        %v801 = vunpack.c.h.b16 %v430
        %v802 = vunpack.c.l.b16 %v431
        %v803 = vunpack.c.l.b16 %v432
        %v804 = vunpack.c.h.b16 %v432
        %v805 = vunpack.c.l.b16 %v433
        %v806 = vunpack.c.h.b16 %v433
        %v807 = vunpack.c.l.b16 %v434
        %v808 = vunpack.c.h.b16 %v434
        %v809 = vunpack.c.l.b16 %v435
        %v810 = vunpack.c.l.b16 %v436
        %v811 = vunpack.c.h.b16 %v436
        %v812 = vunpack.c.l.b16 %v437
        %v813 = vunpack.c.h.b16 %v437
        %v814 = vunpack.c.l.b16 %v438
        %v815 = vunpack.c.h.b16 %v438
        %v816 = vunpack.c.l.b16 %v439
        %v817 = vunpack.c.l.b16 %v440
        %v818 = vunpack.c.h.b16 %v440
        %v819 = vunpack.c.l.b16 %v441
        %v820 = vunpack.c.h.b16 %v441
        %v821 = vunpack.c.l.b16 %v442
        %v822 = vunpack.c.h.b16 %v442
        %v823 = vunpack.c.l.b16 %v443
        %v824 = vunpack.c.l.b16 %v444
        %v825 = vunpack.c.h.b16 %v444
        %v826 = vunpack.c.l.b16 %v445
        %v827 = vunpack.c.h.b16 %v445
        %v828 = vunpack.c.l.b16 %v446
        %v829 = vunpack.c.h.b16 %v446
        %v830 = vunpack.c.l.b16 %v447
        %v831 = vunpack.c.l.b16 %v448
        %v832 = vunpack.c.h.b16 %v448
        %v833 = vunpack.c.l.b16 %v449
        %v834 = vunpack.c.h.b16 %v449
        %v835 = vunpack.c.l.b16 %v450
        %v836 = vunpack.c.h.b16 %v450
        %v837 = vunpack.c.l.b16 %v451
        %v838 = vunpack.c.l.b16 %v452
        %v839 = vunpack.c.h.b16 %v452
        %v840 = vunpack.c.l.b16 %v453
        %v841 = vunpack.c.h.b16 %v453
        %v842 = vunpack.c.l.b16 %v454
        %v843 = vunpack.c.h.b16 %v454
        %v844 = vunpack.c.l.b16 %v455
        %v845 = vunpack.c.l.b16 %v456
        %v846 = vunpack.c.h.b16 %v456
        %v847 = vunpack.c.l.b16 %v457
        %v848 = vunpack.c.h.b16 %v457
        %v849 = vunpack.c.l.b16 %v458
        %v850 = vunpack.c.h.b16 %v458
        %v851 = vunpack.c.l.b16 %v459
        %v852 = vunpack.c.l.b16 %v460
        %v853 = vunpack.c.h.b16 %v460
        %v854 = vunpack.c.l.b16 %v461
        %v855 = vunpack.c.h.b16 %v461
        %v856 = vunpack.c.l.b16 %v462
        %v857 = vunpack.c.h.b16 %v462
        %v858 = vunpack.c.l.b16 %v463
        %v859 = vunpack.c.l.b16 %v464
        %v860 = vunpack.c.h.b16 %v464
        %v861 = vunpack.c.l.b16 %v465
        %v862 = vunpack.c.h.b16 %v465
        %v863 = vunpack.c.l.b16 %v466
        %v864 = vunpack.c.h.b16 %v466
        %v865 = vunpack.c.l.b16 %v467
        %v866 = vunpack.c.l.b16 %v468
        %v867 = vunpack.c.h.b16 %v468
        %v868 = vunpack.c.l.b16 %v469
        %v869 = vunpack.c.h.b16 %v469
        %v870 = vunpack.c.l.b16 %v470
        %v871 = vunpack.c.h.b16 %v470
        %v872 = vunpack.c.l.b16 %v471
        %v873 = vunpack.c.l.b16 %v472
        %v874 = vunpack.c.h.b16 %v472
        %v875 = vunpack.c.l.b16 %v473
        %v876 = vunpack.c.h.b16 %v473
        %v877 = vunpack.c.l.b16 %v474
        %v878 = vunpack.c.h.b16 %v474
        %v879 = vunpack.c.l.b16 %v475
        %v880 = vunpack.c.l.b16 %v476
        %v881 = vunpack.c.h.b16 %v476
        %v882 = vunpack.c.l.b16 %v477
        %v883 = vunpack.c.h.b16 %v477
        %v884 = vunpack.c.l.b16 %v478
        %v885 = vunpack.c.h.b16 %v478
        %v886 = vunpack.c.l.b16 %v479
        %v887 = vunpack.c.l.b16 %v480
        %v888 = vunpack.c.h.b16 %v480
        %v889 = vunpack.c.l.b16 %v481
        %v890 = vunpack.c.h.b16 %v481
        %v891 = vunpack.c.l.b16 %v482
        %v892 = vunpack.c.h.b16 %v482
        %v893 = vunpack.c.l.b16 %v483
        %v894 = vpack.c.b16 %v789, %v782
        %v895 = vpack.c.b16 %v790, %v783
        %v896 = vpack.c.b16 %v791, %v784
        %v897 = vpack.c.b16 %v792, %v785
        %v898 = vpack.c.b16 %v793, %v786
        %v899 = vpack.c.b16 %v794, %v787
        %v900 = vpack.c.b16 %v795, %v788
        %v901 = vpack.c.b16 %v803, %v796
        %v902 = vpack.c.b16 %v804, %v797
        %v903 = vpack.c.b16 %v805, %v798
        %v904 = vpack.c.b16 %v806, %v799
        %v905 = vpack.c.b16 %v807, %v800
        %v906 = vpack.c.b16 %v808, %v801
        %v907 = vpack.c.b16 %v809, %v802
        %v908 = vpack.c.b16 %v817, %v810
        %v909 = vpack.c.b16 %v818, %v811
        %v910 = vpack.c.b16 %v819, %v812
        %v911 = vpack.c.b16 %v820, %v813
        %v912 = vpack.c.b16 %v821, %v814
        %v913 = vpack.c.b16 %v822, %v815
        %v914 = vpack.c.b16 %v823, %v816
        %v915 = vpack.c.b16 %v831, %v824
        %v916 = vpack.c.b16 %v832, %v825
        %v917 = vpack.c.b16 %v833, %v826
        %v918 = vpack.c.b16 %v834, %v827
        %v919 = vpack.c.b16 %v835, %v828
        %v920 = vpack.c.b16 %v836, %v829
        %v921 = vpack.c.b16 %v837, %v830
        %v922 = vpack.c.b16 %v845, %v838
        %v923 = vpack.c.b16 %v846, %v839
        %v924 = vpack.c.b16 %v847, %v840
        %v925 = vpack.c.b16 %v848, %v841
        %v926 = vpack.c.b16 %v849, %v842
        %v927 = vpack.c.b16 %v850, %v843
        %v928 = vpack.c.b16 %v851, %v844
        %v929 = vpack.c.b16 %v859, %v852
        %v930 = vpack.c.b16 %v860, %v853
        %v931 = vpack.c.b16 %v861, %v854
        %v932 = vpack.c.b16 %v862, %v855
        %v933 = vpack.c.b16 %v863, %v856
        %v934 = vpack.c.b16 %v864, %v857
        %v935 = vpack.c.b16 %v865, %v858
        %v936 = vpack.c.b16 %v873, %v866
        %v937 = vpack.c.b16 %v874, %v867
        %v938 = vpack.c.b16 %v875, %v868
        %v939 = vpack.c.b16 %v876, %v869
        %v940 = vpack.c.b16 %v877, %v870
        %v941 = vpack.c.b16 %v878, %v871
        %v942 = vpack.c.b16 %v879, %v872
        %v943 = vpack.c.b16 %v887, %v880
        %v944 = vpack.c.b16 %v888, %v881
        %v945 = vpack.c.b16 %v889, %v882
        %v946 = vpack.c.b16 %v890, %v883
        %v947 = vpack.c.b16 %v891, %v884
        %v948 = vpack.c.b16 %v892, %v885
        %v949 = vpack.c.b16 %v893, %v886
        %v1230 = vunpack.c.l.b16 %v484
        %v1231 = vunpack.c.h.b16 %v484
        %v1232 = vunpack.c.l.b16 %v485
        %v1233 = vunpack.c.h.b16 %v485
        %v1234 = vunpack.c.l.b16 %v486
        %v1235 = vunpack.c.h.b16 %v486
        %v1236 = vunpack.c.l.b16 %v487
        %v1237 = vunpack.c.h.b16 %v487
        %v1238 = vunpack.c.l.b16 %v488
        %v1239 = vunpack.c.h.b16 %v488
        %v1240 = vunpack.c.l.b16 %v489
        %v1241 = vunpack.c.h.b16 %v489
        %v1242 = vunpack.c.l.b16 %v490
        %v1243 = vunpack.c.h.b16 %v490
        %v1244 = vunpack.c.l.b16 %v491
        %v1245 = vunpack.c.h.b16 %v491
        %v1246 = vunpack.c.l.b16 %v492
        %v1247 = vunpack.c.h.b16 %v492
        %v1248 = vunpack.c.l.b16 %v493
        %v1249 = vunpack.c.h.b16 %v493
        %v1250 = vunpack.c.l.b16 %v494
        %v1251 = vunpack.c.h.b16 %v494
        %v1252 = vunpack.c.l.b16 %v495
        %v1253 = vunpack.c.h.b16 %v495
        %v1254 = vunpack.c.l.b16 %v496
        %v1255 = vunpack.c.h.b16 %v496
        %v1256 = vunpack.c.l.b16 %v497
        %v1257 = vunpack.c.h.b16 %v497
        %v1258 = vunpack.c.l.b16 %v498
        %v1259 = vunpack.c.h.b16 %v498
        %v1260 = vunpack.c.l.b16 %v499
        %v1261 = vunpack.c.h.b16 %v499
        %v1262 = vunpack.c.l.b16 %v500
        %v1263 = vunpack.c.h.b16 %v500
        %v1264 = vunpack.c.l.b16 %v501
        %v1265 = vunpack.c.h.b16 %v501
        %v1266 = vunpack.c.l.b16 %v502
        %v1267 = vunpack.c.h.b16 %v502
        %v1268 = vunpack.c.l.b16 %v503
        %v1269 = vunpack.c.h.b16 %v503
        %v1270 = vunpack.c.l.b16 %v504
        %v1271 = vunpack.c.h.b16 %v504
        %v1272 = vunpack.c.l.b16 %v505
        %v1273 = vunpack.c.h.b16 %v505
        %v1274 = vunpack.c.l.b16 %v506
        %v1275 = vunpack.c.h.b16 %v506
        %v1276 = vunpack.c.l.b16 %v507
        %v1277 = vunpack.c.h.b16 %v507
        %v1278 = vunpack.c.l.b16 %v508
        %v1279 = vunpack.c.h.b16 %v508
        %v1280 = vunpack.c.l.b16 %v509
        %v1281 = vunpack.c.h.b16 %v509
        %v1282 = vunpack.c.l.b16 %v510
        %v1283 = vunpack.c.h.b16 %v510
        %v1284 = vunpack.c.l.b16 %v511
        %v1285 = vunpack.c.h.b16 %v511
        %v1286 = vunpack.c.l.b16 %v512
        %v1287 = vunpack.c.h.b16 %v512
        %v1288 = vunpack.c.l.b16 %v513
        %v1289 = vunpack.c.h.b16 %v513
        %v1290 = vunpack.c.l.b16 %v514
        %v1291 = vunpack.c.h.b16 %v514
        %v1292 = vunpack.c.l.b16 %v515
        %v1293 = vunpack.c.h.b16 %v515
        %v1294 = vunpack.c.l.b16 %v516
        %v1295 = vunpack.c.h.b16 %v516
        %v1296 = vunpack.c.l.b16 %v517
        %v1297 = vunpack.c.h.b16 %v517
        %v1298 = vunpack.c.l.b16 %v518
        %v1299 = vunpack.c.h.b16 %v518
        %v1300 = vunpack.c.l.b16 %v519
        %v1301 = vunpack.c.h.b16 %v519
        %v1302 = vunpack.c.l.b16 %v520
        %v1303 = vunpack.c.h.b16 %v520
        %v1304 = vunpack.c.l.b16 %v521
        %v1305 = vunpack.c.h.b16 %v521
        %v1306 = vunpack.c.l.b16 %v522
        %v1307 = vunpack.c.h.b16 %v522
        %v1308 = vunpack.c.l.b16 %v523
        %v1309 = vunpack.c.h.b16 %v523
        %v1310 = vunpack.c.l.b16 %v524
        %v1311 = vunpack.c.h.b16 %v524
        %v1312 = vunpack.c.l.b16 %v525
        %v1313 = vunpack.c.h.b16 %v525
        %v1314 = vunpack.c.l.b16 %v526
        %v1315 = vunpack.c.h.b16 %v526
        %v1316 = vunpack.c.l.b16 %v527
        %v1317 = vunpack.c.h.b16 %v527
        %v1318 = vunpack.c.l.b16 %v528
        %v1319 = vunpack.c.h.b16 %v528
        %v1320 = vunpack.c.l.b16 %v529
        %v1321 = vunpack.c.h.b16 %v529
        %v1322 = vunpack.c.l.b16 %v530
        %v1323 = vunpack.c.h.b16 %v530
        %v1324 = vunpack.c.l.b16 %v531
        %v1325 = vunpack.c.h.b16 %v531
        %v1326 = vunpack.c.l.b16 %v532
        %v1327 = vunpack.c.h.b16 %v532
        %v1328 = vunpack.c.l.b16 %v533
        %v1329 = vunpack.c.h.b16 %v533
        %v1330 = vunpack.c.l.b16 %v534
        %v1331 = vunpack.c.h.b16 %v534
        %v1332 = vunpack.c.l.b16 %v535
        %v1333 = vunpack.c.h.b16 %v535
        %v1334 = vunpack.c.l.b16 %v536
        %v1335 = vunpack.c.h.b16 %v536
        %v1336 = vunpack.c.l.b16 %v537
        %v1337 = vunpack.c.h.b16 %v537
        %v1338 = vunpack.c.l.b16 %v538
        %v1339 = vunpack.c.h.b16 %v538
        %v1340 = vunpack.c.l.b16 %v539
        %v1341 = vunpack.c.h.b16 %v539
        %v1342 = vunpack.c.l.b16 %v540
        %v1343 = vunpack.c.h.b16 %v540
        %v1344 = vunpack.c.l.b16 %v541
        %v1345 = vunpack.c.h.b16 %v541
        %v1346 = vunpack.c.l.b16 %v542
        %v1347 = vunpack.c.h.b16 %v542
        %v1348 = vunpack.c.l.b16 %v543
        %v1349 = vunpack.c.h.b16 %v543
        %v1350 = vunpack.c.l.b16 %v544
        %v1351 = vunpack.c.h.b16 %v544
        %v1352 = vunpack.c.l.b16 %v545
        %v1353 = vunpack.c.h.b16 %v545
        %v1354 = vunpack.c.l.b16 %v546
        %v1355 = vunpack.c.h.b16 %v546
        %v1356 = vunpack.c.l.b16 %v547
        %v1357 = vunpack.c.h.b16 %v547
        %v1358 = vunpack.c.l.b16 %v548
        %v1359 = vunpack.c.h.b16 %v548
        %v1360 = vunpack.c.l.b16 %v549
        %v1361 = vunpack.c.h.b16 %v549
        %v1362 = vunpack.c.l.b16 %v550
        %v1363 = vunpack.c.h.b16 %v550
        %v1364 = vunpack.c.l.b16 %v551
        %v1365 = vunpack.c.h.b16 %v551
        %v1366 = vunpack.c.l.b16 %v552
        %v1367 = vunpack.c.h.b16 %v552
        %v1368 = vunpack.c.l.b16 %v553
        %v1369 = vunpack.c.h.b16 %v553
        %v1370 = vunpack.c.l.b16 %v554
        %v1371 = vunpack.c.h.b16 %v554
        %v1372 = vunpack.c.l.b16 %v555
        %v1373 = vunpack.c.h.b16 %v555
        %v1374 = vunpack.c.l.b16 %v556
        %v1375 = vunpack.c.h.b16 %v556
        %v1376 = vunpack.c.l.b16 %v557
        %v1377 = vunpack.c.h.b16 %v557
        %v1378 = vunpack.c.l.b16 %v558
        %v1379 = vunpack.c.h.b16 %v558
        %v1380 = vunpack.c.l.b16 %v559
        %v1381 = vunpack.c.h.b16 %v559
        %v1382 = vunpack.c.l.b16 %v560
        %v1383 = vunpack.c.h.b16 %v560
        %v1384 = vunpack.c.l.b16 %v561
        %v1385 = vunpack.c.h.b16 %v561
        %v1386 = vunpack.c.l.b16 %v562
        %v1387 = vunpack.c.h.b16 %v562
        %v1388 = vunpack.c.l.b16 %v563
        %v1389 = vunpack.c.h.b16 %v563
        %v1390 = vunpack.c.l.b16 %v564
        %v1391 = vunpack.c.h.b16 %v564
        %v1392 = vunpack.c.l.b16 %v565
        %v1393 = vunpack.c.h.b16 %v565
        %v1394 = vunpack.c.l.b16 %v566
        %v1395 = vunpack.c.h.b16 %v566
        %v1396 = vunpack.c.l.b16 %v567
        %v1397 = vunpack.c.h.b16 %v567
        %v1398 = vunpack.c.l.b16 %v568
        %v1399 = vunpack.c.h.b16 %v568
        %v1400 = vunpack.c.l.b16 %v569
        %v1401 = vunpack.c.h.b16 %v569
        %v1402 = vunpack.c.l.b16 %v570
        %v1403 = vunpack.c.h.b16 %v570
        %v1404 = vunpack.c.l.b16 %v571
        %v1405 = vunpack.c.h.b16 %v571
        %v1406 = vunpack.c.l.b16 %v572
        %v1407 = vunpack.c.h.b16 %v572
        %v1408 = vunpack.c.l.b16 %v573
        %v1409 = vunpack.c.h.b16 %v573
        %v1410 = vunpack.c.l.b16 %v574
        %v1411 = vunpack.c.h.b16 %v574
        %v1412 = vunpack.c.l.b16 %v575
        %v1413 = vunpack.c.h.b16 %v575
        %v1414 = vunpack.c.l.b16 %v576
        %v1415 = vunpack.c.h.b16 %v576
        %v1416 = vunpack.c.l.b16 %v577
        %v1417 = vunpack.c.h.b16 %v577
        %v1418 = vunpack.c.l.b16 %v578
        %v1419 = vunpack.c.h.b16 %v578
        %v1420 = vunpack.c.l.b16 %v579
        %v1421 = vunpack.c.h.b16 %v579
        %v1422 = vunpack.c.l.b16 %v580
        %v1423 = vunpack.c.h.b16 %v580
        %v1424 = vunpack.c.l.b16 %v581
        %v1425 = vunpack.c.h.b16 %v581
        %v1426 = vunpack.c.l.b16 %v582
        %v1427 = vunpack.c.h.b16 %v582
        %v1428 = vunpack.c.l.b16 %v583
        %v1429 = vunpack.c.h.b16 %v583
        %v1430 = vunpack.c.l.b16 %v584
        %v1431 = vunpack.c.h.b16 %v584
        %v1432 = vunpack.c.l.b16 %v585
        %v1433 = vunpack.c.h.b16 %v585
        %v1434 = vunpack.c.l.b16 %v586
        %v1435 = vunpack.c.h.b16 %v586
        %v1436 = vunpack.c.l.b16 %v587
        %v1437 = vunpack.c.h.b16 %v587
        %v1438 = vunpack.c.l.b16 %v588
        %v1439 = vunpack.c.h.b16 %v588
        %v1440 = vunpack.c.l.b16 %v589
        %v1441 = vunpack.c.h.b16 %v589
        %v1442 = vunpack.c.l.b16 %v590
        %v1443 = vunpack.c.h.b16 %v590
        %v1444 = vunpack.c.l.b16 %v591
        %v1445 = vunpack.c.h.b16 %v591
        %v1446 = vunpack.c.l.b16 %v592
        %v1447 = vunpack.c.h.b16 %v592
        %v1448 = vunpack.c.l.b16 %v593
        %v1449 = vunpack.c.h.b16 %v593
        %v1450 = vunpack.c.l.b16 %v594
        %v1451 = vunpack.c.h.b16 %v594
        %v1452 = vunpack.c.l.b16 %v595
        %v1453 = vunpack.c.h.b16 %v595
        %v1454 = vunpack.c.l.b16 %v596
        %v1455 = vunpack.c.h.b16 %v596
        %v1456 = vunpack.c.l.b16 %v597
        %v1457 = vunpack.c.h.b16 %v597
        %v1458 = vunpack.c.l.b16 %v598
        %v1459 = vunpack.c.h.b16 %v598
        %v1460 = vunpack.c.l.b16 %v599
        %v1461 = vunpack.c.h.b16 %v599
        %v1462 = vunpack.c.l.b16 %v600
        %v1463 = vunpack.c.h.b16 %v600
        %v1464 = vunpack.c.l.b16 %v601
        %v1465 = vunpack.c.h.b16 %v601
        %v1466 = vunpack.c.l.b16 %v602
        %v1467 = vunpack.c.h.b16 %v602
        %v1468 = vunpack.c.l.b16 %v603
        %v1469 = vunpack.c.h.b16 %v603
        %v1470 = vunpack.c.l.b16 %v604
        %v1471 = vunpack.c.h.b16 %v604
        %v1472 = vunpack.c.l.b16 %v605
        %v1473 = vunpack.c.h.b16 %v605
        %v1474 = vunpack.c.l.b16 %v606
        %v1475 = vunpack.c.h.b16 %v606
        %v1476 = vunpack.c.l.b16 %v607
        %v1477 = vunpack.c.h.b16 %v607
        %v1478 = vunpack.c.l.b16 %v608
        %v1479 = vunpack.c.h.b16 %v608
        %v1480 = vunpack.c.l.b16 %v609
        %v1481 = vunpack.c.h.b16 %v609
        %v1482 = vunpack.c.l.b16 %v610
        %v1483 = vunpack.c.h.b16 %v610
        %v1484 = vunpack.c.l.b16 %v611
        %v1485 = vunpack.c.h.b16 %v611
        %v1486 = vunpack.c.l.b16 %v612
        %v1487 = vunpack.c.h.b16 %v612
        %v1488 = vunpack.c.l.b16 %v613
        %v1489 = vunpack.c.h.b16 %v613
        %v1490 = vunpack.c.l.b16 %v614
        %v1491 = vunpack.c.h.b16 %v614
        %v1492 = vunpack.c.l.b16 %v615
        %v1493 = vunpack.c.h.b16 %v615
        %v1494 = vunpack.c.l.b16 %v616
        %v1495 = vunpack.c.h.b16 %v616
        %v1496 = vunpack.c.l.b16 %v617
        %v1497 = vunpack.c.h.b16 %v617
        %v1498 = vunpack.c.l.b16 %v618
        %v1499 = vunpack.c.h.b16 %v618
        %v1500 = vunpack.c.l.b16 %v619
        %v1501 = vunpack.c.h.b16 %v619
        %v1502 = vunpack.c.l.b16 %v620
        %v1503 = vunpack.c.h.b16 %v620
        %v1504 = vunpack.c.l.b16 %v621
        %v1505 = vunpack.c.h.b16 %v621
        %v1506 = vunpack.c.l.b16 %v622
        %v1507 = vunpack.c.h.b16 %v622
        %v1508 = vunpack.c.l.b16 %v623
        %v1509 = vunpack.c.h.b16 %v623
        %v1510 = vunpack.c.l.b16 %v624
        %v1511 = vunpack.c.h.b16 %v624
        %v1512 = vunpack.c.l.b16 %v625
        %v1513 = vunpack.c.h.b16 %v625
        %v1514 = vunpack.c.l.b16 %v626
        %v1515 = vunpack.c.h.b16 %v626
        %v1516 = vunpack.c.l.b16 %v627
        %v1517 = vunpack.c.h.b16 %v627
        %v1518 = vunpack.c.l.b16 %v628
        %v1519 = vunpack.c.h.b16 %v628
        %v1520 = vunpack.c.l.b16 %v629
        %v1521 = vunpack.c.h.b16 %v629
        %v1522 = vunpack.c.l.b16 %v630
        %v1523 = vunpack.c.h.b16 %v630
        %v1524 = vunpack.c.l.b16 %v631
        %v1525 = vunpack.c.h.b16 %v631
        %v1526 = vunpack.c.l.b16 %v632
        %v1527 = vunpack.c.h.b16 %v632
        %v1528 = vunpack.c.l.b16 %v633
        %v1529 = vunpack.c.h.b16 %v633
        %v1530 = vunpack.c.l.b16 %v634
        %v1531 = vunpack.c.h.b16 %v634
        %v1532 = vunpack.c.l.b16 %v635
        %v1533 = vunpack.c.h.b16 %v635
        %v1534 = vunpack.c.l.b16 %v636
        %v1535 = vunpack.c.h.b16 %v636
        %v1536 = vunpack.c.l.b16 %v637
        %v1537 = vunpack.c.h.b16 %v637
        %v1538 = vunpack.c.l.b16 %v638
        %v1539 = vunpack.c.h.b16 %v638
        %v1540 = vunpack.c.l.b16 %v639
        %v1541 = vunpack.c.h.b16 %v639
        %v1542 = vunpack.c.l.b16 %v640
        %v1543 = vunpack.c.h.b16 %v640
        %v1544 = vunpack.c.l.b16 %v641
        %v1545 = vunpack.c.h.b16 %v641
        %v1546 = vunpack.c.l.b16 %v642
        %v1547 = vunpack.c.h.b16 %v642
        %v1548 = vunpack.c.l.b16 %v643
        %v1549 = vunpack.c.h.b16 %v643
        %v1550 = vunpack.c.l.b16 %v644
        %v1551 = vunpack.c.h.b16 %v644
        %v1552 = vunpack.c.l.b16 %v645
        %v1553 = vunpack.c.h.b16 %v645
        %v1554 = vunpack.c.l.b16 %v646
        %v1555 = vunpack.c.h.b16 %v646
        %v1556 = vunpack.c.l.b16 %v647
        %v1557 = vunpack.c.h.b16 %v647
        %v1558 = vunpack.c.l.b16 %v648
        %v1559 = vunpack.c.h.b16 %v648
        %v1560 = vunpack.c.l.b16 %v649
        %v1561 = vunpack.c.h.b16 %v649
        %v1562 = vunpack.c.l.b16 %v650
        %v1563 = vunpack.c.h.b16 %v650
        %v1564 = vunpack.c.l.b16 %v651
        %v1565 = vunpack.c.h.b16 %v651
        %v1566 = vunpack.c.l.b16 %v652
        %v1567 = vunpack.c.h.b16 %v652
        %v1568 = vunpack.c.l.b16 %v653
        %v1569 = vunpack.c.h.b16 %v653
        %v1570 = vunpack.c.l.b16 %v654
        %v1571 = vunpack.c.h.b16 %v654
        %v1572 = vunpack.c.l.b16 %v655
        %v1573 = vunpack.c.h.b16 %v655
        %v1574 = vunpack.c.l.b16 %v656
        %v1575 = vunpack.c.h.b16 %v656
        %v1576 = vunpack.c.l.b16 %v657
        %v1577 = vunpack.c.h.b16 %v657
        %v1578 = vunpack.c.l.b16 %v658
        %v1579 = vunpack.c.h.b16 %v658
        %v1580 = vunpack.c.l.b16 %v659
        %v1581 = vunpack.c.h.b16 %v659
        %v1582 = vunpack.c.l.b16 %v660
        %v1583 = vunpack.c.h.b16 %v660
        %v1584 = vunpack.c.l.b16 %v661
        %v1585 = vunpack.c.h.b16 %v661
        %v1586 = vunpack.c.l.b16 %v662
        %v1587 = vunpack.c.h.b16 %v662
        %v1588 = vunpack.c.l.b16 %v663
        %v1589 = vunpack.c.h.b16 %v663
        %v1590 = vunpack.c.l.b16 %v664
        %v1591 = vunpack.c.h.b16 %v664
        %v1592 = vunpack.c.l.b16 %v665
        %v1593 = vunpack.c.h.b16 %v665
        %v1594 = vunpack.c.l.b16 %v666
        %v1595 = vunpack.c.h.b16 %v666
        %v1596 = vunpack.c.l.b16 %v667
        %v1597 = vunpack.c.h.b16 %v667
        %v1598 = vunpack.c.l.b16 %v668
        %v1599 = vunpack.c.h.b16 %v668
        %v1600 = vunpack.c.l.b16 %v669
        %v1601 = vunpack.c.h.b16 %v669
        %v1602 = vunpack.c.l.b16 %v670
        %v1603 = vunpack.c.h.b16 %v670
        %v1604 = vunpack.c.l.b16 %v671
        %v1605 = vunpack.c.h.b16 %v671
        %v1606 = vunpack.c.l.b16 %v672
        %v1607 = vunpack.c.h.b16 %v672
        %v1608 = vunpack.c.l.b16 %v673
        %v1609 = vunpack.c.h.b16 %v673
        %v1610 = vunpack.c.l.b16 %v674
        %v1611 = vunpack.c.h.b16 %v674
        %v1612 = vunpack.c.l.b16 %v675
        %v1613 = vunpack.c.h.b16 %v675
        %v1614 = vunpack.c.l.b16 %v676
        %v1615 = vunpack.c.h.b16 %v676
        %v1616 = vunpack.c.l.b16 %v677
        %v1617 = vunpack.c.h.b16 %v677
        %v1618 = vunpack.c.l.b16 %v678
        %v1619 = vunpack.c.h.b16 %v678
        %v1620 = vunpack.c.l.b16 %v679
        %v1621 = vunpack.c.h.b16 %v679
        %v1622 = vunpack.c.l.b16 %v680
        %v1623 = vunpack.c.h.b16 %v680
        %v1624 = vunpack.c.l.b16 %v681
        %v1625 = vunpack.c.h.b16 %v681
        %v1626 = vunpack.c.l.b16 %v682
        %v1627 = vunpack.c.h.b16 %v682
        %v1628 = vunpack.c.l.b16 %v683
        %v1629 = vunpack.c.h.b16 %v683
        %v1630 = vunpack.c.l.b16 %v684
        %v1631 = vunpack.c.h.b16 %v684
        %v1632 = vunpack.c.l.b16 %v685
        %v1633 = vunpack.c.h.b16 %v685
        %v1634 = vunpack.c.l.b16 %v686
        %v1635 = vunpack.c.h.b16 %v686
        %v1636 = vunpack.c.l.b16 %v687
        %v1637 = vunpack.c.h.b16 %v687
        %v1638 = vunpack.c.l.b16 %v688
        %v1639 = vunpack.c.h.b16 %v688
        %v1640 = vunpack.c.l.b16 %v689
        %v1641 = vunpack.c.h.b16 %v689
        %v1642 = vunpack.c.l.b16 %v690
        %v1643 = vunpack.c.h.b16 %v690
        %v1644 = vunpack.c.l.b16 %v691
        %v1645 = vunpack.c.h.b16 %v691
        %v1646 = vunpack.c.l.b16 %v692
        %v1647 = vunpack.c.h.b16 %v692
        %v1648 = vunpack.c.l.b16 %v693
        %v1649 = vunpack.c.h.b16 %v693
        %v1650 = vunpack.c.l.b16 %v694
        %v1651 = vunpack.c.h.b16 %v694
        %v1652 = vunpack.c.l.b16 %v695
        %v1653 = vunpack.c.h.b16 %v695
        %v1654 = vunpack.c.l.b16 %v696
        %v1655 = vunpack.c.h.b16 %v696
        %v1656 = vunpack.c.l.b16 %v697
        %v1657 = vunpack.c.h.b16 %v697
        %v1658 = vunpack.c.l.b16 %v698
        %v1659 = vunpack.c.h.b16 %v698
        %v1660 = vunpack.c.l.b16 %v699
        %v1661 = vunpack.c.h.b16 %v699
        %v1662 = vunpack.c.l.b16 %v700
        %v1663 = vunpack.c.h.b16 %v700
        %v1664 = vunpack.c.l.b16 %v701
        %v1665 = vunpack.c.h.b16 %v701
        %v1666 = vunpack.c.l.b16 %v702
        %v1667 = vunpack.c.h.b16 %v702
        %v1668 = vunpack.c.l.b16 %v703
        %v1669 = vunpack.c.h.b16 %v703
        %v1670 = vunpack.c.l.b16 %v704
        %v1671 = vunpack.c.h.b16 %v704
        %v1672 = vunpack.c.l.b16 %v705
        %v1673 = vunpack.c.h.b16 %v705
        %v1674 = vunpack.c.l.b16 %v706
        %v1675 = vunpack.c.h.b16 %v706
        %v1676 = vunpack.c.l.b16 %v707
        %v1677 = vunpack.c.h.b16 %v707
        %v1678 = vpack.c.b16 %v1234, %v1230
        %v1679 = vpack.c.b16 %v1235, %v1231
        %v1680 = vpack.c.b16 %v1236, %v1232
        %v1681 = vpack.c.b16 %v1237, %v1233
        %v1682 = vpack.c.b16 %v1242, %v1238
        %v1683 = vpack.c.b16 %v1243, %v1239
        %v1684 = vpack.c.b16 %v1244, %v1240
        %v1685 = vpack.c.b16 %v1245, %v1241
        %v1686 = vpack.c.b16 %v1250, %v1246
        %v1687 = vpack.c.b16 %v1251, %v1247
        %v1688 = vpack.c.b16 %v1252, %v1248
        %v1689 = vpack.c.b16 %v1253, %v1249
        %v1690 = vpack.c.b16 %v1258, %v1254
        %v1691 = vpack.c.b16 %v1259, %v1255
        %v1692 = vpack.c.b16 %v1260, %v1256
        %v1693 = vpack.c.b16 %v1261, %v1257
        %v1694 = vpack.c.b16 %v1266, %v1262
        %v1695 = vpack.c.b16 %v1267, %v1263
        %v1696 = vpack.c.b16 %v1268, %v1264
        %v1697 = vpack.c.b16 %v1269, %v1265
        %v1698 = vpack.c.b16 %v1274, %v1270
        %v1699 = vpack.c.b16 %v1275, %v1271
        %v1700 = vpack.c.b16 %v1276, %v1272
        %v1701 = vpack.c.b16 %v1277, %v1273
        %v1702 = vpack.c.b16 %v1282, %v1278
        %v1703 = vpack.c.b16 %v1283, %v1279
        %v1704 = vpack.c.b16 %v1284, %v1280
        %v1705 = vpack.c.b16 %v1285, %v1281
        %v1706 = vpack.c.b16 %v1290, %v1286
        %v1707 = vpack.c.b16 %v1291, %v1287
        %v1708 = vpack.c.b16 %v1292, %v1288
        %v1709 = vpack.c.b16 %v1293, %v1289
        %v1710 = vpack.c.b16 %v1298, %v1294
        %v1711 = vpack.c.b16 %v1299, %v1295
        %v1712 = vpack.c.b16 %v1300, %v1296
        %v1713 = vpack.c.b16 %v1301, %v1297
        %v1714 = vpack.c.b16 %v1306, %v1302
        %v1715 = vpack.c.b16 %v1307, %v1303
        %v1716 = vpack.c.b16 %v1308, %v1304
        %v1717 = vpack.c.b16 %v1309, %v1305
        %v1718 = vpack.c.b16 %v1314, %v1310
        %v1719 = vpack.c.b16 %v1315, %v1311
        %v1720 = vpack.c.b16 %v1316, %v1312
        %v1721 = vpack.c.b16 %v1317, %v1313
        %v1722 = vpack.c.b16 %v1322, %v1318
        %v1723 = vpack.c.b16 %v1323, %v1319
        %v1724 = vpack.c.b16 %v1324, %v1320
        %v1725 = vpack.c.b16 %v1325, %v1321
        %v1726 = vpack.c.b16 %v1330, %v1326
        %v1727 = vpack.c.b16 %v1331, %v1327
        %v1728 = vpack.c.b16 %v1332, %v1328
        %v1729 = vpack.c.b16 %v1333, %v1329
        %v1730 = vpack.c.b16 %v1338, %v1334
        %v1731 = vpack.c.b16 %v1339, %v1335
        %v1732 = vpack.c.b16 %v1340, %v1336
        %v1733 = vpack.c.b16 %v1341, %v1337
        %v1734 = vpack.c.b16 %v1346, %v1342
        %v1735 = vpack.c.b16 %v1347, %v1343
        %v1736 = vpack.c.b16 %v1348, %v1344
        %v1737 = vpack.c.b16 %v1349, %v1345
        %v1738 = vpack.c.b16 %v1354, %v1350
        %v1739 = vpack.c.b16 %v1355, %v1351
        %v1740 = vpack.c.b16 %v1356, %v1352
        %v1741 = vpack.c.b16 %v1357, %v1353
        %v1742 = vpack.c.b16 %v1362, %v1358
        %v1743 = vpack.c.b16 %v1363, %v1359
        %v1744 = vpack.c.b16 %v1364, %v1360
        %v1745 = vpack.c.b16 %v1365, %v1361
        %v1746 = vpack.c.b16 %v1370, %v1366
        %v1747 = vpack.c.b16 %v1371, %v1367
        %v1748 = vpack.c.b16 %v1372, %v1368
        %v1749 = vpack.c.b16 %v1373, %v1369
        %v1750 = vpack.c.b16 %v1378, %v1374
        %v1751 = vpack.c.b16 %v1379, %v1375
        %v1752 = vpack.c.b16 %v1380, %v1376
        %v1753 = vpack.c.b16 %v1381, %v1377
        %v1754 = vpack.c.b16 %v1386, %v1382
        %v1755 = vpack.c.b16 %v1387, %v1383
        %v1756 = vpack.c.b16 %v1388, %v1384
        %v1757 = vpack.c.b16 %v1389, %v1385
        %v1758 = vpack.c.b16 %v1394, %v1390
        %v1759 = vpack.c.b16 %v1395, %v1391
        %v1760 = vpack.c.b16 %v1396, %v1392
        %v1761 = vpack.c.b16 %v1397, %v1393
        %v1762 = vpack.c.b16 %v1402, %v1398
        %v1763 = vpack.c.b16 %v1403, %v1399
        %v1764 = vpack.c.b16 %v1404, %v1400
        %v1765 = vpack.c.b16 %v1405, %v1401
        %v1766 = vpack.c.b16 %v1410, %v1406
        %v1767 = vpack.c.b16 %v1411, %v1407
        %v1768 = vpack.c.b16 %v1412, %v1408
        %v1769 = vpack.c.b16 %v1413, %v1409
        %v1770 = vpack.c.b16 %v1418, %v1414
        %v1771 = vpack.c.b16 %v1419, %v1415
        %v1772 = vpack.c.b16 %v1420, %v1416
        %v1773 = vpack.c.b16 %v1421, %v1417
        %v1774 = vpack.c.b16 %v1426, %v1422
        %v1775 = vpack.c.b16 %v1427, %v1423
        %v1776 = vpack.c.b16 %v1428, %v1424
        %v1777 = vpack.c.b16 %v1429, %v1425
        %v1778 = vpack.c.b16 %v1434, %v1430
        %v1779 = vpack.c.b16 %v1435, %v1431
        %v1780 = vpack.c.b16 %v1436, %v1432
        %v1781 = vpack.c.b16 %v1437, %v1433
        %v1782 = vpack.c.b16 %v1442, %v1438
        %v1783 = vpack.c.b16 %v1443, %v1439
        %v1784 = vpack.c.b16 %v1444, %v1440
        %v1785 = vpack.c.b16 %v1445, %v1441
        %v1786 = vpack.c.b16 %v1450, %v1446
        %v1787 = vpack.c.b16 %v1451, %v1447
        %v1788 = vpack.c.b16 %v1452, %v1448
        %v1789 = vpack.c.b16 %v1453, %v1449
        %v1790 = vpack.c.b16 %v1458, %v1454
        %v1791 = vpack.c.b16 %v1459, %v1455
        %v1792 = vpack.c.b16 %v1460, %v1456
        %v1793 = vpack.c.b16 %v1461, %v1457
        %v1794 = vpack.c.b16 %v1466, %v1462
        %v1795 = vpack.c.b16 %v1467, %v1463
        %v1796 = vpack.c.b16 %v1468, %v1464
        %v1797 = vpack.c.b16 %v1469, %v1465
        %v1798 = vpack.c.b16 %v1474, %v1470
        %v1799 = vpack.c.b16 %v1475, %v1471
        %v1800 = vpack.c.b16 %v1476, %v1472
        %v1801 = vpack.c.b16 %v1477, %v1473
        %v1802 = vpack.c.b16 %v1482, %v1478
        %v1803 = vpack.c.b16 %v1483, %v1479
        %v1804 = vpack.c.b16 %v1484, %v1480
        %v1805 = vpack.c.b16 %v1485, %v1481
        %v1806 = vpack.c.b16 %v1490, %v1486
        %v1807 = vpack.c.b16 %v1491, %v1487
        %v1808 = vpack.c.b16 %v1492, %v1488
        %v1809 = vpack.c.b16 %v1493, %v1489
        %v1810 = vpack.c.b16 %v1498, %v1494
        %v1811 = vpack.c.b16 %v1499, %v1495
        %v1812 = vpack.c.b16 %v1500, %v1496
        %v1813 = vpack.c.b16 %v1501, %v1497
        %v1814 = vpack.c.b16 %v1506, %v1502
        %v1815 = vpack.c.b16 %v1507, %v1503
        %v1816 = vpack.c.b16 %v1508, %v1504
        %v1817 = vpack.c.b16 %v1509, %v1505
        %v1818 = vpack.c.b16 %v1514, %v1510
        %v1819 = vpack.c.b16 %v1515, %v1511
        %v1820 = vpack.c.b16 %v1516, %v1512
        %v1821 = vpack.c.b16 %v1517, %v1513
        %v1822 = vpack.c.b16 %v1522, %v1518
        %v1823 = vpack.c.b16 %v1523, %v1519
        %v1824 = vpack.c.b16 %v1524, %v1520
        %v1825 = vpack.c.b16 %v1525, %v1521
        %v1826 = vpack.c.b16 %v1530, %v1526
        %v1827 = vpack.c.b16 %v1531, %v1527
        %v1828 = vpack.c.b16 %v1532, %v1528
        %v1829 = vpack.c.b16 %v1533, %v1529
        %v1830 = vpack.c.b16 %v1538, %v1534
        %v1831 = vpack.c.b16 %v1539, %v1535
        %v1832 = vpack.c.b16 %v1540, %v1536
        %v1833 = vpack.c.b16 %v1541, %v1537
        %v1834 = vpack.c.b16 %v1546, %v1542
        %v1835 = vpack.c.b16 %v1547, %v1543
        %v1836 = vpack.c.b16 %v1548, %v1544
        %v1837 = vpack.c.b16 %v1549, %v1545
        %v1838 = vpack.c.b16 %v1554, %v1550
        %v1839 = vpack.c.b16 %v1555, %v1551
        %v1840 = vpack.c.b16 %v1556, %v1552
        %v1841 = vpack.c.b16 %v1557, %v1553
        %v1842 = vpack.c.b16 %v1562, %v1558
        %v1843 = vpack.c.b16 %v1563, %v1559
        %v1844 = vpack.c.b16 %v1564, %v1560
        %v1845 = vpack.c.b16 %v1565, %v1561
        %v1846 = vpack.c.b16 %v1570, %v1566
        %v1847 = vpack.c.b16 %v1571, %v1567
        %v1848 = vpack.c.b16 %v1572, %v1568
        %v1849 = vpack.c.b16 %v1573, %v1569
        %v1850 = vpack.c.b16 %v1578, %v1574
        %v1851 = vpack.c.b16 %v1579, %v1575
        %v1852 = vpack.c.b16 %v1580, %v1576
        %v1853 = vpack.c.b16 %v1581, %v1577
        %v1854 = vpack.c.b16 %v1586, %v1582
        %v1855 = vpack.c.b16 %v1587, %v1583
        %v1856 = vpack.c.b16 %v1588, %v1584
        %v1857 = vpack.c.b16 %v1589, %v1585
        %v1858 = vpack.c.b16 %v1594, %v1590
        %v1859 = vpack.c.b16 %v1595, %v1591
        %v1860 = vpack.c.b16 %v1596, %v1592
        %v1861 = vpack.c.b16 %v1597, %v1593
        %v1862 = vpack.c.b16 %v1602, %v1598
        %v1863 = vpack.c.b16 %v1603, %v1599
        %v1864 = vpack.c.b16 %v1604, %v1600
        %v1865 = vpack.c.b16 %v1605, %v1601
        %v1866 = vpack.c.b16 %v1610, %v1606
        %v1867 = vpack.c.b16 %v1611, %v1607
        %v1868 = vpack.c.b16 %v1612, %v1608
        %v1869 = vpack.c.b16 %v1613, %v1609
        %v1870 = vpack.c.b16 %v1618, %v1614
        %v1871 = vpack.c.b16 %v1619, %v1615
        %v1872 = vpack.c.b16 %v1620, %v1616
        %v1873 = vpack.c.b16 %v1621, %v1617
        %v1874 = vpack.c.b16 %v1626, %v1622
        %v1875 = vpack.c.b16 %v1627, %v1623
        %v1876 = vpack.c.b16 %v1628, %v1624
        %v1877 = vpack.c.b16 %v1629, %v1625
        %v1878 = vpack.c.b16 %v1634, %v1630
        %v1879 = vpack.c.b16 %v1635, %v1631
        %v1880 = vpack.c.b16 %v1636, %v1632
        %v1881 = vpack.c.b16 %v1637, %v1633
        %v1882 = vpack.c.b16 %v1642, %v1638
        %v1883 = vpack.c.b16 %v1643, %v1639
        %v1884 = vpack.c.b16 %v1644, %v1640
        %v1885 = vpack.c.b16 %v1645, %v1641
        %v1886 = vpack.c.b16 %v1650, %v1646
        %v1887 = vpack.c.b16 %v1651, %v1647
        %v1888 = vpack.c.b16 %v1652, %v1648
        %v1889 = vpack.c.b16 %v1653, %v1649
        %v1890 = vpack.c.b16 %v1658, %v1654
        %v1891 = vpack.c.b16 %v1659, %v1655
        %v1892 = vpack.c.b16 %v1660, %v1656
        %v1893 = vpack.c.b16 %v1661, %v1657
        %v1894 = vpack.c.b16 %v1666, %v1662
        %v1895 = vpack.c.b16 %v1667, %v1663
        %v1896 = vpack.c.b16 %v1668, %v1664
        %v1897 = vpack.c.b16 %v1669, %v1665
        %v1898 = vpack.c.b16 %v1674, %v1670
        %v1899 = vpack.c.b16 %v1675, %v1671
        %v1900 = vpack.c.b16 %v1676, %v1672
        %v1901 = vpack.c.b16 %v1677, %v1673
        %2126 = vmatpush.bf16.msra.mxu0 %v1706
        %2127 = vmatpush.bf16.msra.mxu0 %v1702
        %2128 = vmatpush.bf16.msra.mxu0 %v1698
        %2129 = vmatpush.bf16.msra.mxu0 %v1694
        %2130 = vmatpush.bf16.msra.mxu0 %v1690
        %2131 = vmatpush.bf16.msra.mxu0 %v1686
        %2132 = vmatpush.bf16.msra.mxu0 %v1682
        %2133 = vmatpush.bf16.msra.mxu0 %v1678
        %2134 = vmatmul.bf16.gmra.mxu0 %v894
        %v2135 = vpop.f32.mrf.mxu0
        %v2136 = vadd.f32 %v710, %v2135
        %v2137 = vpop.f32.mrf.mxu0
        %v2138 = vadd.f32 %v710, %v2137
        %2139 = vmatmul.bf16.gmra.mxu0 %v901
        %v2140 = vpop.f32.mrf.mxu0
        %v2141 = vadd.f32 %v710, %v2140
        %v2142 = vpop.f32.mrf.mxu0
        %v2143 = vadd.f32 %v710, %v2142
        %2144 = vmatmul.bf16.gmra.mxu0 %v908
        %v2145 = vpop.f32.mrf.mxu0
        %v2146 = vadd.f32 %v710, %v2145
        %v2147 = vpop.f32.mrf.mxu0
        %v2148 = vadd.f32 %v710, %v2147
        %2149 = vmatmul.bf16.gmra.mxu0 %v915
        %v2150 = vpop.f32.mrf.mxu0
        %v2151 = vadd.f32 %v710, %v2150
        %v2152 = vpop.f32.mrf.mxu0
        %v2153 = vadd.f32 %v710, %v2152
        %2154 = vmatmul.bf16.gmra.mxu0 %v922
        %v2155 = vpop.f32.mrf.mxu0
        %v2156 = vadd.f32 %v710, %v2155
        %v2157 = vpop.f32.mrf.mxu0
        %v2158 = vadd.f32 %v710, %v2157
        %2159 = vmatmul.bf16.gmra.mxu0 %v929
        %v2160 = vpop.f32.mrf.mxu0
        %v2161 = vadd.f32 %v710, %v2160
        %v2162 = vpop.f32.mrf.mxu0
        %v2163 = vadd.f32 %v710, %v2162
        %2164 = vmatmul.bf16.gmra.mxu0 %v936
        %v2165 = vpop.f32.mrf.mxu0
        %v2166 = vadd.f32 %v710, %v2165
        %v2167 = vpop.f32.mrf.mxu0
        %v2168 = vadd.f32 %v710, %v2167
        %2169 = vmatmul.bf16.gmra.mxu0 %v943
        %v2170 = vpop.f32.mrf.mxu0
        %v2171 = vadd.f32 %v710, %v2170
        %v2172 = vpop.f32.mrf.mxu0
        %v2173 = vadd.f32 %v710, %v2172
        %2174 = vdwg.mxu0
        %2175 = vmatpush.bf16.msra.mxu0 %v1738
        %2176 = vmatpush.bf16.msra.mxu0 %v1734
        %2177 = vmatpush.bf16.msra.mxu0 %v1730
        %2178 = vmatpush.bf16.msra.mxu0 %v1726
        %2179 = vmatpush.bf16.msra.mxu0 %v1722
        %2180 = vmatpush.bf16.msra.mxu0 %v1718
        %2181 = vmatpush.bf16.msra.mxu0 %v1714
        %2182 = vmatpush.bf16.msra.mxu0 %v1710
        %2183 = vmatmul.bf16.gmra.mxu0 %v895
        %v2184 = vpop.f32.mrf.mxu0
        %v2185 = vadd.f32 %v2136, %v2184
        %v2186 = vpop.f32.mrf.mxu0
        %v2187 = vadd.f32 %v2138, %v2186
        %2188 = vmatmul.bf16.gmra.mxu0 %v902
        %v2189 = vpop.f32.mrf.mxu0
        %v2190 = vadd.f32 %v2141, %v2189
        %v2191 = vpop.f32.mrf.mxu0
        %v2192 = vadd.f32 %v2143, %v2191
        %2193 = vmatmul.bf16.gmra.mxu0 %v909
        %v2194 = vpop.f32.mrf.mxu0
        %v2195 = vadd.f32 %v2146, %v2194
        %v2196 = vpop.f32.mrf.mxu0
        %v2197 = vadd.f32 %v2148, %v2196
        %2198 = vmatmul.bf16.gmra.mxu0 %v916
        %v2199 = vpop.f32.mrf.mxu0
        %v2200 = vadd.f32 %v2151, %v2199
        %v2201 = vpop.f32.mrf.mxu0
        %v2202 = vadd.f32 %v2153, %v2201
        %2203 = vmatmul.bf16.gmra.mxu0 %v923
        %v2204 = vpop.f32.mrf.mxu0
        %v2205 = vadd.f32 %v2156, %v2204
        %v2206 = vpop.f32.mrf.mxu0
        %v2207 = vadd.f32 %v2158, %v2206
        %2208 = vmatmul.bf16.gmra.mxu0 %v930
        %v2209 = vpop.f32.mrf.mxu0
        %v2210 = vadd.f32 %v2161, %v2209
        %v2211 = vpop.f32.mrf.mxu0
        %v2212 = vadd.f32 %v2163, %v2211
        %2213 = vmatmul.bf16.gmra.mxu0 %v937
        %v2214 = vpop.f32.mrf.mxu0
        %v2215 = vadd.f32 %v2166, %v2214
        %v2216 = vpop.f32.mrf.mxu0
        %v2217 = vadd.f32 %v2168, %v2216
        %2218 = vmatmul.bf16.gmra.mxu0 %v944
        %v2219 = vpop.f32.mrf.mxu0
        %v2220 = vadd.f32 %v2171, %v2219
        %v2221 = vpop.f32.mrf.mxu0
        %v2222 = vadd.f32 %v2173, %v2221
        %2223 = vdwg.mxu0
        %2224 = vmatpush.bf16.msra.mxu0 %v1770
        %2225 = vmatpush.bf16.msra.mxu0 %v1766
        %2226 = vmatpush.bf16.msra.mxu0 %v1762
        %2227 = vmatpush.bf16.msra.mxu0 %v1758
        %2228 = vmatpush.bf16.msra.mxu0 %v1754
        %2229 = vmatpush.bf16.msra.mxu0 %v1750
        %2230 = vmatpush.bf16.msra.mxu0 %v1746
        %2231 = vmatpush.bf16.msra.mxu0 %v1742
        %2232 = vmatmul.bf16.gmra.mxu0 %v896
        %v2233 = vpop.f32.mrf.mxu0
        %v2234 = vadd.f32 %v2185, %v2233
        %v2235 = vpop.f32.mrf.mxu0
        %v2236 = vadd.f32 %v2187, %v2235
        %2237 = vmatmul.bf16.gmra.mxu0 %v903
        %v2238 = vpop.f32.mrf.mxu0
        %v2239 = vadd.f32 %v2190, %v2238
        %v2240 = vpop.f32.mrf.mxu0
        %v2241 = vadd.f32 %v2192, %v2240
        %2242 = vmatmul.bf16.gmra.mxu0 %v910
        %v2243 = vpop.f32.mrf.mxu0
        %v2244 = vadd.f32 %v2195, %v2243
        %v2245 = vpop.f32.mrf.mxu0
        %v2246 = vadd.f32 %v2197, %v2245
        %2247 = vmatmul.bf16.gmra.mxu0 %v917
        %v2248 = vpop.f32.mrf.mxu0
        %v2249 = vadd.f32 %v2200, %v2248
        %v2250 = vpop.f32.mrf.mxu0
        %v2251 = vadd.f32 %v2202, %v2250
        %2252 = vmatmul.bf16.gmra.mxu0 %v924
        %v2253 = vpop.f32.mrf.mxu0
        %v2254 = vadd.f32 %v2205, %v2253
        %v2255 = vpop.f32.mrf.mxu0
        %v2256 = vadd.f32 %v2207, %v2255
        %2257 = vmatmul.bf16.gmra.mxu0 %v931
        %v2258 = vpop.f32.mrf.mxu0
        %v2259 = vadd.f32 %v2210, %v2258
        %v2260 = vpop.f32.mrf.mxu0
        %v2261 = vadd.f32 %v2212, %v2260
        %2262 = vmatmul.bf16.gmra.mxu0 %v938
        %v2263 = vpop.f32.mrf.mxu0
        %v2264 = vadd.f32 %v2215, %v2263
        %v2265 = vpop.f32.mrf.mxu0
        %v2266 = vadd.f32 %v2217, %v2265
        %2267 = vmatmul.bf16.gmra.mxu0 %v945
        %v2268 = vpop.f32.mrf.mxu0
        %v2269 = vadd.f32 %v2220, %v2268
        %v2270 = vpop.f32.mrf.mxu0
        %v2271 = vadd.f32 %v2222, %v2270
        %2272 = vdwg.mxu0
        %2273 = vmatpush.bf16.msra.mxu0 %v1802
        %2274 = vmatpush.bf16.msra.mxu0 %v1798
        %2275 = vmatpush.bf16.msra.mxu0 %v1794
        %2276 = vmatpush.bf16.msra.mxu0 %v1790
        %2277 = vmatpush.bf16.msra.mxu0 %v1786
        %2278 = vmatpush.bf16.msra.mxu0 %v1782
        %2279 = vmatpush.bf16.msra.mxu0 %v1778
        %2280 = vmatpush.bf16.msra.mxu0 %v1774
        %2281 = vmatmul.bf16.gmra.mxu0 %v897
        %v2282 = vpop.f32.mrf.mxu0
        %v2283 = vadd.f32 %v2234, %v2282
        %v2284 = vpop.f32.mrf.mxu0
        %v2285 = vadd.f32 %v2236, %v2284
        %2286 = vmatmul.bf16.gmra.mxu0 %v904
        %v2287 = vpop.f32.mrf.mxu0
        %v2288 = vadd.f32 %v2239, %v2287
        %v2289 = vpop.f32.mrf.mxu0
        %v2290 = vadd.f32 %v2241, %v2289
        %2291 = vmatmul.bf16.gmra.mxu0 %v911
        %v2292 = vpop.f32.mrf.mxu0
        %v2293 = vadd.f32 %v2244, %v2292
        %v2294 = vpop.f32.mrf.mxu0
        %v2295 = vadd.f32 %v2246, %v2294
        %2296 = vmatmul.bf16.gmra.mxu0 %v918
        %v2297 = vpop.f32.mrf.mxu0
        %v2298 = vadd.f32 %v2249, %v2297
        %v2299 = vpop.f32.mrf.mxu0
        %v2300 = vadd.f32 %v2251, %v2299
        %2301 = vmatmul.bf16.gmra.mxu0 %v925
        %v2302 = vpop.f32.mrf.mxu0
        %v2303 = vadd.f32 %v2254, %v2302
        %v2304 = vpop.f32.mrf.mxu0
        %v2305 = vadd.f32 %v2256, %v2304
        %2306 = vmatmul.bf16.gmra.mxu0 %v932
        %v2307 = vpop.f32.mrf.mxu0
        %v2308 = vadd.f32 %v2259, %v2307
        %v2309 = vpop.f32.mrf.mxu0
        %v2310 = vadd.f32 %v2261, %v2309
        %2311 = vmatmul.bf16.gmra.mxu0 %v939
        %v2312 = vpop.f32.mrf.mxu0
        %v2313 = vadd.f32 %v2264, %v2312
        %v2314 = vpop.f32.mrf.mxu0
        %v2315 = vadd.f32 %v2266, %v2314
        %2316 = vmatmul.bf16.gmra.mxu0 %v946
        %v2317 = vpop.f32.mrf.mxu0
        %v2318 = vadd.f32 %v2269, %v2317
        %v2319 = vpop.f32.mrf.mxu0
        %v2320 = vadd.f32 %v2271, %v2319
        %2321 = vdwg.mxu0
        %2322 = vmatpush.bf16.msra.mxu0 %v1834
        %2323 = vmatpush.bf16.msra.mxu0 %v1830
        %2324 = vmatpush.bf16.msra.mxu0 %v1826
        %2325 = vmatpush.bf16.msra.mxu0 %v1822
        %2326 = vmatpush.bf16.msra.mxu0 %v1818
        %2327 = vmatpush.bf16.msra.mxu0 %v1814
        %2328 = vmatpush.bf16.msra.mxu0 %v1810
        %2329 = vmatpush.bf16.msra.mxu0 %v1806
        %2330 = vmatmul.bf16.gmra.mxu0 %v898
        %v2331 = vpop.f32.mrf.mxu0
        %v2332 = vadd.f32 %v2283, %v2331
        %v2333 = vpop.f32.mrf.mxu0
        %v2334 = vadd.f32 %v2285, %v2333
        %2335 = vmatmul.bf16.gmra.mxu0 %v905
        %v2336 = vpop.f32.mrf.mxu0
        %v2337 = vadd.f32 %v2288, %v2336
        %v2338 = vpop.f32.mrf.mxu0
        %v2339 = vadd.f32 %v2290, %v2338
        %2340 = vmatmul.bf16.gmra.mxu0 %v912
        %v2341 = vpop.f32.mrf.mxu0
        %v2342 = vadd.f32 %v2293, %v2341
        %v2343 = vpop.f32.mrf.mxu0
        %v2344 = vadd.f32 %v2295, %v2343
        %2345 = vmatmul.bf16.gmra.mxu0 %v919
        %v2346 = vpop.f32.mrf.mxu0
        %v2347 = vadd.f32 %v2298, %v2346
        %v2348 = vpop.f32.mrf.mxu0
        %v2349 = vadd.f32 %v2300, %v2348
        %2350 = vmatmul.bf16.gmra.mxu0 %v926
        %v2351 = vpop.f32.mrf.mxu0
        %v2352 = vadd.f32 %v2303, %v2351
        %v2353 = vpop.f32.mrf.mxu0
        %v2354 = vadd.f32 %v2305, %v2353
        %2355 = vmatmul.bf16.gmra.mxu0 %v933
        %v2356 = vpop.f32.mrf.mxu0
        %v2357 = vadd.f32 %v2308, %v2356
        %v2358 = vpop.f32.mrf.mxu0
        %v2359 = vadd.f32 %v2310, %v2358
        %2360 = vmatmul.bf16.gmra.mxu0 %v940
        %v2361 = vpop.f32.mrf.mxu0
        %v2362 = vadd.f32 %v2313, %v2361
        %v2363 = vpop.f32.mrf.mxu0
        %v2364 = vadd.f32 %v2315, %v2363
        %2365 = vmatmul.bf16.gmra.mxu0 %v947
        %v2366 = vpop.f32.mrf.mxu0
        %v2367 = vadd.f32 %v2318, %v2366
        %v2368 = vpop.f32.mrf.mxu0
        %v2369 = vadd.f32 %v2320, %v2368
        %2370 = vdwg.mxu0
        %2371 = vmatpush.bf16.msra.mxu0 %v1866
        %2372 = vmatpush.bf16.msra.mxu0 %v1862
        %2373 = vmatpush.bf16.msra.mxu0 %v1858
        %2374 = vmatpush.bf16.msra.mxu0 %v1854
        %2375 = vmatpush.bf16.msra.mxu0 %v1850
        %2376 = vmatpush.bf16.msra.mxu0 %v1846
        %2377 = vmatpush.bf16.msra.mxu0 %v1842
        %2378 = vmatpush.bf16.msra.mxu0 %v1838
        %2379 = vmatmul.bf16.gmra.mxu0 %v899
        %v2380 = vpop.f32.mrf.mxu0
        %v2381 = vadd.f32 %v2332, %v2380
        %v2382 = vpop.f32.mrf.mxu0
        %v2383 = vadd.f32 %v2334, %v2382
        %2384 = vmatmul.bf16.gmra.mxu0 %v906
        %v2385 = vpop.f32.mrf.mxu0
        %v2386 = vadd.f32 %v2337, %v2385
        %v2387 = vpop.f32.mrf.mxu0
        %v2388 = vadd.f32 %v2339, %v2387
        %2389 = vmatmul.bf16.gmra.mxu0 %v913
        %v2390 = vpop.f32.mrf.mxu0
        %v2391 = vadd.f32 %v2342, %v2390
        %v2392 = vpop.f32.mrf.mxu0
        %v2393 = vadd.f32 %v2344, %v2392
        %2394 = vmatmul.bf16.gmra.mxu0 %v920
        %v2395 = vpop.f32.mrf.mxu0
        %v2396 = vadd.f32 %v2347, %v2395
        %v2397 = vpop.f32.mrf.mxu0
        %v2398 = vadd.f32 %v2349, %v2397
        %2399 = vmatmul.bf16.gmra.mxu0 %v927
        %v2400 = vpop.f32.mrf.mxu0
        %v2401 = vadd.f32 %v2352, %v2400
        %v2402 = vpop.f32.mrf.mxu0
        %v2403 = vadd.f32 %v2354, %v2402
        %2404 = vmatmul.bf16.gmra.mxu0 %v934
        %v2405 = vpop.f32.mrf.mxu0
        %v2406 = vadd.f32 %v2357, %v2405
        %v2407 = vpop.f32.mrf.mxu0
        %v2408 = vadd.f32 %v2359, %v2407
        %2409 = vmatmul.bf16.gmra.mxu0 %v941
        %v2410 = vpop.f32.mrf.mxu0
        %v2411 = vadd.f32 %v2362, %v2410
        %v2412 = vpop.f32.mrf.mxu0
        %v2413 = vadd.f32 %v2364, %v2412
        %2414 = vmatmul.bf16.gmra.mxu0 %v948
        %v2415 = vpop.f32.mrf.mxu0
        %v2416 = vadd.f32 %v2367, %v2415
        %v2417 = vpop.f32.mrf.mxu0
        %v2418 = vadd.f32 %v2369, %v2417
        %2419 = vdwg.mxu0
        %2420 = vmatpush.bf16.msra.mxu0 %v1898
        %2421 = vmatpush.bf16.msra.mxu0 %v1894
        %2422 = vmatpush.bf16.msra.mxu0 %v1890
        %2423 = vmatpush.bf16.msra.mxu0 %v1886
        %2424 = vmatpush.bf16.msra.mxu0 %v1882
        %2425 = vmatpush.bf16.msra.mxu0 %v1878
        %2426 = vmatpush.bf16.msra.mxu0 %v1874
        %2427 = vmatpush.bf16.msra.mxu0 %v1870
        %2428 = vmatmul.bf16.gmra.mxu0 %v900
        %v2429 = vpop.f32.mrf.mxu0
        %v2430 = vadd.f32 %v2381, %v2429
        %v2431 = vpop.f32.mrf.mxu0
        %v2432 = vadd.f32 %v2383, %v2431
        %2433 = vmatmul.bf16.gmra.mxu0 %v907
        %v2434 = vpop.f32.mrf.mxu0
        %v2435 = vadd.f32 %v2386, %v2434
        %v2436 = vpop.f32.mrf.mxu0
        %v2437 = vadd.f32 %v2388, %v2436
        %2438 = vmatmul.bf16.gmra.mxu0 %v914
        %v2439 = vpop.f32.mrf.mxu0
        %v2440 = vadd.f32 %v2391, %v2439
        %v2441 = vpop.f32.mrf.mxu0
        %v2442 = vadd.f32 %v2393, %v2441
        %2443 = vmatmul.bf16.gmra.mxu0 %v921
        %v2444 = vpop.f32.mrf.mxu0
        %v2445 = vadd.f32 %v2396, %v2444
        %v2446 = vpop.f32.mrf.mxu0
        %v2447 = vadd.f32 %v2398, %v2446
        %2448 = vmatmul.bf16.gmra.mxu0 %v928
        %v2449 = vpop.f32.mrf.mxu0
        %v2450 = vadd.f32 %v2401, %v2449
        %v2451 = vpop.f32.mrf.mxu0
        %v2452 = vadd.f32 %v2403, %v2451
        %2453 = vmatmul.bf16.gmra.mxu0 %v935
        %v2454 = vpop.f32.mrf.mxu0
        %v2455 = vadd.f32 %v2406, %v2454
        %v2456 = vpop.f32.mrf.mxu0
        %v2457 = vadd.f32 %v2408, %v2456
        %2458 = vmatmul.bf16.gmra.mxu0 %v942
        %v2459 = vpop.f32.mrf.mxu0
        %v2460 = vadd.f32 %v2411, %v2459
        %v2461 = vpop.f32.mrf.mxu0
        %v2462 = vadd.f32 %v2413, %v2461
        %2463 = vmatmul.bf16.gmra.mxu0 %v949
        %v2464 = vpop.f32.mrf.mxu0
        %v2465 = vadd.f32 %v2416, %v2464
        %v2466 = vpop.f32.mrf.mxu0
        %v2467 = vadd.f32 %v2418, %v2466
        %2468 = vdwg.mxu0
        %2469 = vmatpush.bf16.msra.mxu0 %v1707
        %2470 = vmatpush.bf16.msra.mxu0 %v1703
        %2471 = vmatpush.bf16.msra.mxu0 %v1699
        %2472 = vmatpush.bf16.msra.mxu0 %v1695
        %2473 = vmatpush.bf16.msra.mxu0 %v1691
        %2474 = vmatpush.bf16.msra.mxu0 %v1687
        %2475 = vmatpush.bf16.msra.mxu0 %v1683
        %2476 = vmatpush.bf16.msra.mxu0 %v1679
        %2477 = vmatmul.bf16.gmra.mxu0 %v894
        %v2478 = vpop.f32.mrf.mxu0
        %v2479 = vadd.f32 %v711, %v2478
        %v2480 = vpop.f32.mrf.mxu0
        %v2481 = vadd.f32 %v711, %v2480
        %2482 = vmatmul.bf16.gmra.mxu0 %v901
        %v2483 = vpop.f32.mrf.mxu0
        %v2484 = vadd.f32 %v711, %v2483
        %v2485 = vpop.f32.mrf.mxu0
        %v2486 = vadd.f32 %v711, %v2485
        %2487 = vmatmul.bf16.gmra.mxu0 %v908
        %v2488 = vpop.f32.mrf.mxu0
        %v2489 = vadd.f32 %v711, %v2488
        %v2490 = vpop.f32.mrf.mxu0
        %v2491 = vadd.f32 %v711, %v2490
        %2492 = vmatmul.bf16.gmra.mxu0 %v915
        %v2493 = vpop.f32.mrf.mxu0
        %v2494 = vadd.f32 %v711, %v2493
        %v2495 = vpop.f32.mrf.mxu0
        %v2496 = vadd.f32 %v711, %v2495
        %2497 = vmatmul.bf16.gmra.mxu0 %v922
        %v2498 = vpop.f32.mrf.mxu0
        %v2499 = vadd.f32 %v711, %v2498
        %v2500 = vpop.f32.mrf.mxu0
        %v2501 = vadd.f32 %v711, %v2500
        %2502 = vmatmul.bf16.gmra.mxu0 %v929
        %v2503 = vpop.f32.mrf.mxu0
        %v2504 = vadd.f32 %v711, %v2503
        %v2505 = vpop.f32.mrf.mxu0
        %v2506 = vadd.f32 %v711, %v2505
        %2507 = vmatmul.bf16.gmra.mxu0 %v936
        %v2508 = vpop.f32.mrf.mxu0
        %v2509 = vadd.f32 %v711, %v2508
        %v2510 = vpop.f32.mrf.mxu0
        %v2511 = vadd.f32 %v711, %v2510
        %2512 = vmatmul.bf16.gmra.mxu0 %v943
        %v2513 = vpop.f32.mrf.mxu0
        %v2514 = vadd.f32 %v711, %v2513
        %v2515 = vpop.f32.mrf.mxu0
        %v2516 = vadd.f32 %v711, %v2515
        %2517 = vdwg.mxu0
        %2518 = vmatpush.bf16.msra.mxu0 %v1739
        %2519 = vmatpush.bf16.msra.mxu0 %v1735
        %2520 = vmatpush.bf16.msra.mxu0 %v1731
        %2521 = vmatpush.bf16.msra.mxu0 %v1727
        %2522 = vmatpush.bf16.msra.mxu0 %v1723
        %2523 = vmatpush.bf16.msra.mxu0 %v1719
        %2524 = vmatpush.bf16.msra.mxu0 %v1715
        %2525 = vmatpush.bf16.msra.mxu0 %v1711
        %2526 = vmatmul.bf16.gmra.mxu0 %v895
        %v2527 = vpop.f32.mrf.mxu0
        %v2528 = vadd.f32 %v2479, %v2527
        %v2529 = vpop.f32.mrf.mxu0
        %v2530 = vadd.f32 %v2481, %v2529
        %2531 = vmatmul.bf16.gmra.mxu0 %v902
        %v2532 = vpop.f32.mrf.mxu0
        %v2533 = vadd.f32 %v2484, %v2532
        %v2534 = vpop.f32.mrf.mxu0
        %v2535 = vadd.f32 %v2486, %v2534
        %2536 = vmatmul.bf16.gmra.mxu0 %v909
        %v2537 = vpop.f32.mrf.mxu0
        %v2538 = vadd.f32 %v2489, %v2537
        %v2539 = vpop.f32.mrf.mxu0
        %v2540 = vadd.f32 %v2491, %v2539
        %2541 = vmatmul.bf16.gmra.mxu0 %v916
        %v2542 = vpop.f32.mrf.mxu0
        %v2543 = vadd.f32 %v2494, %v2542
        %v2544 = vpop.f32.mrf.mxu0
        %v2545 = vadd.f32 %v2496, %v2544
        %2546 = vmatmul.bf16.gmra.mxu0 %v923
        %v2547 = vpop.f32.mrf.mxu0
        %v2548 = vadd.f32 %v2499, %v2547
        %v2549 = vpop.f32.mrf.mxu0
        %v2550 = vadd.f32 %v2501, %v2549
        %2551 = vmatmul.bf16.gmra.mxu0 %v930
        %v2552 = vpop.f32.mrf.mxu0
        %v2553 = vadd.f32 %v2504, %v2552
        %v2554 = vpop.f32.mrf.mxu0
        %v2555 = vadd.f32 %v2506, %v2554
        %2556 = vmatmul.bf16.gmra.mxu0 %v937
        %v2557 = vpop.f32.mrf.mxu0
        %v2558 = vadd.f32 %v2509, %v2557
        %v2559 = vpop.f32.mrf.mxu0
        %v2560 = vadd.f32 %v2511, %v2559
        %2561 = vmatmul.bf16.gmra.mxu0 %v944
        %v2562 = vpop.f32.mrf.mxu0
        %v2563 = vadd.f32 %v2514, %v2562
        %v2564 = vpop.f32.mrf.mxu0
        %v2565 = vadd.f32 %v2516, %v2564
        %2566 = vdwg.mxu0
        %2567 = vmatpush.bf16.msra.mxu0 %v1771
        %2568 = vmatpush.bf16.msra.mxu0 %v1767
        %2569 = vmatpush.bf16.msra.mxu0 %v1763
        %2570 = vmatpush.bf16.msra.mxu0 %v1759
        %2571 = vmatpush.bf16.msra.mxu0 %v1755
        %2572 = vmatpush.bf16.msra.mxu0 %v1751
        %2573 = vmatpush.bf16.msra.mxu0 %v1747
        %2574 = vmatpush.bf16.msra.mxu0 %v1743
        %2575 = vmatmul.bf16.gmra.mxu0 %v896
        %v2576 = vpop.f32.mrf.mxu0
        %v2577 = vadd.f32 %v2528, %v2576
        %v2578 = vpop.f32.mrf.mxu0
        %v2579 = vadd.f32 %v2530, %v2578
        %2580 = vmatmul.bf16.gmra.mxu0 %v903
        %v2581 = vpop.f32.mrf.mxu0
        %v2582 = vadd.f32 %v2533, %v2581
        %v2583 = vpop.f32.mrf.mxu0
        %v2584 = vadd.f32 %v2535, %v2583
        %2585 = vmatmul.bf16.gmra.mxu0 %v910
        %v2586 = vpop.f32.mrf.mxu0
        %v2587 = vadd.f32 %v2538, %v2586
        %v2588 = vpop.f32.mrf.mxu0
        %v2589 = vadd.f32 %v2540, %v2588
        %2590 = vmatmul.bf16.gmra.mxu0 %v917
        %v2591 = vpop.f32.mrf.mxu0
        %v2592 = vadd.f32 %v2543, %v2591
        %v2593 = vpop.f32.mrf.mxu0
        %v2594 = vadd.f32 %v2545, %v2593
        %2595 = vmatmul.bf16.gmra.mxu0 %v924
        %v2596 = vpop.f32.mrf.mxu0
        %v2597 = vadd.f32 %v2548, %v2596
        %v2598 = vpop.f32.mrf.mxu0
        %v2599 = vadd.f32 %v2550, %v2598
        %2600 = vmatmul.bf16.gmra.mxu0 %v931
        %v2601 = vpop.f32.mrf.mxu0
        %v2602 = vadd.f32 %v2553, %v2601
        %v2603 = vpop.f32.mrf.mxu0
        %v2604 = vadd.f32 %v2555, %v2603
        %2605 = vmatmul.bf16.gmra.mxu0 %v938
        %v2606 = vpop.f32.mrf.mxu0
        %v2607 = vadd.f32 %v2558, %v2606
        %v2608 = vpop.f32.mrf.mxu0
        %v2609 = vadd.f32 %v2560, %v2608
        %2610 = vmatmul.bf16.gmra.mxu0 %v945
        %v2611 = vpop.f32.mrf.mxu0
        %v2612 = vadd.f32 %v2563, %v2611
        %v2613 = vpop.f32.mrf.mxu0
        %v2614 = vadd.f32 %v2565, %v2613
        %2615 = vdwg.mxu0
        %2616 = vmatpush.bf16.msra.mxu0 %v1803
        %2617 = vmatpush.bf16.msra.mxu0 %v1799
        %2618 = vmatpush.bf16.msra.mxu0 %v1795
        %2619 = vmatpush.bf16.msra.mxu0 %v1791
        %2620 = vmatpush.bf16.msra.mxu0 %v1787
        %2621 = vmatpush.bf16.msra.mxu0 %v1783
        %2622 = vmatpush.bf16.msra.mxu0 %v1779
        %2623 = vmatpush.bf16.msra.mxu0 %v1775
        %2624 = vmatmul.bf16.gmra.mxu0 %v897
        %v2625 = vpop.f32.mrf.mxu0
        %v2626 = vadd.f32 %v2577, %v2625
        %v2627 = vpop.f32.mrf.mxu0
        %v2628 = vadd.f32 %v2579, %v2627
        %2629 = vmatmul.bf16.gmra.mxu0 %v904
        %v2630 = vpop.f32.mrf.mxu0
        %v2631 = vadd.f32 %v2582, %v2630
        %v2632 = vpop.f32.mrf.mxu0
        %v2633 = vadd.f32 %v2584, %v2632
        %2634 = vmatmul.bf16.gmra.mxu0 %v911
        %v2635 = vpop.f32.mrf.mxu0
        %v2636 = vadd.f32 %v2587, %v2635
        %v2637 = vpop.f32.mrf.mxu0
        %v2638 = vadd.f32 %v2589, %v2637
        %2639 = vmatmul.bf16.gmra.mxu0 %v918
        %v2640 = vpop.f32.mrf.mxu0
        %v2641 = vadd.f32 %v2592, %v2640
        %v2642 = vpop.f32.mrf.mxu0
        %v2643 = vadd.f32 %v2594, %v2642
        %2644 = vmatmul.bf16.gmra.mxu0 %v925
        %v2645 = vpop.f32.mrf.mxu0
        %v2646 = vadd.f32 %v2597, %v2645
        %v2647 = vpop.f32.mrf.mxu0
        %v2648 = vadd.f32 %v2599, %v2647
        %2649 = vmatmul.bf16.gmra.mxu0 %v932
        %v2650 = vpop.f32.mrf.mxu0
        %v2651 = vadd.f32 %v2602, %v2650
        %v2652 = vpop.f32.mrf.mxu0
        %v2653 = vadd.f32 %v2604, %v2652
        %2654 = vmatmul.bf16.gmra.mxu0 %v939
        %v2655 = vpop.f32.mrf.mxu0
        %v2656 = vadd.f32 %v2607, %v2655
        %v2657 = vpop.f32.mrf.mxu0
        %v2658 = vadd.f32 %v2609, %v2657
        %2659 = vmatmul.bf16.gmra.mxu0 %v946
        %v2660 = vpop.f32.mrf.mxu0
        %v2661 = vadd.f32 %v2612, %v2660
        %v2662 = vpop.f32.mrf.mxu0
        %v2663 = vadd.f32 %v2614, %v2662
        %2664 = vdwg.mxu0
        %2665 = vmatpush.bf16.msra.mxu0 %v1835
        %2666 = vmatpush.bf16.msra.mxu0 %v1831
        %2667 = vmatpush.bf16.msra.mxu0 %v1827
        %2668 = vmatpush.bf16.msra.mxu0 %v1823
        %2669 = vmatpush.bf16.msra.mxu0 %v1819
        %2670 = vmatpush.bf16.msra.mxu0 %v1815
        %2671 = vmatpush.bf16.msra.mxu0 %v1811
        %2672 = vmatpush.bf16.msra.mxu0 %v1807
        %2673 = vmatmul.bf16.gmra.mxu0 %v898
        %v2674 = vpop.f32.mrf.mxu0
        %v2675 = vadd.f32 %v2626, %v2674
        %v2676 = vpop.f32.mrf.mxu0
        %v2677 = vadd.f32 %v2628, %v2676
        %2678 = vmatmul.bf16.gmra.mxu0 %v905
        %v2679 = vpop.f32.mrf.mxu0
        %v2680 = vadd.f32 %v2631, %v2679
        %v2681 = vpop.f32.mrf.mxu0
        %v2682 = vadd.f32 %v2633, %v2681
        %2683 = vmatmul.bf16.gmra.mxu0 %v912
        %v2684 = vpop.f32.mrf.mxu0
        %v2685 = vadd.f32 %v2636, %v2684
        %v2686 = vpop.f32.mrf.mxu0
        %v2687 = vadd.f32 %v2638, %v2686
        %2688 = vmatmul.bf16.gmra.mxu0 %v919
        %v2689 = vpop.f32.mrf.mxu0
        %v2690 = vadd.f32 %v2641, %v2689
        %v2691 = vpop.f32.mrf.mxu0
        %v2692 = vadd.f32 %v2643, %v2691
        %2693 = vmatmul.bf16.gmra.mxu0 %v926
        %v2694 = vpop.f32.mrf.mxu0
        %v2695 = vadd.f32 %v2646, %v2694
        %v2696 = vpop.f32.mrf.mxu0
        %v2697 = vadd.f32 %v2648, %v2696
        %2698 = vmatmul.bf16.gmra.mxu0 %v933
        %v2699 = vpop.f32.mrf.mxu0
        %v2700 = vadd.f32 %v2651, %v2699
        %v2701 = vpop.f32.mrf.mxu0
        %v2702 = vadd.f32 %v2653, %v2701
        %2703 = vmatmul.bf16.gmra.mxu0 %v940
        %v2704 = vpop.f32.mrf.mxu0
        %v2705 = vadd.f32 %v2656, %v2704
        %v2706 = vpop.f32.mrf.mxu0
        %v2707 = vadd.f32 %v2658, %v2706
        %2708 = vmatmul.bf16.gmra.mxu0 %v947
        %v2709 = vpop.f32.mrf.mxu0
        %v2710 = vadd.f32 %v2661, %v2709
        %v2711 = vpop.f32.mrf.mxu0
        %v2712 = vadd.f32 %v2663, %v2711
        %2713 = vdwg.mxu0
        %2714 = vmatpush.bf16.msra.mxu0 %v1867
        %2715 = vmatpush.bf16.msra.mxu0 %v1863
        %2716 = vmatpush.bf16.msra.mxu0 %v1859
        %2717 = vmatpush.bf16.msra.mxu0 %v1855
        %2718 = vmatpush.bf16.msra.mxu0 %v1851
        %2719 = vmatpush.bf16.msra.mxu0 %v1847
        %2720 = vmatpush.bf16.msra.mxu0 %v1843
        %2721 = vmatpush.bf16.msra.mxu0 %v1839
        %2722 = vmatmul.bf16.gmra.mxu0 %v899
        %v2723 = vpop.f32.mrf.mxu0
        %v2724 = vadd.f32 %v2675, %v2723
        %v2725 = vpop.f32.mrf.mxu0
        %v2726 = vadd.f32 %v2677, %v2725
        %2727 = vmatmul.bf16.gmra.mxu0 %v906
        %v2728 = vpop.f32.mrf.mxu0
        %v2729 = vadd.f32 %v2680, %v2728
        %v2730 = vpop.f32.mrf.mxu0
        %v2731 = vadd.f32 %v2682, %v2730
        %2732 = vmatmul.bf16.gmra.mxu0 %v913
        %v2733 = vpop.f32.mrf.mxu0
        %v2734 = vadd.f32 %v2685, %v2733
        %v2735 = vpop.f32.mrf.mxu0
        %v2736 = vadd.f32 %v2687, %v2735
        %2737 = vmatmul.bf16.gmra.mxu0 %v920
        %v2738 = vpop.f32.mrf.mxu0
        %v2739 = vadd.f32 %v2690, %v2738
        %v2740 = vpop.f32.mrf.mxu0
        %v2741 = vadd.f32 %v2692, %v2740
        %2742 = vmatmul.bf16.gmra.mxu0 %v927
        %v2743 = vpop.f32.mrf.mxu0
        %v2744 = vadd.f32 %v2695, %v2743
        %v2745 = vpop.f32.mrf.mxu0
        %v2746 = vadd.f32 %v2697, %v2745
        %2747 = vmatmul.bf16.gmra.mxu0 %v934
        %v2748 = vpop.f32.mrf.mxu0
        %v2749 = vadd.f32 %v2700, %v2748
        %v2750 = vpop.f32.mrf.mxu0
        %v2751 = vadd.f32 %v2702, %v2750
        %2752 = vmatmul.bf16.gmra.mxu0 %v941
        %v2753 = vpop.f32.mrf.mxu0
        %v2754 = vadd.f32 %v2705, %v2753
        %v2755 = vpop.f32.mrf.mxu0
        %v2756 = vadd.f32 %v2707, %v2755
        %2757 = vmatmul.bf16.gmra.mxu0 %v948
        %v2758 = vpop.f32.mrf.mxu0
        %v2759 = vadd.f32 %v2710, %v2758
        %v2760 = vpop.f32.mrf.mxu0
        %v2761 = vadd.f32 %v2712, %v2760
        %2762 = vdwg.mxu0
        %2763 = vmatpush.bf16.msra.mxu0 %v1899
        %2764 = vmatpush.bf16.msra.mxu0 %v1895
        %2765 = vmatpush.bf16.msra.mxu0 %v1891
        %2766 = vmatpush.bf16.msra.mxu0 %v1887
        %2767 = vmatpush.bf16.msra.mxu0 %v1883
        %2768 = vmatpush.bf16.msra.mxu0 %v1879
        %2769 = vmatpush.bf16.msra.mxu0 %v1875
        %2770 = vmatpush.bf16.msra.mxu0 %v1871
        %2771 = vmatmul.bf16.gmra.mxu0 %v900
        %v2772 = vpop.f32.mrf.mxu0
        %v2773 = vadd.f32 %v2724, %v2772
        %v2774 = vpop.f32.mrf.mxu0
        %v2775 = vadd.f32 %v2726, %v2774
        %2776 = vmatmul.bf16.gmra.mxu0 %v907
        %v2777 = vpop.f32.mrf.mxu0
        %v2778 = vadd.f32 %v2729, %v2777
        %v2779 = vpop.f32.mrf.mxu0
        %v2780 = vadd.f32 %v2731, %v2779
        %2781 = vmatmul.bf16.gmra.mxu0 %v914
        %v2782 = vpop.f32.mrf.mxu0
        %v2783 = vadd.f32 %v2734, %v2782
        %v2784 = vpop.f32.mrf.mxu0
        %v2785 = vadd.f32 %v2736, %v2784
        %2786 = vmatmul.bf16.gmra.mxu0 %v921
        %v2787 = vpop.f32.mrf.mxu0
        %v2788 = vadd.f32 %v2739, %v2787
        %v2789 = vpop.f32.mrf.mxu0
        %v2790 = vadd.f32 %v2741, %v2789
        %2791 = vmatmul.bf16.gmra.mxu0 %v928
        %v2792 = vpop.f32.mrf.mxu0
        %v2793 = vadd.f32 %v2744, %v2792
        %v2794 = vpop.f32.mrf.mxu0
        %v2795 = vadd.f32 %v2746, %v2794
        %2796 = vmatmul.bf16.gmra.mxu0 %v935
        %v2797 = vpop.f32.mrf.mxu0
        %v2798 = vadd.f32 %v2749, %v2797
        %v2799 = vpop.f32.mrf.mxu0
        %v2800 = vadd.f32 %v2751, %v2799
        %2801 = vmatmul.bf16.gmra.mxu0 %v942
        %v2802 = vpop.f32.mrf.mxu0
        %v2803 = vadd.f32 %v2754, %v2802
        %v2804 = vpop.f32.mrf.mxu0
        %v2805 = vadd.f32 %v2756, %v2804
        %2806 = vmatmul.bf16.gmra.mxu0 %v949
        %v2807 = vpop.f32.mrf.mxu0
        %v2808 = vadd.f32 %v2759, %v2807
        %v2809 = vpop.f32.mrf.mxu0
        %v2810 = vadd.f32 %v2761, %v2809
        %2811 = vdwg.mxu0
        %2812 = vmatpush.bf16.msra.mxu0 %v1708
        %2813 = vmatpush.bf16.msra.mxu0 %v1704
        %2814 = vmatpush.bf16.msra.mxu0 %v1700
        %2815 = vmatpush.bf16.msra.mxu0 %v1696
        %2816 = vmatpush.bf16.msra.mxu0 %v1692
        %2817 = vmatpush.bf16.msra.mxu0 %v1688
        %2818 = vmatpush.bf16.msra.mxu0 %v1684
        %2819 = vmatpush.bf16.msra.mxu0 %v1680
        %2820 = vmatmul.bf16.gmra.mxu0 %v894
        %v2821 = vpop.f32.mrf.mxu0
        %v2822 = vadd.f32 %v712, %v2821
        %v2823 = vpop.f32.mrf.mxu0
        %v2824 = vadd.f32 %v712, %v2823
        %2825 = vmatmul.bf16.gmra.mxu0 %v901
        %v2826 = vpop.f32.mrf.mxu0
        %v2827 = vadd.f32 %v712, %v2826
        %v2828 = vpop.f32.mrf.mxu0
        %v2829 = vadd.f32 %v712, %v2828
        %2830 = vmatmul.bf16.gmra.mxu0 %v908
        %v2831 = vpop.f32.mrf.mxu0
        %v2832 = vadd.f32 %v712, %v2831
        %v2833 = vpop.f32.mrf.mxu0
        %v2834 = vadd.f32 %v712, %v2833
        %2835 = vmatmul.bf16.gmra.mxu0 %v915
        %v2836 = vpop.f32.mrf.mxu0
        %v2837 = vadd.f32 %v712, %v2836
        %v2838 = vpop.f32.mrf.mxu0
        %v2839 = vadd.f32 %v712, %v2838
        %2840 = vmatmul.bf16.gmra.mxu0 %v922
        %v2841 = vpop.f32.mrf.mxu0
        %v2842 = vadd.f32 %v712, %v2841
        %v2843 = vpop.f32.mrf.mxu0
        %v2844 = vadd.f32 %v712, %v2843
        %2845 = vmatmul.bf16.gmra.mxu0 %v929
        %v2846 = vpop.f32.mrf.mxu0
        %v2847 = vadd.f32 %v712, %v2846
        %v2848 = vpop.f32.mrf.mxu0
        %v2849 = vadd.f32 %v712, %v2848
        %2850 = vmatmul.bf16.gmra.mxu0 %v936
        %v2851 = vpop.f32.mrf.mxu0
        %v2852 = vadd.f32 %v712, %v2851
        %v2853 = vpop.f32.mrf.mxu0
        %v2854 = vadd.f32 %v712, %v2853
        %2855 = vmatmul.bf16.gmra.mxu0 %v943
        %v2856 = vpop.f32.mrf.mxu0
        %v2857 = vadd.f32 %v712, %v2856
        %v2858 = vpop.f32.mrf.mxu0
        %v2859 = vadd.f32 %v712, %v2858
        %2860 = vdwg.mxu0
        %2861 = vmatpush.bf16.msra.mxu0 %v1740
        %2862 = vmatpush.bf16.msra.mxu0 %v1736
        %2863 = vmatpush.bf16.msra.mxu0 %v1732
        %2864 = vmatpush.bf16.msra.mxu0 %v1728
        %2865 = vmatpush.bf16.msra.mxu0 %v1724
        %2866 = vmatpush.bf16.msra.mxu0 %v1720
        %2867 = vmatpush.bf16.msra.mxu0 %v1716
        %2868 = vmatpush.bf16.msra.mxu0 %v1712
        %2869 = vmatmul.bf16.gmra.mxu0 %v895
        %v2870 = vpop.f32.mrf.mxu0
        %v2871 = vadd.f32 %v2822, %v2870
        %v2872 = vpop.f32.mrf.mxu0
        %v2873 = vadd.f32 %v2824, %v2872
        %2874 = vmatmul.bf16.gmra.mxu0 %v902
        %v2875 = vpop.f32.mrf.mxu0
        %v2876 = vadd.f32 %v2827, %v2875
        %v2877 = vpop.f32.mrf.mxu0
        %v2878 = vadd.f32 %v2829, %v2877
        %2879 = vmatmul.bf16.gmra.mxu0 %v909
        %v2880 = vpop.f32.mrf.mxu0
        %v2881 = vadd.f32 %v2832, %v2880
        %v2882 = vpop.f32.mrf.mxu0
        %v2883 = vadd.f32 %v2834, %v2882
        %2884 = vmatmul.bf16.gmra.mxu0 %v916
        %v2885 = vpop.f32.mrf.mxu0
        %v2886 = vadd.f32 %v2837, %v2885
        %v2887 = vpop.f32.mrf.mxu0
        %v2888 = vadd.f32 %v2839, %v2887
        %2889 = vmatmul.bf16.gmra.mxu0 %v923
        %v2890 = vpop.f32.mrf.mxu0
        %v2891 = vadd.f32 %v2842, %v2890
        %v2892 = vpop.f32.mrf.mxu0
        %v2893 = vadd.f32 %v2844, %v2892
        %2894 = vmatmul.bf16.gmra.mxu0 %v930
        %v2895 = vpop.f32.mrf.mxu0
        %v2896 = vadd.f32 %v2847, %v2895
        %v2897 = vpop.f32.mrf.mxu0
        %v2898 = vadd.f32 %v2849, %v2897
        %2899 = vmatmul.bf16.gmra.mxu0 %v937
        %v2900 = vpop.f32.mrf.mxu0
        %v2901 = vadd.f32 %v2852, %v2900
        %v2902 = vpop.f32.mrf.mxu0
        %v2903 = vadd.f32 %v2854, %v2902
        %2904 = vmatmul.bf16.gmra.mxu0 %v944
        %v2905 = vpop.f32.mrf.mxu0
        %v2906 = vadd.f32 %v2857, %v2905
        %v2907 = vpop.f32.mrf.mxu0
        %v2908 = vadd.f32 %v2859, %v2907
        %2909 = vdwg.mxu0
        %2910 = vmatpush.bf16.msra.mxu0 %v1772
        %2911 = vmatpush.bf16.msra.mxu0 %v1768
        %2912 = vmatpush.bf16.msra.mxu0 %v1764
        %2913 = vmatpush.bf16.msra.mxu0 %v1760
        %2914 = vmatpush.bf16.msra.mxu0 %v1756
        %2915 = vmatpush.bf16.msra.mxu0 %v1752
        %2916 = vmatpush.bf16.msra.mxu0 %v1748
        %2917 = vmatpush.bf16.msra.mxu0 %v1744
        %2918 = vmatmul.bf16.gmra.mxu0 %v896
        %v2919 = vpop.f32.mrf.mxu0
        %v2920 = vadd.f32 %v2871, %v2919
        %v2921 = vpop.f32.mrf.mxu0
        %v2922 = vadd.f32 %v2873, %v2921
        %2923 = vmatmul.bf16.gmra.mxu0 %v903
        %v2924 = vpop.f32.mrf.mxu0
        %v2925 = vadd.f32 %v2876, %v2924
        %v2926 = vpop.f32.mrf.mxu0
        %v2927 = vadd.f32 %v2878, %v2926
        %2928 = vmatmul.bf16.gmra.mxu0 %v910
        %v2929 = vpop.f32.mrf.mxu0
        %v2930 = vadd.f32 %v2881, %v2929
        %v2931 = vpop.f32.mrf.mxu0
        %v2932 = vadd.f32 %v2883, %v2931
        %2933 = vmatmul.bf16.gmra.mxu0 %v917
        %v2934 = vpop.f32.mrf.mxu0
        %v2935 = vadd.f32 %v2886, %v2934
        %v2936 = vpop.f32.mrf.mxu0
        %v2937 = vadd.f32 %v2888, %v2936
        %2938 = vmatmul.bf16.gmra.mxu0 %v924
        %v2939 = vpop.f32.mrf.mxu0
        %v2940 = vadd.f32 %v2891, %v2939
        %v2941 = vpop.f32.mrf.mxu0
        %v2942 = vadd.f32 %v2893, %v2941
        %2943 = vmatmul.bf16.gmra.mxu0 %v931
        %v2944 = vpop.f32.mrf.mxu0
        %v2945 = vadd.f32 %v2896, %v2944
        %v2946 = vpop.f32.mrf.mxu0
        %v2947 = vadd.f32 %v2898, %v2946
        %2948 = vmatmul.bf16.gmra.mxu0 %v938
        %v2949 = vpop.f32.mrf.mxu0
        %v2950 = vadd.f32 %v2901, %v2949
        %v2951 = vpop.f32.mrf.mxu0
        %v2952 = vadd.f32 %v2903, %v2951
        %2953 = vmatmul.bf16.gmra.mxu0 %v945
        %v2954 = vpop.f32.mrf.mxu0
        %v2955 = vadd.f32 %v2906, %v2954
        %v2956 = vpop.f32.mrf.mxu0
        %v2957 = vadd.f32 %v2908, %v2956
        %2958 = vdwg.mxu0
        %2959 = vmatpush.bf16.msra.mxu0 %v1804
        %2960 = vmatpush.bf16.msra.mxu0 %v1800
        %2961 = vmatpush.bf16.msra.mxu0 %v1796
        %2962 = vmatpush.bf16.msra.mxu0 %v1792
        %2963 = vmatpush.bf16.msra.mxu0 %v1788
        %2964 = vmatpush.bf16.msra.mxu0 %v1784
        %2965 = vmatpush.bf16.msra.mxu0 %v1780
        %2966 = vmatpush.bf16.msra.mxu0 %v1776
        %2967 = vmatmul.bf16.gmra.mxu0 %v897
        %v2968 = vpop.f32.mrf.mxu0
        %v2969 = vadd.f32 %v2920, %v2968
        %v2970 = vpop.f32.mrf.mxu0
        %v2971 = vadd.f32 %v2922, %v2970
        %2972 = vmatmul.bf16.gmra.mxu0 %v904
        %v2973 = vpop.f32.mrf.mxu0
        %v2974 = vadd.f32 %v2925, %v2973
        %v2975 = vpop.f32.mrf.mxu0
        %v2976 = vadd.f32 %v2927, %v2975
        %2977 = vmatmul.bf16.gmra.mxu0 %v911
        %v2978 = vpop.f32.mrf.mxu0
        %v2979 = vadd.f32 %v2930, %v2978
        %v2980 = vpop.f32.mrf.mxu0
        %v2981 = vadd.f32 %v2932, %v2980
        %2982 = vmatmul.bf16.gmra.mxu0 %v918
        %v2983 = vpop.f32.mrf.mxu0
        %v2984 = vadd.f32 %v2935, %v2983
        %v2985 = vpop.f32.mrf.mxu0
        %v2986 = vadd.f32 %v2937, %v2985
        %2987 = vmatmul.bf16.gmra.mxu0 %v925
        %v2988 = vpop.f32.mrf.mxu0
        %v2989 = vadd.f32 %v2940, %v2988
        %v2990 = vpop.f32.mrf.mxu0
        %v2991 = vadd.f32 %v2942, %v2990
        %2992 = vmatmul.bf16.gmra.mxu0 %v932
        %v2993 = vpop.f32.mrf.mxu0
        %v2994 = vadd.f32 %v2945, %v2993
        %v2995 = vpop.f32.mrf.mxu0
        %v2996 = vadd.f32 %v2947, %v2995
        %2997 = vmatmul.bf16.gmra.mxu0 %v939
        %v2998 = vpop.f32.mrf.mxu0
        %v2999 = vadd.f32 %v2950, %v2998
        %v3000 = vpop.f32.mrf.mxu0
        %v3001 = vadd.f32 %v2952, %v3000
        %3002 = vmatmul.bf16.gmra.mxu0 %v946
        %v3003 = vpop.f32.mrf.mxu0
        %v3004 = vadd.f32 %v2955, %v3003
        %v3005 = vpop.f32.mrf.mxu0
        %v3006 = vadd.f32 %v2957, %v3005
        %3007 = vdwg.mxu0
        %3008 = vmatpush.bf16.msra.mxu0 %v1836
        %3009 = vmatpush.bf16.msra.mxu0 %v1832
        %3010 = vmatpush.bf16.msra.mxu0 %v1828
        %3011 = vmatpush.bf16.msra.mxu0 %v1824
        %3012 = vmatpush.bf16.msra.mxu0 %v1820
        %3013 = vmatpush.bf16.msra.mxu0 %v1816
        %3014 = vmatpush.bf16.msra.mxu0 %v1812
        %3015 = vmatpush.bf16.msra.mxu0 %v1808
        %3016 = vmatmul.bf16.gmra.mxu0 %v898
        %v3017 = vpop.f32.mrf.mxu0
        %v3018 = vadd.f32 %v2969, %v3017
        %v3019 = vpop.f32.mrf.mxu0
        %v3020 = vadd.f32 %v2971, %v3019
        %3021 = vmatmul.bf16.gmra.mxu0 %v905
        %v3022 = vpop.f32.mrf.mxu0
        %v3023 = vadd.f32 %v2974, %v3022
        %v3024 = vpop.f32.mrf.mxu0
        %v3025 = vadd.f32 %v2976, %v3024
        %3026 = vmatmul.bf16.gmra.mxu0 %v912
        %v3027 = vpop.f32.mrf.mxu0
        %v3028 = vadd.f32 %v2979, %v3027
        %v3029 = vpop.f32.mrf.mxu0
        %v3030 = vadd.f32 %v2981, %v3029
        %3031 = vmatmul.bf16.gmra.mxu0 %v919
        %v3032 = vpop.f32.mrf.mxu0
        %v3033 = vadd.f32 %v2984, %v3032
        %v3034 = vpop.f32.mrf.mxu0
        %v3035 = vadd.f32 %v2986, %v3034
        %3036 = vmatmul.bf16.gmra.mxu0 %v926
        %v3037 = vpop.f32.mrf.mxu0
        %v3038 = vadd.f32 %v2989, %v3037
        %v3039 = vpop.f32.mrf.mxu0
        %v3040 = vadd.f32 %v2991, %v3039
        %3041 = vmatmul.bf16.gmra.mxu0 %v933
        %v3042 = vpop.f32.mrf.mxu0
        %v3043 = vadd.f32 %v2994, %v3042
        %v3044 = vpop.f32.mrf.mxu0
        %v3045 = vadd.f32 %v2996, %v3044
        %3046 = vmatmul.bf16.gmra.mxu0 %v940
        %v3047 = vpop.f32.mrf.mxu0
        %v3048 = vadd.f32 %v2999, %v3047
        %v3049 = vpop.f32.mrf.mxu0
        %v3050 = vadd.f32 %v3001, %v3049
        %3051 = vmatmul.bf16.gmra.mxu0 %v947
        %v3052 = vpop.f32.mrf.mxu0
        %v3053 = vadd.f32 %v3004, %v3052
        %v3054 = vpop.f32.mrf.mxu0
        %v3055 = vadd.f32 %v3006, %v3054
        %3056 = vdwg.mxu0
        %3057 = vmatpush.bf16.msra.mxu0 %v1868
        %3058 = vmatpush.bf16.msra.mxu0 %v1864
        %3059 = vmatpush.bf16.msra.mxu0 %v1860
        %3060 = vmatpush.bf16.msra.mxu0 %v1856
        %3061 = vmatpush.bf16.msra.mxu0 %v1852
        %3062 = vmatpush.bf16.msra.mxu0 %v1848
        %3063 = vmatpush.bf16.msra.mxu0 %v1844
        %3064 = vmatpush.bf16.msra.mxu0 %v1840
        %3065 = vmatmul.bf16.gmra.mxu0 %v899
        %v3066 = vpop.f32.mrf.mxu0
        %v3067 = vadd.f32 %v3018, %v3066
        %v3068 = vpop.f32.mrf.mxu0
        %v3069 = vadd.f32 %v3020, %v3068
        %3070 = vmatmul.bf16.gmra.mxu0 %v906
        %v3071 = vpop.f32.mrf.mxu0
        %v3072 = vadd.f32 %v3023, %v3071
        %v3073 = vpop.f32.mrf.mxu0
        %v3074 = vadd.f32 %v3025, %v3073
        %3075 = vmatmul.bf16.gmra.mxu0 %v913
        %v3076 = vpop.f32.mrf.mxu0
        %v3077 = vadd.f32 %v3028, %v3076
        %v3078 = vpop.f32.mrf.mxu0
        %v3079 = vadd.f32 %v3030, %v3078
        %3080 = vmatmul.bf16.gmra.mxu0 %v920
        %v3081 = vpop.f32.mrf.mxu0
        %v3082 = vadd.f32 %v3033, %v3081
        %v3083 = vpop.f32.mrf.mxu0
        %v3084 = vadd.f32 %v3035, %v3083
        %3085 = vmatmul.bf16.gmra.mxu0 %v927
        %v3086 = vpop.f32.mrf.mxu0
        %v3087 = vadd.f32 %v3038, %v3086
        %v3088 = vpop.f32.mrf.mxu0
        %v3089 = vadd.f32 %v3040, %v3088
        %3090 = vmatmul.bf16.gmra.mxu0 %v934
        %v3091 = vpop.f32.mrf.mxu0
        %v3092 = vadd.f32 %v3043, %v3091
        %v3093 = vpop.f32.mrf.mxu0
        %v3094 = vadd.f32 %v3045, %v3093
        %3095 = vmatmul.bf16.gmra.mxu0 %v941
        %v3096 = vpop.f32.mrf.mxu0
        %v3097 = vadd.f32 %v3048, %v3096
        %v3098 = vpop.f32.mrf.mxu0
        %v3099 = vadd.f32 %v3050, %v3098
        %3100 = vmatmul.bf16.gmra.mxu0 %v948
        %v3101 = vpop.f32.mrf.mxu0
        %v3102 = vadd.f32 %v3053, %v3101
        %v3103 = vpop.f32.mrf.mxu0
        %v3104 = vadd.f32 %v3055, %v3103
        %3105 = vdwg.mxu0
        %3106 = vmatpush.bf16.msra.mxu0 %v1900
        %3107 = vmatpush.bf16.msra.mxu0 %v1896
        %3108 = vmatpush.bf16.msra.mxu0 %v1892
        %3109 = vmatpush.bf16.msra.mxu0 %v1888
        %3110 = vmatpush.bf16.msra.mxu0 %v1884
        %3111 = vmatpush.bf16.msra.mxu0 %v1880
        %3112 = vmatpush.bf16.msra.mxu0 %v1876
        %3113 = vmatpush.bf16.msra.mxu0 %v1872
        %3114 = vmatmul.bf16.gmra.mxu0 %v900
        %v3115 = vpop.f32.mrf.mxu0
        %v3116 = vadd.f32 %v3067, %v3115
        %v3117 = vpop.f32.mrf.mxu0
        %v3118 = vadd.f32 %v3069, %v3117
        %3119 = vmatmul.bf16.gmra.mxu0 %v907
        %v3120 = vpop.f32.mrf.mxu0
        %v3121 = vadd.f32 %v3072, %v3120
        %v3122 = vpop.f32.mrf.mxu0
        %v3123 = vadd.f32 %v3074, %v3122
        %3124 = vmatmul.bf16.gmra.mxu0 %v914
        %v3125 = vpop.f32.mrf.mxu0
        %v3126 = vadd.f32 %v3077, %v3125
        %v3127 = vpop.f32.mrf.mxu0
        %v3128 = vadd.f32 %v3079, %v3127
        %3129 = vmatmul.bf16.gmra.mxu0 %v921
        %v3130 = vpop.f32.mrf.mxu0
        %v3131 = vadd.f32 %v3082, %v3130
        %v3132 = vpop.f32.mrf.mxu0
        %v3133 = vadd.f32 %v3084, %v3132
        %3134 = vmatmul.bf16.gmra.mxu0 %v928
        %v3135 = vpop.f32.mrf.mxu0
        %v3136 = vadd.f32 %v3087, %v3135
        %v3137 = vpop.f32.mrf.mxu0
        %v3138 = vadd.f32 %v3089, %v3137
        %3139 = vmatmul.bf16.gmra.mxu0 %v935
        %v3140 = vpop.f32.mrf.mxu0
        %v3141 = vadd.f32 %v3092, %v3140
        %v3142 = vpop.f32.mrf.mxu0
        %v3143 = vadd.f32 %v3094, %v3142
        %3144 = vmatmul.bf16.gmra.mxu0 %v942
        %v3145 = vpop.f32.mrf.mxu0
        %v3146 = vadd.f32 %v3097, %v3145
        %v3147 = vpop.f32.mrf.mxu0
        %v3148 = vadd.f32 %v3099, %v3147
        %3149 = vmatmul.bf16.gmra.mxu0 %v949
        %v3150 = vpop.f32.mrf.mxu0
        %v3151 = vadd.f32 %v3102, %v3150
        %v3152 = vpop.f32.mrf.mxu0
        %v3153 = vadd.f32 %v3104, %v3152
        %3154 = vdwg.mxu0
        %3155 = vmatpush.bf16.msra.mxu0 %v1709
        %3156 = vmatpush.bf16.msra.mxu0 %v1705
        %3157 = vmatpush.bf16.msra.mxu0 %v1701
        %3158 = vmatpush.bf16.msra.mxu0 %v1697
        %3159 = vmatpush.bf16.msra.mxu0 %v1693
        %3160 = vmatpush.bf16.msra.mxu0 %v1689
        %3161 = vmatpush.bf16.msra.mxu0 %v1685
        %3162 = vmatpush.bf16.msra.mxu0 %v1681
        %3163 = vmatmul.bf16.gmra.mxu0 %v894
        %v3164 = vpop.f32.mrf.mxu0
        %v3165 = vadd.f32 %v713, %v3164
        %v3166 = vpop.f32.mrf.mxu0
        %v3167 = vadd.f32 %v713, %v3166
        %3168 = vmatmul.bf16.gmra.mxu0 %v901
        %v3169 = vpop.f32.mrf.mxu0
        %v3170 = vadd.f32 %v713, %v3169
        %v3171 = vpop.f32.mrf.mxu0
        %v3172 = vadd.f32 %v713, %v3171
        %3173 = vmatmul.bf16.gmra.mxu0 %v908
        %v3174 = vpop.f32.mrf.mxu0
        %v3175 = vadd.f32 %v713, %v3174
        %v3176 = vpop.f32.mrf.mxu0
        %v3177 = vadd.f32 %v713, %v3176
        %3178 = vmatmul.bf16.gmra.mxu0 %v915
        %v3179 = vpop.f32.mrf.mxu0
        %v3180 = vadd.f32 %v713, %v3179
        %v3181 = vpop.f32.mrf.mxu0
        %v3182 = vadd.f32 %v713, %v3181
        %3183 = vmatmul.bf16.gmra.mxu0 %v922
        %v3184 = vpop.f32.mrf.mxu0
        %v3185 = vadd.f32 %v713, %v3184
        %v3186 = vpop.f32.mrf.mxu0
        %v3187 = vadd.f32 %v713, %v3186
        %3188 = vmatmul.bf16.gmra.mxu0 %v929
        %v3189 = vpop.f32.mrf.mxu0
        %v3190 = vadd.f32 %v713, %v3189
        %v3191 = vpop.f32.mrf.mxu0
        %v3192 = vadd.f32 %v713, %v3191
        %3193 = vmatmul.bf16.gmra.mxu0 %v936
        %v3194 = vpop.f32.mrf.mxu0
        %v3195 = vadd.f32 %v713, %v3194
        %v3196 = vpop.f32.mrf.mxu0
        %v3197 = vadd.f32 %v713, %v3196
        %3198 = vmatmul.bf16.gmra.mxu0 %v943
        %v3199 = vpop.f32.mrf.mxu0
        %v3200 = vadd.f32 %v713, %v3199
        %v3201 = vpop.f32.mrf.mxu0
        %v3202 = vadd.f32 %v713, %v3201
        %3203 = vdwg.mxu0
        %3204 = vmatpush.bf16.msra.mxu0 %v1741
        %3205 = vmatpush.bf16.msra.mxu0 %v1737
        %3206 = vmatpush.bf16.msra.mxu0 %v1733
        %3207 = vmatpush.bf16.msra.mxu0 %v1729
        %3208 = vmatpush.bf16.msra.mxu0 %v1725
        %3209 = vmatpush.bf16.msra.mxu0 %v1721
        %3210 = vmatpush.bf16.msra.mxu0 %v1717
        %3211 = vmatpush.bf16.msra.mxu0 %v1713
        %3212 = vmatmul.bf16.gmra.mxu0 %v895
        %v3213 = vpop.f32.mrf.mxu0
        %v3214 = vadd.f32 %v3165, %v3213
        %v3215 = vpop.f32.mrf.mxu0
        %v3216 = vadd.f32 %v3167, %v3215
        %3217 = vmatmul.bf16.gmra.mxu0 %v902
        %v3218 = vpop.f32.mrf.mxu0
        %v3219 = vadd.f32 %v3170, %v3218
        %v3220 = vpop.f32.mrf.mxu0
        %v3221 = vadd.f32 %v3172, %v3220
        %3222 = vmatmul.bf16.gmra.mxu0 %v909
        %v3223 = vpop.f32.mrf.mxu0
        %v3224 = vadd.f32 %v3175, %v3223
        %v3225 = vpop.f32.mrf.mxu0
        %v3226 = vadd.f32 %v3177, %v3225
        %3227 = vmatmul.bf16.gmra.mxu0 %v916
        %v3228 = vpop.f32.mrf.mxu0
        %v3229 = vadd.f32 %v3180, %v3228
        %v3230 = vpop.f32.mrf.mxu0
        %v3231 = vadd.f32 %v3182, %v3230
        %3232 = vmatmul.bf16.gmra.mxu0 %v923
        %v3233 = vpop.f32.mrf.mxu0
        %v3234 = vadd.f32 %v3185, %v3233
        %v3235 = vpop.f32.mrf.mxu0
        %v3236 = vadd.f32 %v3187, %v3235
        %3237 = vmatmul.bf16.gmra.mxu0 %v930
        %v3238 = vpop.f32.mrf.mxu0
        %v3239 = vadd.f32 %v3190, %v3238
        %v3240 = vpop.f32.mrf.mxu0
        %v3241 = vadd.f32 %v3192, %v3240
        %3242 = vmatmul.bf16.gmra.mxu0 %v937
        %v3243 = vpop.f32.mrf.mxu0
        %v3244 = vadd.f32 %v3195, %v3243
        %v3245 = vpop.f32.mrf.mxu0
        %v3246 = vadd.f32 %v3197, %v3245
        %3247 = vmatmul.bf16.gmra.mxu0 %v944
        %v3248 = vpop.f32.mrf.mxu0
        %v3249 = vadd.f32 %v3200, %v3248
        %v3250 = vpop.f32.mrf.mxu0
        %v3251 = vadd.f32 %v3202, %v3250
        %3252 = vdwg.mxu0
        %3253 = vmatpush.bf16.msra.mxu0 %v1773
        %3254 = vmatpush.bf16.msra.mxu0 %v1769
        %3255 = vmatpush.bf16.msra.mxu0 %v1765
        %3256 = vmatpush.bf16.msra.mxu0 %v1761
        %3257 = vmatpush.bf16.msra.mxu0 %v1757
        %3258 = vmatpush.bf16.msra.mxu0 %v1753
        %3259 = vmatpush.bf16.msra.mxu0 %v1749
        %3260 = vmatpush.bf16.msra.mxu0 %v1745
        %3261 = vmatmul.bf16.gmra.mxu0 %v896
        %v3262 = vpop.f32.mrf.mxu0
        %v3263 = vadd.f32 %v3214, %v3262
        %v3264 = vpop.f32.mrf.mxu0
        %v3265 = vadd.f32 %v3216, %v3264
        %3266 = vmatmul.bf16.gmra.mxu0 %v903
        %v3267 = vpop.f32.mrf.mxu0
        %v3268 = vadd.f32 %v3219, %v3267
        %v3269 = vpop.f32.mrf.mxu0
        %v3270 = vadd.f32 %v3221, %v3269
        %3271 = vmatmul.bf16.gmra.mxu0 %v910
        %v3272 = vpop.f32.mrf.mxu0
        %v3273 = vadd.f32 %v3224, %v3272
        %v3274 = vpop.f32.mrf.mxu0
        %v3275 = vadd.f32 %v3226, %v3274
        %3276 = vmatmul.bf16.gmra.mxu0 %v917
        %v3277 = vpop.f32.mrf.mxu0
        %v3278 = vadd.f32 %v3229, %v3277
        %v3279 = vpop.f32.mrf.mxu0
        %v3280 = vadd.f32 %v3231, %v3279
        %3281 = vmatmul.bf16.gmra.mxu0 %v924
        %v3282 = vpop.f32.mrf.mxu0
        %v3283 = vadd.f32 %v3234, %v3282
        %v3284 = vpop.f32.mrf.mxu0
        %v3285 = vadd.f32 %v3236, %v3284
        %3286 = vmatmul.bf16.gmra.mxu0 %v931
        %v3287 = vpop.f32.mrf.mxu0
        %v3288 = vadd.f32 %v3239, %v3287
        %v3289 = vpop.f32.mrf.mxu0
        %v3290 = vadd.f32 %v3241, %v3289
        %3291 = vmatmul.bf16.gmra.mxu0 %v938
        %v3292 = vpop.f32.mrf.mxu0
        %v3293 = vadd.f32 %v3244, %v3292
        %v3294 = vpop.f32.mrf.mxu0
        %v3295 = vadd.f32 %v3246, %v3294
        %3296 = vmatmul.bf16.gmra.mxu0 %v945
        %v3297 = vpop.f32.mrf.mxu0
        %v3298 = vadd.f32 %v3249, %v3297
        %v3299 = vpop.f32.mrf.mxu0
        %v3300 = vadd.f32 %v3251, %v3299
        %3301 = vdwg.mxu0
        %3302 = vmatpush.bf16.msra.mxu0 %v1805
        %3303 = vmatpush.bf16.msra.mxu0 %v1801
        %3304 = vmatpush.bf16.msra.mxu0 %v1797
        %3305 = vmatpush.bf16.msra.mxu0 %v1793
        %3306 = vmatpush.bf16.msra.mxu0 %v1789
        %3307 = vmatpush.bf16.msra.mxu0 %v1785
        %3308 = vmatpush.bf16.msra.mxu0 %v1781
        %3309 = vmatpush.bf16.msra.mxu0 %v1777
        %3310 = vmatmul.bf16.gmra.mxu0 %v897
        %v3311 = vpop.f32.mrf.mxu0
        %v3312 = vadd.f32 %v3263, %v3311
        %v3313 = vpop.f32.mrf.mxu0
        %v3314 = vadd.f32 %v3265, %v3313
        %3315 = vmatmul.bf16.gmra.mxu0 %v904
        %v3316 = vpop.f32.mrf.mxu0
        %v3317 = vadd.f32 %v3268, %v3316
        %v3318 = vpop.f32.mrf.mxu0
        %v3319 = vadd.f32 %v3270, %v3318
        %3320 = vmatmul.bf16.gmra.mxu0 %v911
        %v3321 = vpop.f32.mrf.mxu0
        %v3322 = vadd.f32 %v3273, %v3321
        %v3323 = vpop.f32.mrf.mxu0
        %v3324 = vadd.f32 %v3275, %v3323
        %3325 = vmatmul.bf16.gmra.mxu0 %v918
        %v3326 = vpop.f32.mrf.mxu0
        %v3327 = vadd.f32 %v3278, %v3326
        %v3328 = vpop.f32.mrf.mxu0
        %v3329 = vadd.f32 %v3280, %v3328
        %3330 = vmatmul.bf16.gmra.mxu0 %v925
        %v3331 = vpop.f32.mrf.mxu0
        %v3332 = vadd.f32 %v3283, %v3331
        %v3333 = vpop.f32.mrf.mxu0
        %v3334 = vadd.f32 %v3285, %v3333
        %3335 = vmatmul.bf16.gmra.mxu0 %v932
        %v3336 = vpop.f32.mrf.mxu0
        %v3337 = vadd.f32 %v3288, %v3336
        %v3338 = vpop.f32.mrf.mxu0
        %v3339 = vadd.f32 %v3290, %v3338
        %3340 = vmatmul.bf16.gmra.mxu0 %v939
        %v3341 = vpop.f32.mrf.mxu0
        %v3342 = vadd.f32 %v3293, %v3341
        %v3343 = vpop.f32.mrf.mxu0
        %v3344 = vadd.f32 %v3295, %v3343
        %3345 = vmatmul.bf16.gmra.mxu0 %v946
        %v3346 = vpop.f32.mrf.mxu0
        %v3347 = vadd.f32 %v3298, %v3346
        %v3348 = vpop.f32.mrf.mxu0
        %v3349 = vadd.f32 %v3300, %v3348
        %3350 = vdwg.mxu0
        %3351 = vmatpush.bf16.msra.mxu0 %v1837
        %3352 = vmatpush.bf16.msra.mxu0 %v1833
        %3353 = vmatpush.bf16.msra.mxu0 %v1829
        %3354 = vmatpush.bf16.msra.mxu0 %v1825
        %3355 = vmatpush.bf16.msra.mxu0 %v1821
        %3356 = vmatpush.bf16.msra.mxu0 %v1817
        %3357 = vmatpush.bf16.msra.mxu0 %v1813
        %3358 = vmatpush.bf16.msra.mxu0 %v1809
        %3359 = vmatmul.bf16.gmra.mxu0 %v898
        %v3360 = vpop.f32.mrf.mxu0
        %v3361 = vadd.f32 %v3312, %v3360
        %v3362 = vpop.f32.mrf.mxu0
        %v3363 = vadd.f32 %v3314, %v3362
        %3364 = vmatmul.bf16.gmra.mxu0 %v905
        %v3365 = vpop.f32.mrf.mxu0
        %v3366 = vadd.f32 %v3317, %v3365
        %v3367 = vpop.f32.mrf.mxu0
        %v3368 = vadd.f32 %v3319, %v3367
        %3369 = vmatmul.bf16.gmra.mxu0 %v912
        %v3370 = vpop.f32.mrf.mxu0
        %v3371 = vadd.f32 %v3322, %v3370
        %v3372 = vpop.f32.mrf.mxu0
        %v3373 = vadd.f32 %v3324, %v3372
        %3374 = vmatmul.bf16.gmra.mxu0 %v919
        %v3375 = vpop.f32.mrf.mxu0
        %v3376 = vadd.f32 %v3327, %v3375
        %v3377 = vpop.f32.mrf.mxu0
        %v3378 = vadd.f32 %v3329, %v3377
        %3379 = vmatmul.bf16.gmra.mxu0 %v926
        %v3380 = vpop.f32.mrf.mxu0
        %v3381 = vadd.f32 %v3332, %v3380
        %v3382 = vpop.f32.mrf.mxu0
        %v3383 = vadd.f32 %v3334, %v3382
        %3384 = vmatmul.bf16.gmra.mxu0 %v933
        %v3385 = vpop.f32.mrf.mxu0
        %v3386 = vadd.f32 %v3337, %v3385
        %v3387 = vpop.f32.mrf.mxu0
        %v3388 = vadd.f32 %v3339, %v3387
        %3389 = vmatmul.bf16.gmra.mxu0 %v940
        %v3390 = vpop.f32.mrf.mxu0
        %v3391 = vadd.f32 %v3342, %v3390
        %v3392 = vpop.f32.mrf.mxu0
        %v3393 = vadd.f32 %v3344, %v3392
        %3394 = vmatmul.bf16.gmra.mxu0 %v947
        %v3395 = vpop.f32.mrf.mxu0
        %v3396 = vadd.f32 %v3347, %v3395
        %v3397 = vpop.f32.mrf.mxu0
        %v3398 = vadd.f32 %v3349, %v3397
        %3399 = vdwg.mxu0
        %3400 = vmatpush.bf16.msra.mxu0 %v1869
        %3401 = vmatpush.bf16.msra.mxu0 %v1865
        %3402 = vmatpush.bf16.msra.mxu0 %v1861
        %3403 = vmatpush.bf16.msra.mxu0 %v1857
        %3404 = vmatpush.bf16.msra.mxu0 %v1853
        %3405 = vmatpush.bf16.msra.mxu0 %v1849
        %3406 = vmatpush.bf16.msra.mxu0 %v1845
        %3407 = vmatpush.bf16.msra.mxu0 %v1841
        %3408 = vmatmul.bf16.gmra.mxu0 %v899
        %v3409 = vpop.f32.mrf.mxu0
        %v3410 = vadd.f32 %v3361, %v3409
        %v3411 = vpop.f32.mrf.mxu0
        %v3412 = vadd.f32 %v3363, %v3411
        %3413 = vmatmul.bf16.gmra.mxu0 %v906
        %v3414 = vpop.f32.mrf.mxu0
        %v3415 = vadd.f32 %v3366, %v3414
        %v3416 = vpop.f32.mrf.mxu0
        %v3417 = vadd.f32 %v3368, %v3416
        %3418 = vmatmul.bf16.gmra.mxu0 %v913
        %v3419 = vpop.f32.mrf.mxu0
        %v3420 = vadd.f32 %v3371, %v3419
        %v3421 = vpop.f32.mrf.mxu0
        %v3422 = vadd.f32 %v3373, %v3421
        %3423 = vmatmul.bf16.gmra.mxu0 %v920
        %v3424 = vpop.f32.mrf.mxu0
        %v3425 = vadd.f32 %v3376, %v3424
        %v3426 = vpop.f32.mrf.mxu0
        %v3427 = vadd.f32 %v3378, %v3426
        %3428 = vmatmul.bf16.gmra.mxu0 %v927
        %v3429 = vpop.f32.mrf.mxu0
        %v3430 = vadd.f32 %v3381, %v3429
        %v3431 = vpop.f32.mrf.mxu0
        %v3432 = vadd.f32 %v3383, %v3431
        %3433 = vmatmul.bf16.gmra.mxu0 %v934
        %v3434 = vpop.f32.mrf.mxu0
        %v3435 = vadd.f32 %v3386, %v3434
        %v3436 = vpop.f32.mrf.mxu0
        %v3437 = vadd.f32 %v3388, %v3436
        %3438 = vmatmul.bf16.gmra.mxu0 %v941
        %v3439 = vpop.f32.mrf.mxu0
        %v3440 = vadd.f32 %v3391, %v3439
        %v3441 = vpop.f32.mrf.mxu0
        %v3442 = vadd.f32 %v3393, %v3441
        %3443 = vmatmul.bf16.gmra.mxu0 %v948
        %v3444 = vpop.f32.mrf.mxu0
        %v3445 = vadd.f32 %v3396, %v3444
        %v3446 = vpop.f32.mrf.mxu0
        %v3447 = vadd.f32 %v3398, %v3446
        %3448 = vdwg.mxu0
        %3449 = vmatpush.bf16.msra.mxu0 %v1901
        %3450 = vmatpush.bf16.msra.mxu0 %v1897
        %3451 = vmatpush.bf16.msra.mxu0 %v1893
        %3452 = vmatpush.bf16.msra.mxu0 %v1889
        %3453 = vmatpush.bf16.msra.mxu0 %v1885
        %3454 = vmatpush.bf16.msra.mxu0 %v1881
        %3455 = vmatpush.bf16.msra.mxu0 %v1877
        %3456 = vmatpush.bf16.msra.mxu0 %v1873
        %3457 = vmatmul.bf16.gmra.mxu0 %v900
        %v3458 = vpop.f32.mrf.mxu0
        %v3459 = vadd.f32 %v3410, %v3458
        %v3460 = vpop.f32.mrf.mxu0
        %v3461 = vadd.f32 %v3412, %v3460
        %3462 = vmatmul.bf16.gmra.mxu0 %v907
        %v3463 = vpop.f32.mrf.mxu0
        %v3464 = vadd.f32 %v3415, %v3463
        %v3465 = vpop.f32.mrf.mxu0
        %v3466 = vadd.f32 %v3417, %v3465
        %3467 = vmatmul.bf16.gmra.mxu0 %v914
        %v3468 = vpop.f32.mrf.mxu0
        %v3469 = vadd.f32 %v3420, %v3468
        %v3470 = vpop.f32.mrf.mxu0
        %v3471 = vadd.f32 %v3422, %v3470
        %3472 = vmatmul.bf16.gmra.mxu0 %v921
        %v3473 = vpop.f32.mrf.mxu0
        %v3474 = vadd.f32 %v3425, %v3473
        %v3475 = vpop.f32.mrf.mxu0
        %v3476 = vadd.f32 %v3427, %v3475
        %3477 = vmatmul.bf16.gmra.mxu0 %v928
        %v3478 = vpop.f32.mrf.mxu0
        %v3479 = vadd.f32 %v3430, %v3478
        %v3480 = vpop.f32.mrf.mxu0
        %v3481 = vadd.f32 %v3432, %v3480
        %3482 = vmatmul.bf16.gmra.mxu0 %v935
        %v3483 = vpop.f32.mrf.mxu0
        %v3484 = vadd.f32 %v3435, %v3483
        %v3485 = vpop.f32.mrf.mxu0
        %v3486 = vadd.f32 %v3437, %v3485
        %3487 = vmatmul.bf16.gmra.mxu0 %v942
        %v3488 = vpop.f32.mrf.mxu0
        %v3489 = vadd.f32 %v3440, %v3488
        %v3490 = vpop.f32.mrf.mxu0
        %v3491 = vadd.f32 %v3442, %v3490
        %3492 = vmatmul.bf16.gmra.mxu0 %v949
        %v3493 = vpop.f32.mrf.mxu0
        %v3494 = vadd.f32 %v3445, %v3493
        %v3495 = vpop.f32.mrf.mxu0
        %v3496 = vadd.f32 %v3447, %v3495
        %3497 = vdwg.mxu0
        %vm3498 = vcmp.gt.f32.partialorder %v2430, 0.0
        %vm3499 = vcmp.gt.f32.partialorder %v2773, 0.0
        %vm3500 = vcmp.gt.f32.partialorder %v3116, 0.0
        %vm3501 = vcmp.gt.f32.partialorder %v3459, 0.0
        %vm3502 = vcmp.gt.f32.partialorder %v2432, 0.0
        %vm3503 = vcmp.gt.f32.partialorder %v2775, 0.0
        %vm3504 = vcmp.gt.f32.partialorder %v3118, 0.0
        %vm3505 = vcmp.gt.f32.partialorder %v3461, 0.0
        %vm3506 = vcmp.gt.f32.partialorder %v2435, 0.0
        %vm3507 = vcmp.gt.f32.partialorder %v2778, 0.0
        %vm3508 = vcmp.gt.f32.partialorder %v3121, 0.0
        %vm3509 = vcmp.gt.f32.partialorder %v3464, 0.0
        %vm3510 = vcmp.gt.f32.partialorder %v2437, 0.0
        %vm3511 = vcmp.gt.f32.partialorder %v2780, 0.0
        %vm3512 = vcmp.gt.f32.partialorder %v3123, 0.0
        %vm3513 = vcmp.gt.f32.partialorder %v3466, 0.0
        %vm3514 = vcmp.gt.f32.partialorder %v2440, 0.0
        %vm3515 = vcmp.gt.f32.partialorder %v2783, 0.0
        %vm3516 = vcmp.gt.f32.partialorder %v3126, 0.0
        %vm3517 = vcmp.gt.f32.partialorder %v3469, 0.0
        %vm3518 = vcmp.gt.f32.partialorder %v2442, 0.0
        %vm3519 = vcmp.gt.f32.partialorder %v2785, 0.0
        %vm3520 = vcmp.gt.f32.partialorder %v3128, 0.0
        %vm3521 = vcmp.gt.f32.partialorder %v3471, 0.0
        %vm3522 = vcmp.gt.f32.partialorder %v2445, 0.0
        %vm3523 = vcmp.gt.f32.partialorder %v2788, 0.0
        %vm3524 = vcmp.gt.f32.partialorder %v3131, 0.0
        %vm3525 = vcmp.gt.f32.partialorder %v3474, 0.0
        %vm3526 = vcmp.gt.f32.partialorder %v2447, 0.0
        %vm3527 = vcmp.gt.f32.partialorder %v2790, 0.0
        %vm3528 = vcmp.gt.f32.partialorder %v3133, 0.0
        %vm3529 = vcmp.gt.f32.partialorder %v3476, 0.0
        %vm3530 = vcmp.gt.f32.partialorder %v2450, 0.0
        %vm3531 = vcmp.gt.f32.partialorder %v2793, 0.0
        %vm3532 = vcmp.gt.f32.partialorder %v3136, 0.0
        %vm3533 = vcmp.gt.f32.partialorder %v3479, 0.0
        %vm3534 = vcmp.gt.f32.partialorder %v2452, 0.0
        %vm3535 = vcmp.gt.f32.partialorder %v2795, 0.0
        %vm3536 = vcmp.gt.f32.partialorder %v3138, 0.0
        %vm3537 = vcmp.gt.f32.partialorder %v3481, 0.0
        %vm3538 = vcmp.gt.f32.partialorder %v2455, 0.0
        %vm3539 = vcmp.gt.f32.partialorder %v2798, 0.0
        %vm3540 = vcmp.gt.f32.partialorder %v3141, 0.0
        %vm3541 = vcmp.gt.f32.partialorder %v3484, 0.0
        %vm3542 = vcmp.gt.f32.partialorder %v2457, 0.0
        %vm3543 = vcmp.gt.f32.partialorder %v2800, 0.0
        %vm3544 = vcmp.gt.f32.partialorder %v3143, 0.0
        %vm3545 = vcmp.gt.f32.partialorder %v3486, 0.0
        %vm3546 = vcmp.gt.f32.partialorder %v2460, 0.0
        %vm3547 = vcmp.gt.f32.partialorder %v2803, 0.0
        %vm3548 = vcmp.gt.f32.partialorder %v3146, 0.0
        %vm3549 = vcmp.gt.f32.partialorder %v3489, 0.0
        %vm3550 = vcmp.gt.f32.partialorder %v2462, 0.0
        %vm3551 = vcmp.gt.f32.partialorder %v2805, 0.0
        %vm3552 = vcmp.gt.f32.partialorder %v3148, 0.0
        %vm3553 = vcmp.gt.f32.partialorder %v3491, 0.0
        %vm3554 = vcmp.gt.f32.partialorder %v2465, 0.0
        %vm3555 = vcmp.gt.f32.partialorder %v2808, 0.0
        %vm3556 = vcmp.gt.f32.partialorder %v3151, 0.0
        %vm3557 = vcmp.gt.f32.partialorder %v3494, 0.0
        %vm3558 = vcmp.gt.f32.partialorder %v2467, 0.0
        %vm3559 = vcmp.gt.f32.partialorder %v2810, 0.0
        %vm3560 = vcmp.gt.f32.partialorder %v3153, 0.0
        %vm3561 = vcmp.gt.f32.partialorder %v3496, 0.0
        %v3562 = vmul.f32 %v2430, 0.2
        %v3563 = vmul.f32 %v2773, 0.2
        %v3564 = vmul.f32 %v3116, 0.2
        %v3565 = vmul.f32 %v3459, 0.2
        %v3566 = vmul.f32 %v2432, 0.2
        %v3567 = vmul.f32 %v2775, 0.2
        %v3568 = vmul.f32 %v3118, 0.2
        %v3569 = vmul.f32 %v3461, 0.2
        %v3570 = vmul.f32 %v2435, 0.2
        %v3571 = vmul.f32 %v2778, 0.2
        %v3572 = vmul.f32 %v3121, 0.2
        %v3573 = vmul.f32 %v3464, 0.2
        %v3574 = vmul.f32 %v2437, 0.2
        %v3575 = vmul.f32 %v2780, 0.2
        %v3576 = vmul.f32 %v3123, 0.2
        %v3577 = vmul.f32 %v3466, 0.2
        %v3578 = vmul.f32 %v2440, 0.2
        %v3579 = vmul.f32 %v2783, 0.2
        %v3580 = vmul.f32 %v3126, 0.2
        %v3581 = vmul.f32 %v3469, 0.2
        %v3582 = vmul.f32 %v2442, 0.2
        %v3583 = vmul.f32 %v2785, 0.2
        %v3584 = vmul.f32 %v3128, 0.2
        %v3585 = vmul.f32 %v3471, 0.2
        %v3586 = vmul.f32 %v2445, 0.2
        %v3587 = vmul.f32 %v2788, 0.2
        %v3588 = vmul.f32 %v3131, 0.2
        %v3589 = vmul.f32 %v3474, 0.2
        %v3590 = vmul.f32 %v2447, 0.2
        %v3591 = vmul.f32 %v2790, 0.2
        %v3592 = vmul.f32 %v3133, 0.2
        %v3593 = vmul.f32 %v3476, 0.2
        %v3594 = vmul.f32 %v2450, 0.2
        %v3595 = vmul.f32 %v2793, 0.2
        %v3596 = vmul.f32 %v3136, 0.2
        %v3597 = vmul.f32 %v3479, 0.2
        %v3598 = vmul.f32 %v2452, 0.2
        %v3599 = vmul.f32 %v2795, 0.2
        %v3600 = vmul.f32 %v3138, 0.2
        %v3601 = vmul.f32 %v3481, 0.2
        %v3602 = vmul.f32 %v2455, 0.2
        %v3603 = vmul.f32 %v2798, 0.2
        %v3604 = vmul.f32 %v3141, 0.2
        %v3605 = vmul.f32 %v3484, 0.2
        %v3606 = vmul.f32 %v2457, 0.2
        %v3607 = vmul.f32 %v2800, 0.2
        %v3608 = vmul.f32 %v3143, 0.2
        %v3609 = vmul.f32 %v3486, 0.2
        %v3610 = vmul.f32 %v2460, 0.2
        %v3611 = vmul.f32 %v2803, 0.2
        %v3612 = vmul.f32 %v3146, 0.2
        %v3613 = vmul.f32 %v3489, 0.2
        %v3614 = vmul.f32 %v2462, 0.2
        %v3615 = vmul.f32 %v2805, 0.2
        %v3616 = vmul.f32 %v3148, 0.2
        %v3617 = vmul.f32 %v3491, 0.2
        %v3618 = vmul.f32 %v2465, 0.2
        %v3619 = vmul.f32 %v2808, 0.2
        %v3620 = vmul.f32 %v3151, 0.2
        %v3621 = vmul.f32 %v3494, 0.2
        %v3622 = vmul.f32 %v2467, 0.2
        %v3623 = vmul.f32 %v2810, 0.2
        %v3624 = vmul.f32 %v3153, 0.2
        %v3625 = vmul.f32 %v3496, 0.2
        %v3626 = vsel %vm3498, %v2430, %v3562
        %v3627 = vsel %vm3499, %v2773, %v3563
        %v3628 = vsel %vm3500, %v3116, %v3564
        %v3629 = vsel %vm3501, %v3459, %v3565
        %v3630 = vsel %vm3502, %v2432, %v3566
        %v3631 = vsel %vm3503, %v2775, %v3567
        %v3632 = vsel %vm3504, %v3118, %v3568
        %v3633 = vsel %vm3505, %v3461, %v3569
        %v3634 = vsel %vm3506, %v2435, %v3570
        %v3635 = vsel %vm3507, %v2778, %v3571
        %v3636 = vsel %vm3508, %v3121, %v3572
        %v3637 = vsel %vm3509, %v3464, %v3573
        %v3638 = vsel %vm3510, %v2437, %v3574
        %v3639 = vsel %vm3511, %v2780, %v3575
        %v3640 = vsel %vm3512, %v3123, %v3576
        %v3641 = vsel %vm3513, %v3466, %v3577
        %v3642 = vsel %vm3514, %v2440, %v3578
        %v3643 = vsel %vm3515, %v2783, %v3579
        %v3644 = vsel %vm3516, %v3126, %v3580
        %v3645 = vsel %vm3517, %v3469, %v3581
        %v3646 = vsel %vm3518, %v2442, %v3582
        %v3647 = vsel %vm3519, %v2785, %v3583
        %v3648 = vsel %vm3520, %v3128, %v3584
        %v3649 = vsel %vm3521, %v3471, %v3585
        %v3650 = vsel %vm3522, %v2445, %v3586
        %v3651 = vsel %vm3523, %v2788, %v3587
        %v3652 = vsel %vm3524, %v3131, %v3588
        %v3653 = vsel %vm3525, %v3474, %v3589
        %v3654 = vsel %vm3526, %v2447, %v3590
        %v3655 = vsel %vm3527, %v2790, %v3591
        %v3656 = vsel %vm3528, %v3133, %v3592
        %v3657 = vsel %vm3529, %v3476, %v3593
        %v3658 = vsel %vm3530, %v2450, %v3594
        %v3659 = vsel %vm3531, %v2793, %v3595
        %v3660 = vsel %vm3532, %v3136, %v3596
        %v3661 = vsel %vm3533, %v3479, %v3597
        %v3662 = vsel %vm3534, %v2452, %v3598
        %v3663 = vsel %vm3535, %v2795, %v3599
        %v3664 = vsel %vm3536, %v3138, %v3600
        %v3665 = vsel %vm3537, %v3481, %v3601
        %v3666 = vsel %vm3538, %v2455, %v3602
        %v3667 = vsel %vm3539, %v2798, %v3603
        %v3668 = vsel %vm3540, %v3141, %v3604
        %v3669 = vsel %vm3541, %v3484, %v3605
        %v3670 = vsel %vm3542, %v2457, %v3606
        %v3671 = vsel %vm3543, %v2800, %v3607
        %v3672 = vsel %vm3544, %v3143, %v3608
        %v3673 = vsel %vm3545, %v3486, %v3609
        %v3674 = vsel %vm3546, %v2460, %v3610
        %v3675 = vsel %vm3547, %v2803, %v3611
        %v3676 = vsel %vm3548, %v3146, %v3612
        %v3677 = vsel %vm3549, %v3489, %v3613
        %v3678 = vsel %vm3550, %v2462, %v3614
        %v3679 = vsel %vm3551, %v2805, %v3615
        %v3680 = vsel %vm3552, %v3148, %v3616
        %v3681 = vsel %vm3553, %v3491, %v3617
        %v3682 = vsel %vm3554, %v2465, %v3618
        %v3683 = vsel %vm3555, %v2808, %v3619
        %v3684 = vsel %vm3556, %v3151, %v3620
        %v3685 = vsel %vm3557, %v3494, %v3621
        %v3686 = vsel %vm3558, %v2467, %v3622
        %v3687 = vsel %vm3559, %v2810, %v3623
        %v3688 = vsel %vm3560, %v3153, %v3624
        %v3689 = vsel %vm3561, %v3496, %v3625
        %v3690 = vpack.c.bf16 %v3630, %v3626
        %v3691 = vpack.c.bf16 %v3631, %v3627
        %v3692 = vpack.c.bf16 %v3632, %v3628
        %v3693 = vpack.c.bf16 %v3633, %v3629
        %v3694 = vpack.c.bf16 %v3638, %v3634
        %v3695 = vpack.c.bf16 %v3639, %v3635
        %v3696 = vpack.c.bf16 %v3640, %v3636
        %v3697 = vpack.c.bf16 %v3641, %v3637
        %v3698 = vpack.c.bf16 %v3646, %v3642
        %v3699 = vpack.c.bf16 %v3647, %v3643
        %v3700 = vpack.c.bf16 %v3648, %v3644
        %v3701 = vpack.c.bf16 %v3649, %v3645
        %v3702 = vpack.c.bf16 %v3654, %v3650
        %v3703 = vpack.c.bf16 %v3655, %v3651
        %v3704 = vpack.c.bf16 %v3656, %v3652
        %v3705 = vpack.c.bf16 %v3657, %v3653
        %v3706 = vpack.c.bf16 %v3662, %v3658
        %v3707 = vpack.c.bf16 %v3663, %v3659
        %v3708 = vpack.c.bf16 %v3664, %v3660
        %v3709 = vpack.c.bf16 %v3665, %v3661
        %v3710 = vpack.c.bf16 %v3670, %v3666
        %v3711 = vpack.c.bf16 %v3671, %v3667
        %v3712 = vpack.c.bf16 %v3672, %v3668
        %v3713 = vpack.c.bf16 %v3673, %v3669
        %v3714 = vpack.c.bf16 %v3678, %v3674
        %v3715 = vpack.c.bf16 %v3679, %v3675
        %v3716 = vpack.c.bf16 %v3680, %v3676
        %v3717 = vpack.c.bf16 %v3681, %v3677
        %v3718 = vpack.c.bf16 %v3686, %v3682
        %v3719 = vpack.c.bf16 %v3687, %v3683
        %v3720 = vpack.c.bf16 %v3688, %v3684
        %v3721 = vpack.c.bf16 %v3689, %v3685
        %v3722 = vld [vmem:[#allocation9] sm:$0xff]
        %v3723 = vld [vmem:[#allocation9 + $0x8] sm:$0xff]
        %v3724 = vld [vmem:[#allocation9 + $0x10] sm:$0xff]
        %v3725 = vld [vmem:[#allocation9 + $0x18] sm:$0xff]
        %v3726 = vld [vmem:[#allocation9 + $0x20] sm:$0xff]
        %v3727 = vld [vmem:[#allocation9 + $0x28] sm:$0xff]
        %v3728 = vld [vmem:[#allocation9 + $0x30] sm:$0xff]
        %v3729 = vld [vmem:[#allocation9 + $0x38] sm:$0xff]
        %v3730 = vld [vmem:[#allocation9 + $0x40] sm:$0xff]
        %v3731 = vld [vmem:[#allocation9 + $0x48] sm:$0xff]
        %v3732 = vld [vmem:[#allocation9 + $0x50] sm:$0xff]
        %v3733 = vld [vmem:[#allocation9 + $0x58] sm:$0xff]
        %v3734 = vld [vmem:[#allocation9 + $0x60] sm:$0xff]
        %v3735 = vld [vmem:[#allocation9 + $0x68] sm:$0xff]
        %v3736 = vld [vmem:[#allocation9 + $0x70] sm:$0xff]
        %v3737 = vld [vmem:[#allocation9 + $0x78] sm:$0xff]
        %v3738 = vld [vmem:[#allocation9 + $0x80] sm:$0xff]
        %v3739 = vld [vmem:[#allocation9 + $0x88] sm:$0xff]
        %v3740 = vld [vmem:[#allocation9 + $0x90] sm:$0xff]
        %v3741 = vld [vmem:[#allocation9 + $0x98] sm:$0xff]
        %v3742 = vld [vmem:[#allocation9 + $0xa0] sm:$0xff]
        %v3743 = vld [vmem:[#allocation9 + $0xa8] sm:$0xff]
        %v3744 = vld [vmem:[#allocation9 + $0xb0] sm:$0xff]
        %v3745 = vld [vmem:[#allocation9 + $0xb8] sm:$0xff]
        %v3746 = vld [vmem:[#allocation9 + $0xc0] sm:$0xff]
        %v3747 = vld [vmem:[#allocation9 + $0xc8] sm:$0xff]
        %v3748 = vld [vmem:[#allocation9 + $0xd0] sm:$0xff]
        %v3749 = vld [vmem:[#allocation9 + $0xd8] sm:$0xff]
        %v3750 = vld [vmem:[#allocation9 + $0xe0] sm:$0xff]
        %v3751 = vld [vmem:[#allocation9 + $0xe8] sm:$0xff]
        %v3752 = vld [vmem:[#allocation9 + $0xf0] sm:$0xff]
        %v3753 = vld [vmem:[#allocation9 + $0xf8] sm:$0xff]
        %v3754 = vld [vmem:[#allocation9 + $0x100] sm:$0xff]
        %v3755 = vld [vmem:[#allocation9 + $0x108] sm:$0xff]
        %v3756 = vld [vmem:[#allocation9 + $0x110] sm:$0xff]
        %v3757 = vld [vmem:[#allocation9 + $0x118] sm:$0xff]
        %v3758 = vld [vmem:[#allocation9 + $0x120] sm:$0xff]
        %v3759 = vld [vmem:[#allocation9 + $0x128] sm:$0xff]
        %v3760 = vld [vmem:[#allocation9 + $0x130] sm:$0xff]
        %v3761 = vld [vmem:[#allocation9 + $0x138] sm:$0xff]
        %v3762 = vld [vmem:[#allocation9 + $0x140] sm:$0xff]
        %v3763 = vld [vmem:[#allocation9 + $0x148] sm:$0xff]
        %v3764 = vld [vmem:[#allocation9 + $0x150] sm:$0xff]
        %v3765 = vld [vmem:[#allocation9 + $0x158] sm:$0xff]
        %v3766 = vld [vmem:[#allocation9 + $0x160] sm:$0xff]
        %v3767 = vld [vmem:[#allocation9 + $0x168] sm:$0xff]
        %v3768 = vld [vmem:[#allocation9 + $0x170] sm:$0xff]
        %v3769 = vld [vmem:[#allocation9 + $0x178] sm:$0xff]
        %v3770 = vld [vmem:[#allocation9 + $0x180] sm:$0xff]
        %v3771 = vld [vmem:[#allocation9 + $0x188] sm:$0xff]
        %v3772 = vld [vmem:[#allocation9 + $0x190] sm:$0xff]
        %v3773 = vld [vmem:[#allocation9 + $0x198] sm:$0xff]
        %v3774 = vld [vmem:[#allocation9 + $0x1a0] sm:$0xff]
        %v3775 = vld [vmem:[#allocation9 + $0x1a8] sm:$0xff]
        %v3776 = vld [vmem:[#allocation9 + $0x1b0] sm:$0xff]
        %v3777 = vld [vmem:[#allocation9 + $0x1b8] sm:$0xff]
        %v3778 = vld [vmem:[#allocation9 + $0x1c0] sm:$0xff]
        %v3779 = vld [vmem:[#allocation9 + $0x1c8] sm:$0xff]
        %v3780 = vld [vmem:[#allocation9 + $0x1d0] sm:$0xff]
        %v3781 = vld [vmem:[#allocation9 + $0x1d8] sm:$0xff]
        %v3782 = vld [vmem:[#allocation9 + $0x1e0] sm:$0xff]
        %v3783 = vld [vmem:[#allocation9 + $0x1e8] sm:$0xff]
        %v3784 = vld [vmem:[#allocation9 + $0x1f0] sm:$0xff]
        %v3785 = vld [vmem:[#allocation9 + $0x1f8] sm:$0xff]
        %v3786 = vld [vmem:[%s4] sm:$0x3]
        %v3788 = vperm.slane %v3786, 0
        %v3789 = vperm.slane %v3786, 1
        %v3856 = vunpack.c.l.b16 %v3722
        %v3857 = vunpack.c.h.b16 %v3722
        %v3858 = vunpack.c.l.b16 %v3723
        %v3859 = vunpack.c.h.b16 %v3723
        %v3860 = vunpack.c.l.b16 %v3724
        %v3861 = vunpack.c.h.b16 %v3724
        %v3862 = vunpack.c.l.b16 %v3725
        %v3863 = vunpack.c.h.b16 %v3725
        %v3864 = vunpack.c.l.b16 %v3726
        %v3865 = vunpack.c.h.b16 %v3726
        %v3866 = vunpack.c.l.b16 %v3727
        %v3867 = vunpack.c.h.b16 %v3727
        %v3868 = vunpack.c.l.b16 %v3728
        %v3869 = vunpack.c.h.b16 %v3728
        %v3870 = vunpack.c.l.b16 %v3729
        %v3871 = vunpack.c.h.b16 %v3729
        %v3872 = vunpack.c.l.b16 %v3730
        %v3873 = vunpack.c.h.b16 %v3730
        %v3874 = vunpack.c.l.b16 %v3731
        %v3875 = vunpack.c.h.b16 %v3731
        %v3876 = vunpack.c.l.b16 %v3732
        %v3877 = vunpack.c.h.b16 %v3732
        %v3878 = vunpack.c.l.b16 %v3733
        %v3879 = vunpack.c.h.b16 %v3733
        %v3880 = vunpack.c.l.b16 %v3734
        %v3881 = vunpack.c.h.b16 %v3734
        %v3882 = vunpack.c.l.b16 %v3735
        %v3883 = vunpack.c.h.b16 %v3735
        %v3884 = vunpack.c.l.b16 %v3736
        %v3885 = vunpack.c.h.b16 %v3736
        %v3886 = vunpack.c.l.b16 %v3737
        %v3887 = vunpack.c.h.b16 %v3737
        %v3888 = vunpack.c.l.b16 %v3738
        %v3889 = vunpack.c.h.b16 %v3738
        %v3890 = vunpack.c.l.b16 %v3739
        %v3891 = vunpack.c.h.b16 %v3739
        %v3892 = vunpack.c.l.b16 %v3740
        %v3893 = vunpack.c.h.b16 %v3740
        %v3894 = vunpack.c.l.b16 %v3741
        %v3895 = vunpack.c.h.b16 %v3741
        %v3896 = vunpack.c.l.b16 %v3742
        %v3897 = vunpack.c.h.b16 %v3742
        %v3898 = vunpack.c.l.b16 %v3743
        %v3899 = vunpack.c.h.b16 %v3743
        %v3900 = vunpack.c.l.b16 %v3744
        %v3901 = vunpack.c.h.b16 %v3744
        %v3902 = vunpack.c.l.b16 %v3745
        %v3903 = vunpack.c.h.b16 %v3745
        %v3904 = vunpack.c.l.b16 %v3746
        %v3905 = vunpack.c.h.b16 %v3746
        %v3906 = vunpack.c.l.b16 %v3747
        %v3907 = vunpack.c.h.b16 %v3747
        %v3908 = vunpack.c.l.b16 %v3748
        %v3909 = vunpack.c.h.b16 %v3748
        %v3910 = vunpack.c.l.b16 %v3749
        %v3911 = vunpack.c.h.b16 %v3749
        %v3912 = vunpack.c.l.b16 %v3750
        %v3913 = vunpack.c.h.b16 %v3750
        %v3914 = vunpack.c.l.b16 %v3751
        %v3915 = vunpack.c.h.b16 %v3751
        %v3916 = vunpack.c.l.b16 %v3752
        %v3917 = vunpack.c.h.b16 %v3752
        %v3918 = vunpack.c.l.b16 %v3753
        %v3919 = vunpack.c.h.b16 %v3753
        %v3920 = vunpack.c.l.b16 %v3754
        %v3921 = vunpack.c.h.b16 %v3754
        %v3922 = vunpack.c.l.b16 %v3755
        %v3923 = vunpack.c.h.b16 %v3755
        %v3924 = vunpack.c.l.b16 %v3756
        %v3925 = vunpack.c.h.b16 %v3756
        %v3926 = vunpack.c.l.b16 %v3757
        %v3927 = vunpack.c.h.b16 %v3757
        %v3928 = vunpack.c.l.b16 %v3758
        %v3929 = vunpack.c.h.b16 %v3758
        %v3930 = vunpack.c.l.b16 %v3759
        %v3931 = vunpack.c.h.b16 %v3759
        %v3932 = vunpack.c.l.b16 %v3760
        %v3933 = vunpack.c.h.b16 %v3760
        %v3934 = vunpack.c.l.b16 %v3761
        %v3935 = vunpack.c.h.b16 %v3761
        %v3936 = vunpack.c.l.b16 %v3762
        %v3937 = vunpack.c.h.b16 %v3762
        %v3938 = vunpack.c.l.b16 %v3763
        %v3939 = vunpack.c.h.b16 %v3763
        %v3940 = vunpack.c.l.b16 %v3764
        %v3941 = vunpack.c.h.b16 %v3764
        %v3942 = vunpack.c.l.b16 %v3765
        %v3943 = vunpack.c.h.b16 %v3765
        %v3944 = vunpack.c.l.b16 %v3766
        %v3945 = vunpack.c.h.b16 %v3766
        %v3946 = vunpack.c.l.b16 %v3767
        %v3947 = vunpack.c.h.b16 %v3767
        %v3948 = vunpack.c.l.b16 %v3768
        %v3949 = vunpack.c.h.b16 %v3768
        %v3950 = vunpack.c.l.b16 %v3769
        %v3951 = vunpack.c.h.b16 %v3769
        %v3952 = vunpack.c.l.b16 %v3770
        %v3953 = vunpack.c.h.b16 %v3770
        %v3954 = vunpack.c.l.b16 %v3771
        %v3955 = vunpack.c.h.b16 %v3771
        %v3956 = vunpack.c.l.b16 %v3772
        %v3957 = vunpack.c.h.b16 %v3772
        %v3958 = vunpack.c.l.b16 %v3773
        %v3959 = vunpack.c.h.b16 %v3773
        %v3960 = vunpack.c.l.b16 %v3774
        %v3961 = vunpack.c.h.b16 %v3774
        %v3962 = vunpack.c.l.b16 %v3775
        %v3963 = vunpack.c.h.b16 %v3775
        %v3964 = vunpack.c.l.b16 %v3776
        %v3965 = vunpack.c.h.b16 %v3776
        %v3966 = vunpack.c.l.b16 %v3777
        %v3967 = vunpack.c.h.b16 %v3777
        %v3968 = vunpack.c.l.b16 %v3778
        %v3969 = vunpack.c.h.b16 %v3778
        %v3970 = vunpack.c.l.b16 %v3779
        %v3971 = vunpack.c.h.b16 %v3779
        %v3972 = vunpack.c.l.b16 %v3780
        %v3973 = vunpack.c.h.b16 %v3780
        %v3974 = vunpack.c.l.b16 %v3781
        %v3975 = vunpack.c.h.b16 %v3781
        %v3976 = vunpack.c.l.b16 %v3782
        %v3977 = vunpack.c.h.b16 %v3782
        %v3978 = vunpack.c.l.b16 %v3783
        %v3979 = vunpack.c.h.b16 %v3783
        %v3980 = vunpack.c.l.b16 %v3784
        %v3981 = vunpack.c.h.b16 %v3784
        %v3982 = vunpack.c.l.b16 %v3785
        %v3983 = vunpack.c.h.b16 %v3785
        %v3984 = vpack.c.b16 %v3858, %v3856
        %v3985 = vpack.c.b16 %v3859, %v3857
        %v3986 = vpack.c.b16 %v3862, %v3860
        %v3987 = vpack.c.b16 %v3863, %v3861
        %v3988 = vpack.c.b16 %v3866, %v3864
        %v3989 = vpack.c.b16 %v3867, %v3865
        %v3990 = vpack.c.b16 %v3870, %v3868
        %v3991 = vpack.c.b16 %v3871, %v3869
        %v3992 = vpack.c.b16 %v3874, %v3872
        %v3993 = vpack.c.b16 %v3875, %v3873
        %v3994 = vpack.c.b16 %v3878, %v3876
        %v3995 = vpack.c.b16 %v3879, %v3877
        %v3996 = vpack.c.b16 %v3882, %v3880
        %v3997 = vpack.c.b16 %v3883, %v3881
        %v3998 = vpack.c.b16 %v3886, %v3884
        %v3999 = vpack.c.b16 %v3887, %v3885
        %v4000 = vpack.c.b16 %v3890, %v3888
        %v4001 = vpack.c.b16 %v3891, %v3889
        %v4002 = vpack.c.b16 %v3894, %v3892
        %v4003 = vpack.c.b16 %v3895, %v3893
        %v4004 = vpack.c.b16 %v3898, %v3896
        %v4005 = vpack.c.b16 %v3899, %v3897
        %v4006 = vpack.c.b16 %v3902, %v3900
        %v4007 = vpack.c.b16 %v3903, %v3901
        %v4008 = vpack.c.b16 %v3906, %v3904
        %v4009 = vpack.c.b16 %v3907, %v3905
        %v4010 = vpack.c.b16 %v3910, %v3908
        %v4011 = vpack.c.b16 %v3911, %v3909
        %v4012 = vpack.c.b16 %v3914, %v3912
        %v4013 = vpack.c.b16 %v3915, %v3913
        %v4014 = vpack.c.b16 %v3918, %v3916
        %v4015 = vpack.c.b16 %v3919, %v3917
        %v4016 = vpack.c.b16 %v3922, %v3920
        %v4017 = vpack.c.b16 %v3923, %v3921
        %v4018 = vpack.c.b16 %v3926, %v3924
        %v4019 = vpack.c.b16 %v3927, %v3925
        %v4020 = vpack.c.b16 %v3930, %v3928
        %v4021 = vpack.c.b16 %v3931, %v3929
        %v4022 = vpack.c.b16 %v3934, %v3932
        %v4023 = vpack.c.b16 %v3935, %v3933
        %v4024 = vpack.c.b16 %v3938, %v3936
        %v4025 = vpack.c.b16 %v3939, %v3937
        %v4026 = vpack.c.b16 %v3942, %v3940
        %v4027 = vpack.c.b16 %v3943, %v3941
        %v4028 = vpack.c.b16 %v3946, %v3944
        %v4029 = vpack.c.b16 %v3947, %v3945
        %v4030 = vpack.c.b16 %v3950, %v3948
        %v4031 = vpack.c.b16 %v3951, %v3949
        %v4032 = vpack.c.b16 %v3954, %v3952
        %v4033 = vpack.c.b16 %v3955, %v3953
        %v4034 = vpack.c.b16 %v3958, %v3956
        %v4035 = vpack.c.b16 %v3959, %v3957
        %v4036 = vpack.c.b16 %v3962, %v3960
        %v4037 = vpack.c.b16 %v3963, %v3961
        %v4038 = vpack.c.b16 %v3966, %v3964
        %v4039 = vpack.c.b16 %v3967, %v3965
        %v4040 = vpack.c.b16 %v3970, %v3968
        %v4041 = vpack.c.b16 %v3971, %v3969
        %v4042 = vpack.c.b16 %v3974, %v3972
        %v4043 = vpack.c.b16 %v3975, %v3973
        %v4044 = vpack.c.b16 %v3978, %v3976
        %v4045 = vpack.c.b16 %v3979, %v3977
        %v4046 = vpack.c.b16 %v3982, %v3980
        %v4047 = vpack.c.b16 %v3983, %v3981
        %4112 = vmatpush.bf16.msra.mxu0 %v3998
        %4113 = vmatpush.bf16.msra.mxu0 %v3996
        %4114 = vmatpush.bf16.msra.mxu0 %v3994
        %4115 = vmatpush.bf16.msra.mxu0 %v3992
        %4116 = vmatpush.bf16.msra.mxu0 %v3990
        %4117 = vmatpush.bf16.msra.mxu0 %v3988
        %4118 = vmatpush.bf16.msra.mxu0 %v3986
        %4119 = vmatpush.bf16.msra.mxu0 %v3984
        %4120 = vmatmul.bf16.gmra.mxu0 %v3690
        %v4121 = vpop.f32.mrf.mxu0
        %v4122 = vadd.f32 %v3788, %v4121
        %v4123 = vpop.f32.mrf.mxu0
        %v4124 = vadd.f32 %v3788, %v4123
        %4125 = vmatmul.bf16.gmra.mxu0 %v3694
        %v4126 = vpop.f32.mrf.mxu0
        %v4127 = vadd.f32 %v3788, %v4126
        %v4128 = vpop.f32.mrf.mxu0
        %v4129 = vadd.f32 %v3788, %v4128
        %4130 = vmatmul.bf16.gmra.mxu0 %v3698
        %v4131 = vpop.f32.mrf.mxu0
        %v4132 = vadd.f32 %v3788, %v4131
        %v4133 = vpop.f32.mrf.mxu0
        %v4134 = vadd.f32 %v3788, %v4133
        %4135 = vmatmul.bf16.gmra.mxu0 %v3702
        %v4136 = vpop.f32.mrf.mxu0
        %v4137 = vadd.f32 %v3788, %v4136
        %v4138 = vpop.f32.mrf.mxu0
        %v4139 = vadd.f32 %v3788, %v4138
        %4140 = vmatmul.bf16.gmra.mxu0 %v3706
        %v4141 = vpop.f32.mrf.mxu0
        %v4142 = vadd.f32 %v3788, %v4141
        %v4143 = vpop.f32.mrf.mxu0
        %v4144 = vadd.f32 %v3788, %v4143
        %4145 = vmatmul.bf16.gmra.mxu0 %v3710
        %v4146 = vpop.f32.mrf.mxu0
        %v4147 = vadd.f32 %v3788, %v4146
        %v4148 = vpop.f32.mrf.mxu0
        %v4149 = vadd.f32 %v3788, %v4148
        %4150 = vmatmul.bf16.gmra.mxu0 %v3714
        %v4151 = vpop.f32.mrf.mxu0
        %v4152 = vadd.f32 %v3788, %v4151
        %v4153 = vpop.f32.mrf.mxu0
        %v4154 = vadd.f32 %v3788, %v4153
        %4155 = vmatmul.bf16.gmra.mxu0 %v3718
        %v4156 = vpop.f32.mrf.mxu0
        %v4157 = vadd.f32 %v3788, %v4156
        %v4158 = vpop.f32.mrf.mxu0
        %v4159 = vadd.f32 %v3788, %v4158
        %4160 = vdwg.mxu0
        %4161 = vmatpush.bf16.msra.mxu0 %v4014
        %4162 = vmatpush.bf16.msra.mxu0 %v4012
        %4163 = vmatpush.bf16.msra.mxu0 %v4010
        %4164 = vmatpush.bf16.msra.mxu0 %v4008
        %4165 = vmatpush.bf16.msra.mxu0 %v4006
        %4166 = vmatpush.bf16.msra.mxu0 %v4004
        %4167 = vmatpush.bf16.msra.mxu0 %v4002
        %4168 = vmatpush.bf16.msra.mxu0 %v4000
        %4169 = vmatmul.bf16.gmra.mxu0 %v3691
        %v4170 = vpop.f32.mrf.mxu0
        %v4171 = vadd.f32 %v4122, %v4170
        %v4172 = vpop.f32.mrf.mxu0
        %v4173 = vadd.f32 %v4124, %v4172
        %4174 = vmatmul.bf16.gmra.mxu0 %v3695
        %v4175 = vpop.f32.mrf.mxu0
        %v4176 = vadd.f32 %v4127, %v4175
        %v4177 = vpop.f32.mrf.mxu0
        %v4178 = vadd.f32 %v4129, %v4177
        %4179 = vmatmul.bf16.gmra.mxu0 %v3699
        %v4180 = vpop.f32.mrf.mxu0
        %v4181 = vadd.f32 %v4132, %v4180
        %v4182 = vpop.f32.mrf.mxu0
        %v4183 = vadd.f32 %v4134, %v4182
        %4184 = vmatmul.bf16.gmra.mxu0 %v3703
        %v4185 = vpop.f32.mrf.mxu0
        %v4186 = vadd.f32 %v4137, %v4185
        %v4187 = vpop.f32.mrf.mxu0
        %v4188 = vadd.f32 %v4139, %v4187
        %4189 = vmatmul.bf16.gmra.mxu0 %v3707
        %v4190 = vpop.f32.mrf.mxu0
        %v4191 = vadd.f32 %v4142, %v4190
        %v4192 = vpop.f32.mrf.mxu0
        %v4193 = vadd.f32 %v4144, %v4192
        %4194 = vmatmul.bf16.gmra.mxu0 %v3711
        %v4195 = vpop.f32.mrf.mxu0
        %v4196 = vadd.f32 %v4147, %v4195
        %v4197 = vpop.f32.mrf.mxu0
        %v4198 = vadd.f32 %v4149, %v4197
        %4199 = vmatmul.bf16.gmra.mxu0 %v3715
        %v4200 = vpop.f32.mrf.mxu0
        %v4201 = vadd.f32 %v4152, %v4200
        %v4202 = vpop.f32.mrf.mxu0
        %v4203 = vadd.f32 %v4154, %v4202
        %4204 = vmatmul.bf16.gmra.mxu0 %v3719
        %v4205 = vpop.f32.mrf.mxu0
        %v4206 = vadd.f32 %v4157, %v4205
        %v4207 = vpop.f32.mrf.mxu0
        %v4208 = vadd.f32 %v4159, %v4207
        %4209 = vdwg.mxu0
        %4210 = vmatpush.bf16.msra.mxu0 %v4030
        %4211 = vmatpush.bf16.msra.mxu0 %v4028
        %4212 = vmatpush.bf16.msra.mxu0 %v4026
        %4213 = vmatpush.bf16.msra.mxu0 %v4024
        %4214 = vmatpush.bf16.msra.mxu0 %v4022
        %4215 = vmatpush.bf16.msra.mxu0 %v4020
        %4216 = vmatpush.bf16.msra.mxu0 %v4018
        %4217 = vmatpush.bf16.msra.mxu0 %v4016
        %4218 = vmatmul.bf16.gmra.mxu0 %v3692
        %v4219 = vpop.f32.mrf.mxu0
        %v4220 = vadd.f32 %v4171, %v4219
        %v4221 = vpop.f32.mrf.mxu0
        %v4222 = vadd.f32 %v4173, %v4221
        %4223 = vmatmul.bf16.gmra.mxu0 %v3696
        %v4224 = vpop.f32.mrf.mxu0
        %v4225 = vadd.f32 %v4176, %v4224
        %v4226 = vpop.f32.mrf.mxu0
        %v4227 = vadd.f32 %v4178, %v4226
        %4228 = vmatmul.bf16.gmra.mxu0 %v3700
        %v4229 = vpop.f32.mrf.mxu0
        %v4230 = vadd.f32 %v4181, %v4229
        %v4231 = vpop.f32.mrf.mxu0
        %v4232 = vadd.f32 %v4183, %v4231
        %4233 = vmatmul.bf16.gmra.mxu0 %v3704
        %v4234 = vpop.f32.mrf.mxu0
        %v4235 = vadd.f32 %v4186, %v4234
        %v4236 = vpop.f32.mrf.mxu0
        %v4237 = vadd.f32 %v4188, %v4236
        %4238 = vmatmul.bf16.gmra.mxu0 %v3708
        %v4239 = vpop.f32.mrf.mxu0
        %v4240 = vadd.f32 %v4191, %v4239
        %v4241 = vpop.f32.mrf.mxu0
        %v4242 = vadd.f32 %v4193, %v4241
        %4243 = vmatmul.bf16.gmra.mxu0 %v3712
        %v4244 = vpop.f32.mrf.mxu0
        %v4245 = vadd.f32 %v4196, %v4244
        %v4246 = vpop.f32.mrf.mxu0
        %v4247 = vadd.f32 %v4198, %v4246
        %4248 = vmatmul.bf16.gmra.mxu0 %v3716
        %v4249 = vpop.f32.mrf.mxu0
        %v4250 = vadd.f32 %v4201, %v4249
        %v4251 = vpop.f32.mrf.mxu0
        %v4252 = vadd.f32 %v4203, %v4251
        %4253 = vmatmul.bf16.gmra.mxu0 %v3720
        %v4254 = vpop.f32.mrf.mxu0
        %v4255 = vadd.f32 %v4206, %v4254
        %v4256 = vpop.f32.mrf.mxu0
        %v4257 = vadd.f32 %v4208, %v4256
        %4258 = vdwg.mxu0
        %4259 = vmatpush.bf16.msra.mxu0 %v4046
        %4260 = vmatpush.bf16.msra.mxu0 %v4044
        %4261 = vmatpush.bf16.msra.mxu0 %v4042
        %4262 = vmatpush.bf16.msra.mxu0 %v4040
        %4263 = vmatpush.bf16.msra.mxu0 %v4038
        %4264 = vmatpush.bf16.msra.mxu0 %v4036
        %4265 = vmatpush.bf16.msra.mxu0 %v4034
        %4266 = vmatpush.bf16.msra.mxu0 %v4032
        %4267 = vmatmul.bf16.gmra.mxu0 %v3693
        %v4268 = vpop.f32.mrf.mxu0
        %v4269 = vadd.f32 %v4220, %v4268
        %v4270 = vpop.f32.mrf.mxu0
        %v4271 = vadd.f32 %v4222, %v4270
        %4272 = vmatmul.bf16.gmra.mxu0 %v3697
        %v4273 = vpop.f32.mrf.mxu0
        %v4274 = vadd.f32 %v4225, %v4273
        %v4275 = vpop.f32.mrf.mxu0
        %v4276 = vadd.f32 %v4227, %v4275
        %4277 = vmatmul.bf16.gmra.mxu0 %v3701
        %v4278 = vpop.f32.mrf.mxu0
        %v4279 = vadd.f32 %v4230, %v4278
        %v4280 = vpop.f32.mrf.mxu0
        %v4281 = vadd.f32 %v4232, %v4280
        %4282 = vmatmul.bf16.gmra.mxu0 %v3705
        %v4283 = vpop.f32.mrf.mxu0
        %v4284 = vadd.f32 %v4235, %v4283
        %v4285 = vpop.f32.mrf.mxu0
        %v4286 = vadd.f32 %v4237, %v4285
        %4287 = vmatmul.bf16.gmra.mxu0 %v3709
        %v4288 = vpop.f32.mrf.mxu0
        %v4289 = vadd.f32 %v4240, %v4288
        %v4290 = vpop.f32.mrf.mxu0
        %v4291 = vadd.f32 %v4242, %v4290
        %4292 = vmatmul.bf16.gmra.mxu0 %v3713
        %v4293 = vpop.f32.mrf.mxu0
        %v4294 = vadd.f32 %v4245, %v4293
        %v4295 = vpop.f32.mrf.mxu0
        %v4296 = vadd.f32 %v4247, %v4295
        %4297 = vmatmul.bf16.gmra.mxu0 %v3717
        %v4298 = vpop.f32.mrf.mxu0
        %v4299 = vadd.f32 %v4250, %v4298
        %v4300 = vpop.f32.mrf.mxu0
        %v4301 = vadd.f32 %v4252, %v4300
        %4302 = vmatmul.bf16.gmra.mxu0 %v3721
        %v4303 = vpop.f32.mrf.mxu0
        %v4304 = vadd.f32 %v4255, %v4303
        %v4305 = vpop.f32.mrf.mxu0
        %v4306 = vadd.f32 %v4257, %v4305
        %4307 = vdwg.mxu0
        %4308 = vmatpush.bf16.msra.mxu0 %v3999
        %4309 = vmatpush.bf16.msra.mxu0 %v3997
        %4310 = vmatpush.bf16.msra.mxu0 %v3995
        %4311 = vmatpush.bf16.msra.mxu0 %v3993
        %4312 = vmatpush.bf16.msra.mxu0 %v3991
        %4313 = vmatpush.bf16.msra.mxu0 %v3989
        %4314 = vmatpush.bf16.msra.mxu0 %v3987
        %4315 = vmatpush.bf16.msra.mxu0 %v3985
        %4316 = vmatmul.bf16.gmra.mxu0 %v3690
        %v4317 = vpop.f32.mrf.mxu0
        %v4318 = vadd.f32 %v3789, %v4317
        %v4319 = vpop.f32.mrf.mxu0
        %v4320 = vadd.f32 %v3789, %v4319
        %4321 = vmatmul.bf16.gmra.mxu0 %v3694
        %v4322 = vpop.f32.mrf.mxu0
        %v4323 = vadd.f32 %v3789, %v4322
        %v4324 = vpop.f32.mrf.mxu0
        %v4325 = vadd.f32 %v3789, %v4324
        %4326 = vmatmul.bf16.gmra.mxu0 %v3698
        %v4327 = vpop.f32.mrf.mxu0
        %v4328 = vadd.f32 %v3789, %v4327
        %v4329 = vpop.f32.mrf.mxu0
        %v4330 = vadd.f32 %v3789, %v4329
        %4331 = vmatmul.bf16.gmra.mxu0 %v3702
        %v4332 = vpop.f32.mrf.mxu0
        %v4333 = vadd.f32 %v3789, %v4332
        %v4334 = vpop.f32.mrf.mxu0
        %v4335 = vadd.f32 %v3789, %v4334
        %4336 = vmatmul.bf16.gmra.mxu0 %v3706
        %v4337 = vpop.f32.mrf.mxu0
        %v4338 = vadd.f32 %v3789, %v4337
        %v4339 = vpop.f32.mrf.mxu0
        %v4340 = vadd.f32 %v3789, %v4339
        %4341 = vmatmul.bf16.gmra.mxu0 %v3710
        %v4342 = vpop.f32.mrf.mxu0
        %v4343 = vadd.f32 %v3789, %v4342
        %v4344 = vpop.f32.mrf.mxu0
        %v4345 = vadd.f32 %v3789, %v4344
        %4346 = vmatmul.bf16.gmra.mxu0 %v3714
        %v4347 = vpop.f32.mrf.mxu0
        %v4348 = vadd.f32 %v3789, %v4347
        %v4349 = vpop.f32.mrf.mxu0
        %v4350 = vadd.f32 %v3789, %v4349
        %4351 = vmatmul.bf16.gmra.mxu0 %v3718
        %v4352 = vpop.f32.mrf.mxu0
        %v4353 = vadd.f32 %v3789, %v4352
        %v4354 = vpop.f32.mrf.mxu0
        %v4355 = vadd.f32 %v3789, %v4354
        %4356 = vdwg.mxu0
        %4357 = vmatpush.bf16.msra.mxu0 %v4015
        %4358 = vmatpush.bf16.msra.mxu0 %v4013
        %4359 = vmatpush.bf16.msra.mxu0 %v4011
        %4360 = vmatpush.bf16.msra.mxu0 %v4009
        %4361 = vmatpush.bf16.msra.mxu0 %v4007
        %4362 = vmatpush.bf16.msra.mxu0 %v4005
        %4363 = vmatpush.bf16.msra.mxu0 %v4003
        %4364 = vmatpush.bf16.msra.mxu0 %v4001
        %4365 = vmatmul.bf16.gmra.mxu0 %v3691
        %v4366 = vpop.f32.mrf.mxu0
        %v4367 = vadd.f32 %v4318, %v4366
        %v4368 = vpop.f32.mrf.mxu0
        %v4369 = vadd.f32 %v4320, %v4368
        %4370 = vmatmul.bf16.gmra.mxu0 %v3695
        %v4371 = vpop.f32.mrf.mxu0
        %v4372 = vadd.f32 %v4323, %v4371
        %v4373 = vpop.f32.mrf.mxu0
        %v4374 = vadd.f32 %v4325, %v4373
        %4375 = vmatmul.bf16.gmra.mxu0 %v3699
        %v4376 = vpop.f32.mrf.mxu0
        %v4377 = vadd.f32 %v4328, %v4376
        %v4378 = vpop.f32.mrf.mxu0
        %v4379 = vadd.f32 %v4330, %v4378
        %4380 = vmatmul.bf16.gmra.mxu0 %v3703
        %v4381 = vpop.f32.mrf.mxu0
        %v4382 = vadd.f32 %v4333, %v4381
        %v4383 = vpop.f32.mrf.mxu0
        %v4384 = vadd.f32 %v4335, %v4383
        %4385 = vmatmul.bf16.gmra.mxu0 %v3707
        %v4386 = vpop.f32.mrf.mxu0
        %v4387 = vadd.f32 %v4338, %v4386
        %v4388 = vpop.f32.mrf.mxu0
        %v4389 = vadd.f32 %v4340, %v4388
        %4390 = vmatmul.bf16.gmra.mxu0 %v3711
        %v4391 = vpop.f32.mrf.mxu0
        %v4392 = vadd.f32 %v4343, %v4391
        %v4393 = vpop.f32.mrf.mxu0
        %v4394 = vadd.f32 %v4345, %v4393
        %4395 = vmatmul.bf16.gmra.mxu0 %v3715
        %v4396 = vpop.f32.mrf.mxu0
        %v4397 = vadd.f32 %v4348, %v4396
        %v4398 = vpop.f32.mrf.mxu0
        %v4399 = vadd.f32 %v4350, %v4398
        %4400 = vmatmul.bf16.gmra.mxu0 %v3719
        %v4401 = vpop.f32.mrf.mxu0
        %v4402 = vadd.f32 %v4353, %v4401
        %v4403 = vpop.f32.mrf.mxu0
        %v4404 = vadd.f32 %v4355, %v4403
        %4405 = vdwg.mxu0
        %4406 = vmatpush.bf16.msra.mxu0 %v4031
        %4407 = vmatpush.bf16.msra.mxu0 %v4029
        %4408 = vmatpush.bf16.msra.mxu0 %v4027
        %4409 = vmatpush.bf16.msra.mxu0 %v4025
        %4410 = vmatpush.bf16.msra.mxu0 %v4023
        %4411 = vmatpush.bf16.msra.mxu0 %v4021
        %4412 = vmatpush.bf16.msra.mxu0 %v4019
        %4413 = vmatpush.bf16.msra.mxu0 %v4017
        %4414 = vmatmul.bf16.gmra.mxu0 %v3692
        %v4415 = vpop.f32.mrf.mxu0
        %v4416 = vadd.f32 %v4367, %v4415
        %v4417 = vpop.f32.mrf.mxu0
        %v4418 = vadd.f32 %v4369, %v4417
        %4419 = vmatmul.bf16.gmra.mxu0 %v3696
        %v4420 = vpop.f32.mrf.mxu0
        %v4421 = vadd.f32 %v4372, %v4420
        %v4422 = vpop.f32.mrf.mxu0
        %v4423 = vadd.f32 %v4374, %v4422
        %4424 = vmatmul.bf16.gmra.mxu0 %v3700
        %v4425 = vpop.f32.mrf.mxu0
        %v4426 = vadd.f32 %v4377, %v4425
        %v4427 = vpop.f32.mrf.mxu0
        %v4428 = vadd.f32 %v4379, %v4427
        %4429 = vmatmul.bf16.gmra.mxu0 %v3704
        %v4430 = vpop.f32.mrf.mxu0
        %v4431 = vadd.f32 %v4382, %v4430
        %v4432 = vpop.f32.mrf.mxu0
        %v4433 = vadd.f32 %v4384, %v4432
        %4434 = vmatmul.bf16.gmra.mxu0 %v3708
        %v4435 = vpop.f32.mrf.mxu0
        %v4436 = vadd.f32 %v4387, %v4435
        %v4437 = vpop.f32.mrf.mxu0
        %v4438 = vadd.f32 %v4389, %v4437
        %4439 = vmatmul.bf16.gmra.mxu0 %v3712
        %v4440 = vpop.f32.mrf.mxu0
        %v4441 = vadd.f32 %v4392, %v4440
        %v4442 = vpop.f32.mrf.mxu0
        %v4443 = vadd.f32 %v4394, %v4442
        %4444 = vmatmul.bf16.gmra.mxu0 %v3716
        %v4445 = vpop.f32.mrf.mxu0
        %v4446 = vadd.f32 %v4397, %v4445
        %v4447 = vpop.f32.mrf.mxu0
        %v4448 = vadd.f32 %v4399, %v4447
        %4449 = vmatmul.bf16.gmra.mxu0 %v3720
        %v4450 = vpop.f32.mrf.mxu0
        %v4451 = vadd.f32 %v4402, %v4450
        %v4452 = vpop.f32.mrf.mxu0
        %v4453 = vadd.f32 %v4404, %v4452
        %4454 = vdwg.mxu0
        %4455 = vmatpush.bf16.msra.mxu0 %v4047
        %4456 = vmatpush.bf16.msra.mxu0 %v4045
        %4457 = vmatpush.bf16.msra.mxu0 %v4043
        %4458 = vmatpush.bf16.msra.mxu0 %v4041
        %4459 = vmatpush.bf16.msra.mxu0 %v4039
        %4460 = vmatpush.bf16.msra.mxu0 %v4037
        %4461 = vmatpush.bf16.msra.mxu0 %v4035
        %4462 = vmatpush.bf16.msra.mxu0 %v4033
        %4463 = vmatmul.bf16.gmra.mxu0 %v3693
        %v4464 = vpop.f32.mrf.mxu0
        %v4465 = vadd.f32 %v4416, %v4464
        %v4466 = vpop.f32.mrf.mxu0
        %v4467 = vadd.f32 %v4418, %v4466
        %4468 = vmatmul.bf16.gmra.mxu0 %v3697
        %v4469 = vpop.f32.mrf.mxu0
        %v4470 = vadd.f32 %v4421, %v4469
        %v4471 = vpop.f32.mrf.mxu0
        %v4472 = vadd.f32 %v4423, %v4471
        %4473 = vmatmul.bf16.gmra.mxu0 %v3701
        %v4474 = vpop.f32.mrf.mxu0
        %v4475 = vadd.f32 %v4426, %v4474
        %v4476 = vpop.f32.mrf.mxu0
        %v4477 = vadd.f32 %v4428, %v4476
        %4478 = vmatmul.bf16.gmra.mxu0 %v3705
        %v4479 = vpop.f32.mrf.mxu0
        %v4480 = vadd.f32 %v4431, %v4479
        %v4481 = vpop.f32.mrf.mxu0
        %v4482 = vadd.f32 %v4433, %v4481
        %4483 = vmatmul.bf16.gmra.mxu0 %v3709
        %v4484 = vpop.f32.mrf.mxu0
        %v4485 = vadd.f32 %v4436, %v4484
        %v4486 = vpop.f32.mrf.mxu0
        %v4487 = vadd.f32 %v4438, %v4486
        %4488 = vmatmul.bf16.gmra.mxu0 %v3713
        %v4489 = vpop.f32.mrf.mxu0
        %v4490 = vadd.f32 %v4441, %v4489
        %v4491 = vpop.f32.mrf.mxu0
        %v4492 = vadd.f32 %v4443, %v4491
        %4493 = vmatmul.bf16.gmra.mxu0 %v3717
        %v4494 = vpop.f32.mrf.mxu0
        %v4495 = vadd.f32 %v4446, %v4494
        %v4496 = vpop.f32.mrf.mxu0
        %v4497 = vadd.f32 %v4448, %v4496
        %4498 = vmatmul.bf16.gmra.mxu0 %v3721
        %v4499 = vpop.f32.mrf.mxu0
        %v4500 = vadd.f32 %v4451, %v4499
        %v4501 = vpop.f32.mrf.mxu0
        %v4502 = vadd.f32 %v4453, %v4501
        %4503 = vdwg.mxu0
        %vm4504 = vcmp.gt.f32.partialorder %v4269, 0.0
        %vm4505 = vcmp.gt.f32.partialorder %v4465, 0.0
        %vm4506 = vcmp.gt.f32.partialorder %v4271, 0.0
        %vm4507 = vcmp.gt.f32.partialorder %v4467, 0.0
        %vm4508 = vcmp.gt.f32.partialorder %v4274, 0.0
        %vm4509 = vcmp.gt.f32.partialorder %v4470, 0.0
        %vm4510 = vcmp.gt.f32.partialorder %v4276, 0.0
        %vm4511 = vcmp.gt.f32.partialorder %v4472, 0.0
        %vm4512 = vcmp.gt.f32.partialorder %v4279, 0.0
        %vm4513 = vcmp.gt.f32.partialorder %v4475, 0.0
        %vm4514 = vcmp.gt.f32.partialorder %v4281, 0.0
        %vm4515 = vcmp.gt.f32.partialorder %v4477, 0.0
        %vm4516 = vcmp.gt.f32.partialorder %v4284, 0.0
        %vm4517 = vcmp.gt.f32.partialorder %v4480, 0.0
        %vm4518 = vcmp.gt.f32.partialorder %v4286, 0.0
        %vm4519 = vcmp.gt.f32.partialorder %v4482, 0.0
        %vm4520 = vcmp.gt.f32.partialorder %v4289, 0.0
        %vm4521 = vcmp.gt.f32.partialorder %v4485, 0.0
        %vm4522 = vcmp.gt.f32.partialorder %v4291, 0.0
        %vm4523 = vcmp.gt.f32.partialorder %v4487, 0.0
        %vm4524 = vcmp.gt.f32.partialorder %v4294, 0.0
        %vm4525 = vcmp.gt.f32.partialorder %v4490, 0.0
        %vm4526 = vcmp.gt.f32.partialorder %v4296, 0.0
        %vm4527 = vcmp.gt.f32.partialorder %v4492, 0.0
        %vm4528 = vcmp.gt.f32.partialorder %v4299, 0.0
        %vm4529 = vcmp.gt.f32.partialorder %v4495, 0.0
        %vm4530 = vcmp.gt.f32.partialorder %v4301, 0.0
        %vm4531 = vcmp.gt.f32.partialorder %v4497, 0.0
        %vm4532 = vcmp.gt.f32.partialorder %v4304, 0.0
        %vm4533 = vcmp.gt.f32.partialorder %v4500, 0.0
        %vm4534 = vcmp.gt.f32.partialorder %v4306, 0.0
        %vm4535 = vcmp.gt.f32.partialorder %v4502, 0.0
        %v4536 = vmul.f32 %v4269, 0.2
        %v4537 = vmul.f32 %v4465, 0.2
        %v4538 = vmul.f32 %v4271, 0.2
        %v4539 = vmul.f32 %v4467, 0.2
        %v4540 = vmul.f32 %v4274, 0.2
        %v4541 = vmul.f32 %v4470, 0.2
        %v4542 = vmul.f32 %v4276, 0.2
        %v4543 = vmul.f32 %v4472, 0.2
        %v4544 = vmul.f32 %v4279, 0.2
        %v4545 = vmul.f32 %v4475, 0.2
        %v4546 = vmul.f32 %v4281, 0.2
        %v4547 = vmul.f32 %v4477, 0.2
        %v4548 = vmul.f32 %v4284, 0.2
        %v4549 = vmul.f32 %v4480, 0.2
        %v4550 = vmul.f32 %v4286, 0.2
        %v4551 = vmul.f32 %v4482, 0.2
        %v4552 = vmul.f32 %v4289, 0.2
        %v4553 = vmul.f32 %v4485, 0.2
        %v4554 = vmul.f32 %v4291, 0.2
        %v4555 = vmul.f32 %v4487, 0.2
        %v4556 = vmul.f32 %v4294, 0.2
        %v4557 = vmul.f32 %v4490, 0.2
        %v4558 = vmul.f32 %v4296, 0.2
        %v4559 = vmul.f32 %v4492, 0.2
        %v4560 = vmul.f32 %v4299, 0.2
        %v4561 = vmul.f32 %v4495, 0.2
        %v4562 = vmul.f32 %v4301, 0.2
        %v4563 = vmul.f32 %v4497, 0.2
        %v4564 = vmul.f32 %v4304, 0.2
        %v4565 = vmul.f32 %v4500, 0.2
        %v4566 = vmul.f32 %v4306, 0.2
        %v4567 = vmul.f32 %v4502, 0.2
        %v4568 = vsel %vm4504, %v4269, %v4536
        %v4569 = vsel %vm4505, %v4465, %v4537
        %v4570 = vsel %vm4506, %v4271, %v4538
        %v4571 = vsel %vm4507, %v4467, %v4539
        %v4572 = vsel %vm4508, %v4274, %v4540
        %v4573 = vsel %vm4509, %v4470, %v4541
        %v4574 = vsel %vm4510, %v4276, %v4542
        %v4575 = vsel %vm4511, %v4472, %v4543
        %v4576 = vsel %vm4512, %v4279, %v4544
        %v4577 = vsel %vm4513, %v4475, %v4545
        %v4578 = vsel %vm4514, %v4281, %v4546
        %v4579 = vsel %vm4515, %v4477, %v4547
        %v4580 = vsel %vm4516, %v4284, %v4548
        %v4581 = vsel %vm4517, %v4480, %v4549
        %v4582 = vsel %vm4518, %v4286, %v4550
        %v4583 = vsel %vm4519, %v4482, %v4551
        %v4584 = vsel %vm4520, %v4289, %v4552
        %v4585 = vsel %vm4521, %v4485, %v4553
        %v4586 = vsel %vm4522, %v4291, %v4554
        %v4587 = vsel %vm4523, %v4487, %v4555
        %v4588 = vsel %vm4524, %v4294, %v4556
        %v4589 = vsel %vm4525, %v4490, %v4557
        %v4590 = vsel %vm4526, %v4296, %v4558
        %v4591 = vsel %vm4527, %v4492, %v4559
        %v4592 = vsel %vm4528, %v4299, %v4560
        %v4593 = vsel %vm4529, %v4495, %v4561
        %v4594 = vsel %vm4530, %v4301, %v4562
        %v4595 = vsel %vm4531, %v4497, %v4563
        %v4596 = vsel %vm4532, %v4304, %v4564
        %v4597 = vsel %vm4533, %v4500, %v4565
        %v4598 = vsel %vm4534, %v4306, %v4566
        %v4599 = vsel %vm4535, %v4502, %v4567
        %v4600 = vpack.c.bf16 %v4570, %v4568
        %v4601 = vpack.c.bf16 %v4571, %v4569
        %v4602 = vpack.c.bf16 %v4574, %v4572
        %v4603 = vpack.c.bf16 %v4575, %v4573
        %v4604 = vpack.c.bf16 %v4578, %v4576
        %v4605 = vpack.c.bf16 %v4579, %v4577
        %v4606 = vpack.c.bf16 %v4582, %v4580
        %v4607 = vpack.c.bf16 %v4583, %v4581
        %v4608 = vpack.c.bf16 %v4586, %v4584
        %v4609 = vpack.c.bf16 %v4587, %v4585
        %v4610 = vpack.c.bf16 %v4590, %v4588
        %v4611 = vpack.c.bf16 %v4591, %v4589
        %v4612 = vpack.c.bf16 %v4594, %v4592
        %v4613 = vpack.c.bf16 %v4595, %v4593
        %v4614 = vpack.c.bf16 %v4598, %v4596
        %v4615 = vpack.c.bf16 %v4599, %v4597
        %v4616 = vld [vmem:[#allocation11] sm:$0xf]
        %v4617 = vld [vmem:[#allocation11 + $0x4] sm:$0xf]
        %v4618 = vld [vmem:[#allocation11 + $0x8] sm:$0xf]
        %v4619 = vld [vmem:[#allocation11 + $0xc] sm:$0xf]
        %v4620 = vld [vmem:[#allocation11 + $0x10] sm:$0xf]
        %v4621 = vld [vmem:[#allocation11 + $0x14] sm:$0xf]
        %v4622 = vld [vmem:[#allocation11 + $0x18] sm:$0xf]
        %v4623 = vld [vmem:[#allocation11 + $0x1c] sm:$0xf]
        %v4624 = vld [vmem:[#allocation11 + $0x20] sm:$0xf]
        %v4625 = vld [vmem:[#allocation11 + $0x24] sm:$0xf]
        %v4626 = vld [vmem:[#allocation11 + $0x28] sm:$0xf]
        %v4627 = vld [vmem:[#allocation11 + $0x2c] sm:$0xf]
        %v4628 = vld [vmem:[#allocation11 + $0x30] sm:$0xf]
        %v4629 = vld [vmem:[#allocation11 + $0x34] sm:$0xf]
        %v4630 = vld [vmem:[#allocation11 + $0x38] sm:$0xf]
        %v4631 = vld [vmem:[#allocation11 + $0x3c] sm:$0xf]
        %v4632 = vld [vmem:[#allocation11 + $0x40] sm:$0xf]
        %v4633 = vld [vmem:[#allocation11 + $0x44] sm:$0xf]
        %v4634 = vld [vmem:[#allocation11 + $0x48] sm:$0xf]
        %v4635 = vld [vmem:[#allocation11 + $0x4c] sm:$0xf]
        %v4636 = vld [vmem:[#allocation11 + $0x50] sm:$0xf]
        %v4637 = vld [vmem:[#allocation11 + $0x54] sm:$0xf]
        %v4638 = vld [vmem:[#allocation11 + $0x58] sm:$0xf]
        %v4639 = vld [vmem:[#allocation11 + $0x5c] sm:$0xf]
        %v4640 = vld [vmem:[#allocation11 + $0x60] sm:$0xf]
        %v4641 = vld [vmem:[#allocation11 + $0x64] sm:$0xf]
        %v4642 = vld [vmem:[#allocation11 + $0x68] sm:$0xf]
        %v4643 = vld [vmem:[#allocation11 + $0x6c] sm:$0xf]
        %v4644 = vld [vmem:[#allocation11 + $0x70] sm:$0xf]
        %v4645 = vld [vmem:[#allocation11 + $0x74] sm:$0xf]
        %v4646 = vld [vmem:[#allocation11 + $0x78] sm:$0xf]
        %v4647 = vld [vmem:[#allocation11 + $0x7c] sm:$0xf]
        %v4648 = vld [vmem:[%s6] sm:$0x1]
        %v4650 = vperm.slane %v4648, 0
        %v4684 = vunpack.c.l.b16 %v4616
        %v4685 = vunpack.c.l.b16 %v4617
        %v4686 = vunpack.c.l.b16 %v4618
        %v4687 = vunpack.c.l.b16 %v4619
        %v4688 = vunpack.c.l.b16 %v4620
        %v4689 = vunpack.c.l.b16 %v4621
        %v4690 = vunpack.c.l.b16 %v4622
        %v4691 = vunpack.c.l.b16 %v4623
        %v4692 = vunpack.c.l.b16 %v4624
        %v4693 = vunpack.c.l.b16 %v4625
        %v4694 = vunpack.c.l.b16 %v4626
        %v4695 = vunpack.c.l.b16 %v4627
        %v4696 = vunpack.c.l.b16 %v4628
        %v4697 = vunpack.c.l.b16 %v4629
        %v4698 = vunpack.c.l.b16 %v4630
        %v4699 = vunpack.c.l.b16 %v4631
        %v4700 = vunpack.c.l.b16 %v4632
        %v4701 = vunpack.c.l.b16 %v4633
        %v4702 = vunpack.c.l.b16 %v4634
        %v4703 = vunpack.c.l.b16 %v4635
        %v4704 = vunpack.c.l.b16 %v4636
        %v4705 = vunpack.c.l.b16 %v4637
        %v4706 = vunpack.c.l.b16 %v4638
        %v4707 = vunpack.c.l.b16 %v4639
        %v4708 = vunpack.c.l.b16 %v4640
        %v4709 = vunpack.c.l.b16 %v4641
        %v4710 = vunpack.c.l.b16 %v4642
        %v4711 = vunpack.c.l.b16 %v4643
        %v4712 = vunpack.c.l.b16 %v4644
        %v4713 = vunpack.c.l.b16 %v4645
        %v4714 = vunpack.c.l.b16 %v4646
        %v4715 = vunpack.c.l.b16 %v4647
        %v4716 = vpack.c.b16 %v4685, %v4684
        %v4717 = vpack.c.b16 %v4687, %v4686
        %v4718 = vpack.c.b16 %v4689, %v4688
        %v4719 = vpack.c.b16 %v4691, %v4690
        %v4720 = vpack.c.b16 %v4693, %v4692
        %v4721 = vpack.c.b16 %v4695, %v4694
        %v4722 = vpack.c.b16 %v4697, %v4696
        %v4723 = vpack.c.b16 %v4699, %v4698
        %v4724 = vpack.c.b16 %v4701, %v4700
        %v4725 = vpack.c.b16 %v4703, %v4702
        %v4726 = vpack.c.b16 %v4705, %v4704
        %v4727 = vpack.c.b16 %v4707, %v4706
        %v4728 = vpack.c.b16 %v4709, %v4708
        %v4729 = vpack.c.b16 %v4711, %v4710
        %v4730 = vpack.c.b16 %v4713, %v4712
        %v4731 = vpack.c.b16 %v4715, %v4714
        %4748 = vmatpush.bf16.msra.mxu0 %v4723
        %4749 = vmatpush.bf16.msra.mxu0 %v4722
        %4750 = vmatpush.bf16.msra.mxu0 %v4721
        %4751 = vmatpush.bf16.msra.mxu0 %v4720
        %4752 = vmatpush.bf16.msra.mxu0 %v4719
        %4753 = vmatpush.bf16.msra.mxu0 %v4718
        %4754 = vmatpush.bf16.msra.mxu0 %v4717
        %4755 = vmatpush.bf16.msra.mxu0 %v4716
        %4756 = vmatmul.bf16.gmra.mxu0 %v4600
        %v4757 = vpop.f32.mrf.mxu0
        %v4758 = vadd.f32 %v4650, %v4757
        %v4759 = vpop.f32.mrf.mxu0
        %v4760 = vadd.f32 %v4650, %v4759
        %4761 = vmatmul.bf16.gmra.mxu0 %v4602
        %v4762 = vpop.f32.mrf.mxu0
        %v4763 = vadd.f32 %v4650, %v4762
        %v4764 = vpop.f32.mrf.mxu0
        %v4765 = vadd.f32 %v4650, %v4764
        %4766 = vmatmul.bf16.gmra.mxu0 %v4604
        %v4767 = vpop.f32.mrf.mxu0
        %v4768 = vadd.f32 %v4650, %v4767
        %v4769 = vpop.f32.mrf.mxu0
        %v4770 = vadd.f32 %v4650, %v4769
        %4771 = vmatmul.bf16.gmra.mxu0 %v4606
        %v4772 = vpop.f32.mrf.mxu0
        %v4773 = vadd.f32 %v4650, %v4772
        %v4774 = vpop.f32.mrf.mxu0
        %v4775 = vadd.f32 %v4650, %v4774
        %4776 = vmatmul.bf16.gmra.mxu0 %v4608
        %v4777 = vpop.f32.mrf.mxu0
        %v4778 = vadd.f32 %v4650, %v4777
        %v4779 = vpop.f32.mrf.mxu0
        %v4780 = vadd.f32 %v4650, %v4779
        %4781 = vmatmul.bf16.gmra.mxu0 %v4610
        %v4782 = vpop.f32.mrf.mxu0
        %v4783 = vadd.f32 %v4650, %v4782
        %v4784 = vpop.f32.mrf.mxu0
        %v4785 = vadd.f32 %v4650, %v4784
        %4786 = vmatmul.bf16.gmra.mxu0 %v4612
        %v4787 = vpop.f32.mrf.mxu0
        %v4788 = vadd.f32 %v4650, %v4787
        %v4789 = vpop.f32.mrf.mxu0
        %v4790 = vadd.f32 %v4650, %v4789
        %4791 = vmatmul.bf16.gmra.mxu0 %v4614
        %v4792 = vpop.f32.mrf.mxu0
        %v4793 = vadd.f32 %v4650, %v4792
        %v4794 = vpop.f32.mrf.mxu0
        %v4795 = vadd.f32 %v4650, %v4794
        %4796 = vdwg.mxu0
        %4797 = vmatpush.bf16.msra.mxu0 %v4731
        %4798 = vmatpush.bf16.msra.mxu0 %v4730
        %4799 = vmatpush.bf16.msra.mxu0 %v4729
        %4800 = vmatpush.bf16.msra.mxu0 %v4728
        %4801 = vmatpush.bf16.msra.mxu0 %v4727
        %4802 = vmatpush.bf16.msra.mxu0 %v4726
        %4803 = vmatpush.bf16.msra.mxu0 %v4725
        %4804 = vmatpush.bf16.msra.mxu0 %v4724
        %4805 = vmatmul.bf16.gmra.mxu0 %v4601
        %v4806 = vpop.f32.mrf.mxu0
        %v4807 = vadd.f32 %v4758, %v4806
        %v4808 = vpop.f32.mrf.mxu0
        %v4809 = vadd.f32 %v4760, %v4808
        %4810 = vmatmul.bf16.gmra.mxu0 %v4603
        %v4811 = vpop.f32.mrf.mxu0
        %v4812 = vadd.f32 %v4763, %v4811
        %v4813 = vpop.f32.mrf.mxu0
        %v4814 = vadd.f32 %v4765, %v4813
        %4815 = vmatmul.bf16.gmra.mxu0 %v4605
        %v4816 = vpop.f32.mrf.mxu0
        %v4817 = vadd.f32 %v4768, %v4816
        %v4818 = vpop.f32.mrf.mxu0
        %v4819 = vadd.f32 %v4770, %v4818
        %4820 = vmatmul.bf16.gmra.mxu0 %v4607
        %v4821 = vpop.f32.mrf.mxu0
        %v4822 = vadd.f32 %v4773, %v4821
        %v4823 = vpop.f32.mrf.mxu0
        %v4824 = vadd.f32 %v4775, %v4823
        %4825 = vmatmul.bf16.gmra.mxu0 %v4609
        %v4826 = vpop.f32.mrf.mxu0
        %v4827 = vadd.f32 %v4778, %v4826
        %v4828 = vpop.f32.mrf.mxu0
        %v4829 = vadd.f32 %v4780, %v4828
        %4830 = vmatmul.bf16.gmra.mxu0 %v4611
        %v4831 = vpop.f32.mrf.mxu0
        %v4832 = vadd.f32 %v4783, %v4831
        %v4833 = vpop.f32.mrf.mxu0
        %v4834 = vadd.f32 %v4785, %v4833
        %4835 = vmatmul.bf16.gmra.mxu0 %v4613
        %v4836 = vpop.f32.mrf.mxu0
        %v4837 = vadd.f32 %v4788, %v4836
        %v4838 = vpop.f32.mrf.mxu0
        %v4839 = vadd.f32 %v4790, %v4838
        %4840 = vmatmul.bf16.gmra.mxu0 %v4615
        %v4841 = vpop.f32.mrf.mxu0
        %v4842 = vadd.f32 %v4793, %v4841
        %v4843 = vpop.f32.mrf.mxu0
        %v4844 = vadd.f32 %v4795, %v4843
        %4845 = vdwg.mxu0
        %vm4846 = vcmp.gt.f32.partialorder %v4807, 0.0
        %vm4847 = vcmp.gt.f32.partialorder %v4809, 0.0
        %vm4848 = vcmp.gt.f32.partialorder %v4812, 0.0
        %vm4849 = vcmp.gt.f32.partialorder %v4814, 0.0
        %vm4850 = vcmp.gt.f32.partialorder %v4817, 0.0
        %vm4851 = vcmp.gt.f32.partialorder %v4819, 0.0
        %vm4852 = vcmp.gt.f32.partialorder %v4822, 0.0
        %vm4853 = vcmp.gt.f32.partialorder %v4824, 0.0
        %vm4854 = vcmp.gt.f32.partialorder %v4827, 0.0
        %vm4855 = vcmp.gt.f32.partialorder %v4829, 0.0
        %vm4856 = vcmp.gt.f32.partialorder %v4832, 0.0
        %vm4857 = vcmp.gt.f32.partialorder %v4834, 0.0
        %vm4858 = vcmp.gt.f32.partialorder %v4837, 0.0
        %vm4859 = vcmp.gt.f32.partialorder %v4839, 0.0
        %vm4860 = vcmp.gt.f32.partialorder %v4842, 0.0
        %vm4861 = vcmp.gt.f32.partialorder %v4844, 0.0
        %v4862 = vmul.f32 %v4807, 0.2
        %v4863 = vmul.f32 %v4809, 0.2
        %v4864 = vmul.f32 %v4812, 0.2
        %v4865 = vmul.f32 %v4814, 0.2
        %v4866 = vmul.f32 %v4817, 0.2
        %v4867 = vmul.f32 %v4819, 0.2
        %v4868 = vmul.f32 %v4822, 0.2
        %v4869 = vmul.f32 %v4824, 0.2
        %v4870 = vmul.f32 %v4827, 0.2
        %v4871 = vmul.f32 %v4829, 0.2
        %v4872 = vmul.f32 %v4832, 0.2
        %v4873 = vmul.f32 %v4834, 0.2
        %v4874 = vmul.f32 %v4837, 0.2
        %v4875 = vmul.f32 %v4839, 0.2
        %v4876 = vmul.f32 %v4842, 0.2
        %v4877 = vmul.f32 %v4844, 0.2
        %v4878 = vsel %vm4846, %v4807, %v4862
        %v4879 = vsel %vm4847, %v4809, %v4863
        %v4880 = vsel %vm4848, %v4812, %v4864
        %v4881 = vsel %vm4849, %v4814, %v4865
        %v4882 = vsel %vm4850, %v4817, %v4866
        %v4883 = vsel %vm4851, %v4819, %v4867
        %v4884 = vsel %vm4852, %v4822, %v4868
        %v4885 = vsel %vm4853, %v4824, %v4869
        %v4886 = vsel %vm4854, %v4827, %v4870
        %v4887 = vsel %vm4855, %v4829, %v4871
        %v4888 = vsel %vm4856, %v4832, %v4872
        %v4889 = vsel %vm4857, %v4834, %v4873
        %v4890 = vsel %vm4858, %v4837, %v4874
        %v4891 = vsel %vm4859, %v4839, %v4875
        %v4892 = vsel %vm4860, %v4842, %v4876
        %v4893 = vsel %vm4861, %v4844, %v4877
        %v4894 = vld [vmem:[%s7] sm:$0x1]
        %v4895 = vld [vmem:[#allocation2] sm:$0x1]
        %4897 = vset.pattern.permute.xlu0 0
        %4898 = vperm.xlu0 %4897, %v4895
        %v4899 = vpop.permute.xlu0 %4898
        %v4901 = vperm.slane %v4899, 0
        %4902 = vmatpush.xpose.msra.mxu0 %v4893
        %4903 = vmatpush.xpose.msra.mxu0 %v4892
        %4904 = vmatpush.xpose.msra.mxu0 %v4891
        %4905 = vmatpush.xpose.msra.mxu0 %v4890
        %4906 = vmatpush.xpose.msra.mxu0 %v4889
        %4907 = vmatpush.xpose.msra.mxu0 %v4888
        %4908 = vmatpush.xpose.msra.mxu0 %v4887
        %4909 = vmatpush.xpose.msra.mxu0 %v4886
        %4910 = vmatpush.xpose.msra.mxu0 %v4885
        %4911 = vmatpush.xpose.msra.mxu0 %v4884
        %4912 = vmatpush.xpose.msra.mxu0 %v4883
        %4913 = vmatpush.xpose.msra.mxu0 %v4882
        %4914 = vmatpush.xpose.msra.mxu0 %v4881
        %4915 = vmatpush.xpose.msra.mxu0 %v4880
        %4916 = vmatpush.xpose.msra.mxu0 %v4879
        %4917 = vmatpush.xpose.msra.mxu0 %v4878
        %4918 = vmatmul.f32.gmra.mxu0 %v4894
        %v4919 = vpop.f32.mrf.mxu0
        %v4920 = vadd.f32 %v4901, %v4919
        %4921 = vdwg.mxu0
        %v4922 = vxor.u32 %v4920, 2147483648
        %v4923 = vmul.f32 %v4922, 1.442695
        %v4924 = vpow.pop %v4923
        %v4925 = vadd.f32 %v4924, 1.0
        %v4926 = vrcp.pop %v4925
        %v4927 = vmul.f32 %v4925, %v4926
        %v4928 = vsub.f32 1.0, %v4927
        %v4929 = vmul.f32 %v4926, %v4928
        %v4930 = vadd.f32 %v4926, %v4929
        %vm4931 = vweird.f32 %v4925
        %vm4932 = vweird.f32 %v4926
        %vm4933 = vmor %vm4931, %vm4932
        %v4934 = vsel %vm4933, %v4926, %v4930
        %v4935 = vand.u32 2147483647, %v4925
        %vm4936 = vcmp.eq.f32.partialorder %v4935, 8.507059e+37
        %v4937 = vand.u32 %v4925, 2147483648
        %v4938 = vor.u32 1.1754944e-38, %v4937
        %v4939 = vsel %vm4936, %v4938, %v4934
        %v4940 = vmul.f32 1.0, %v4939
        %4941 = vst [vmem:[%s418] sm:$0x1] %v4940
        %s4942 = sand.u32 %s232, 1
        %s4943 = scalar_lea.sflag [#allocation5], %s4942
        %s4944 = sand.u32 %s232, 1
        %s4945 = scalar_lea.vmem [#allocation12], %s4944
        // Predicated region
        $region77: #{tpu_custom_call.1} parent=55 // pred_check
          %p4946 = pneg %p242
        $region78: #{tpu_custom_call.1} parent=55 // pred_check_branch
          %4948 = sbr.rel (%p4946) target = $region80
        $region79: #{tpu_custom_call.1} parent=55 // pred_region
          %4950 = vsyncadd %s4943, 0
          %s4951 = scalar_lea.hbm %s9, %s30
          %s4953 = sshll.u32 %s4945, 4
          %s4954 = int_to_ptr.vmem [resolvable:$true] %s4953
          %s4955 = sshll.u32 %s4951, 4
          %s4956 = int_to_ptr.hbm [resolvable:$true] %s4955
          %4958 = dma.vmem_to_hbm [thread:$0]  %s4954, 16, %s4956, %s4943
        $region80: #{tpu_custom_call.1} parent=55 // pred_fallthru
          _
      $region56: #{tpu_custom_call.1} parent=5 // pred_fallthru
        _
      %p4959 = scmp.le.s32.totalorder 2, %s25
      // Predicated region
      $region81: #{tpu_custom_call.1} parent=5 // pred_check
        %p4960 = pneg %p4959
      $region82: #{tpu_custom_call.1} parent=5 // pred_check_branch
        %4962 = sbr.rel (%p4960) target = $region84
      $region83: #{tpu_custom_call.1} parent=5 // pred_region
        %s4963 = ssub.s32 %s25, 2
        // Predicated region
        $region85: #{tpu_custom_call.1} parent=83 // pred_check
          %p4964 = pneg %p248
        $region86: #{tpu_custom_call.1} parent=83 // pred_check_branch
          %4966 = sbr.rel (%p4964) target = $region88
        $region87: #{tpu_custom_call.1} parent=83 // pred_region
          %s4967 = sand.u32 %s233, 1
          %s4968 = scalar_lea.sflag [#allocation5], %s4967
          %s4969 = sand.u32 %s233, 1
          %s4970 = scalar_lea.vmem [#allocation12], %s4969
          %4972 = dma.done %s4968, 16
        $region88: #{tpu_custom_call.1} parent=83 // pred_fallthru
          _
      $region84: #{tpu_custom_call.1} parent=5 // pred_fallthru
        _
    $region6: #{tpu_custom_call.1} parent=1 // loop_footer
      %s29 = sadd.s32 1, %s25
    $region7: #{tpu_custom_call.1} parent=1 // loop_footer_branch
      %24 = sbr.rel target = $region3
    $region8: #{tpu_custom_call.1} parent=1 // loop_exit
      _
    %4973 = vsyncpa [#allocation4], 1
    %s4974 = scalar_lea.sflag [#allocation4], 1
    %4975 = vsyncpa %s4974, 1
    %4976 = vsyncpa [#allocation7], 1
    %4977 = vsyncpa [#allocation10], 1
    %4978 = vsyncpa [#allocation5], 1
    %s4979 = scalar_lea.sflag [#allocation5], 1
    %4980 = vsyncpa %s4979, 1

</llo_original>
